<compile_context>
chip_gen: v7x
topology: tpu7x:2x2x1
jax: 0.10.0
libtpu: 0.0.40
codegen_flags: <defaults>
</compile_context>

<pallas_src>
import functools

import jax
import jax.numpy as jnp
import numpy as np
from jax import lax
from jax.experimental import pallas as pl
from jax.experimental.pallas import tpu as pltpu


def _vmem_spec():
    return pl.BlockSpec(memory_space=pltpu.MemorySpace.VMEM)


# ----------------------------------------------------------------------------
# Single fused kernel: RGCN conv stack + in-kernel row gathers + prediction.
# ----------------------------------------------------------------------------
def _fused_forward_kernel(x_ref, af_ref, as_ref, wf_ref, ws_ref,
                          uidx_ref, sidx_ref, pw_ref, pb_ref, wv_ref,
                          res_ref, user_ref, item_ref,
                          *, L, R, S, dim, bz, T):
    N = x_ref.shape[0]
    f32 = jnp.float32
    bf16 = jnp.bfloat16

    def rgcn_layer(x, get_a, w_stack_bf):
        # x: (N, dim) f32.  Re-associated basis-decomposition RGCN layer:
        #   tanh( [A_0 x | ... | A_{R-1} x | x] @ [W_0; ...; W_{R-1}; Root] )
        # MXU inputs bf16, accumulate f32, tanh in f32.
        xb = x.astype(bf16)
        parts = [jnp.dot(get_a(r), xb, preferred_element_type=f32)
                 for r in range(R)]
        parts.append(x)
        h = jnp.concatenate(parts, axis=-1).astype(bf16)       # (N, (R+1)*dim)
        return jnp.tanh(jnp.dot(h, w_stack_bf, preferred_element_type=f32))

    x = x_ref[...]                                             # (N, dim) f32
    layer_outs = []

    # full-graph conv layers
    for l in range(L):
        x = rgcn_layer(x, lambda r: af_ref[r], wf_ref[l])
        layer_outs.append(x)

    # short-term conv layers (same weights reused for every short graph)
    for l in range(L):
        for s in range(S):
            x = rgcn_layer(x, lambda r, s=s: as_ref[s, r], ws_ref[l])
        layer_outs.append(x)

    # concat_states stays in registers/VMEM; never written to HBM.
    concat = jnp.concatenate(layer_outs, axis=-1)              # (N, 2*L*dim)
    D = 2 * L * dim

    # In-kernel row gather via one-hot matmul (f32 inputs -> near-exact select).
    def gather_rows(idx_ref):
        idx = idx_ref[...]                                     # (M, 1) int32
        M = idx.shape[0]
        cols = lax.broadcasted_iota(jnp.int32, (M, N), 1)
        onehot = (cols == idx).astype(f32)
        return jnp.dot(onehot, concat, preferred_element_type=f32)

    user_emb = gather_rows(uidx_ref)                           # (bz, D)
    seq_emb = gather_rows(sidx_ref)                            # (bz*T, D)
    item_embs_conv = seq_emb.reshape(bz, T, D)

    user_ref[...] = user_emb
    item_ref[...] = item_embs_conv

    # Prediction.  softmax over dim=1 => attention columns sum to 1 =>
    # sum_t(attn @ V) == sum_t V == (sum_t e_t) @ Wv, so Q/K/softmax drop out.
    e_sum = jnp.sum(item_embs_conv, axis=1)                    # (bz, D)
    v_sum = jnp.dot(e_sum, wv_ref[...], preferred_element_type=f32)

    pw = pw_ref[...]                                           # (bz, P, D)
    uv = user_emb + v_sum                                      # (bz, D)
    # baddbmm(pe_b, pe_w, user) + rel_score, fused into one VPU mul + lane reduce
    res_ref[...] = jnp.sum(uv[:, None, :] * pw, axis=-1) + pb_ref[...]


def fused_forward(x0, A_full_bf, A_short_bf, Wf_stack, Ws_stack,
                  users_idx, seqs_idx, pe_w, pe_b, Wv):
    """x0: (N,dim) f32; A_full_bf: (R,N,N) bf16; A_short_bf: (S,R,N,N) bf16;
    Wf_stack/Ws_stack: (L,(R+1)*dim,dim) bf16; users_idx: (bz,1) i32;
    seqs_idx: (bz*T,1) i32; pe_w: (bz,P,D) f32; pe_b: (bz,P) f32; Wv: (D,D) f32.
    Returns (res (bz,P), user_emb (bz,D), item_embs_conv (bz,T,D))."""
    N, dim = x0.shape
    L = Wf_stack.shape[0]
    R = A_full_bf.shape[0]
    S = A_short_bf.shape[0]
    D = 2 * L * dim
    bz = users_idx.shape[0]
    T = seqs_idx.shape[0] // bz
    P = pe_w.shape[1]
    kernel = functools.partial(_fused_forward_kernel, L=L, R=R, S=S,
                               dim=dim, bz=bz, T=T)
    return pl.pallas_call(
        kernel,
        out_shape=(jax.ShapeDtypeStruct((bz, P), jnp.float32),
                   jax.ShapeDtypeStruct((bz, D), jnp.float32),
                   jax.ShapeDtypeStruct((bz, T, D), jnp.float32)),
        in_specs=[_vmem_spec()] * 10,
        out_specs=(_vmem_spec(), _vmem_spec(), _vmem_spec()),
    )(x0, A_full_bf, A_short_bf, Wf_stack, Ws_stack,
      users_idx, seqs_idx, pe_w, pe_b, Wv)


# ----------------------------------------------------------------------------
# Weight preparation (hoisted out of the per-step forward; recompute only when
# the conv parameters change).
# ----------------------------------------------------------------------------
def prepare_fused_weights(params):
    def stack(convs):
        ws = []
        for p in convs:
            W = jnp.einsum("rb,bio->rio", p["comb"], p["basis"])   # (R,dim,dim)
            R, di, do = W.shape
            ws.append(jnp.concatenate([W.reshape(R * di, do), p["root"]], 0))
        return jnp.stack(ws).astype(jnp.bfloat16)                  # (L,(R+1)d,d)
    return stack(params["convs"]), stack(params["short_convs"])


# ----------------------------------------------------------------------------
# GNN_SR_Net forward (training branch, for_pred=False)
# ----------------------------------------------------------------------------
def gnn_sr_forward(params, fused_weights, node_no, A_full_bf, A_short_bf,
                   batch_users, batch_sequences, items_to_predict):
    Wf_stack, Ws_stack = fused_weights
    x0 = params["node_emb"][node_no]                           # (N, dim)
    bz, T = batch_sequences.shape
    users_idx = batch_users.astype(jnp.int32).reshape(bz, 1)
    seqs_idx = batch_sequences.astype(jnp.int32).reshape(bz * T, 1)
    # embedding-table lookups stay outside (tables may not fit VMEM in general)
    pe_w = params["pred_w"][items_to_predict]                  # (bz, P, D)
    pe_b = params["pred_b"][items_to_predict][..., 0]          # (bz, P)
    return fused_forward(x0, A_full_bf, A_short_bf, Wf_stack, Ws_stack,
                         users_idx, seqs_idx, pe_w, pe_b, params["Wv"])


# ----------------------------------------------------------------------------
# Pure-JAX reference (correctness check).  Mirrors the bf16-MXU-input policy of
# the kernel (intentional precision tradeoff) but keeps the FULL attention path
# (Q/K, causal mask, softmax over dim=1, attn@V), so the assert also validates
# that dropping the attention block in the kernel preserves the outputs.
# ----------------------------------------------------------------------------
def _ref_forward(params, node_no, A_full, A_short_list,
                 batch_users, batch_sequences, items_to_predict):
    bf16 = jnp.bfloat16

    def layer(x, A, p):
        W = jnp.einsum("rb,bio->rio", p["comb"], p["basis"])
        xb = x.astype(bf16)
        acc = jnp.dot(xb, p["root"].astype(bf16),
                      preferred_element_type=jnp.float32)
        for r in range(A.shape[0]):
            ax = jnp.dot(A[r].astype(bf16), xb,
                         preferred_element_type=jnp.float32)
            acc = acc + jnp.dot(ax.astype(bf16), W[r].astype(bf16),
                                preferred_element_type=jnp.float32)
        return jnp.tanh(acc)

    x = params["node_emb"][node_no]
    concat = []
    for p in params["convs"]:
        x = layer(x, A_full, p)
        concat.append(x)
    for p in params["short_convs"]:
        for A_s in A_short_list:
            x = layer(x, A_s, p)
        concat.append(x)
    concat = jnp.concatenate(concat, axis=1)

    user_emb = concat[batch_users]
    item_embs_conv = concat[batch_sequences]
    bz, T, D = item_embs_conv.shape

    Q = item_embs_conv @ params["Wq"]
    K = item_embs_conv @ params["Wk"]
    V = item_embs_conv @ params["Wv"]
    S = jnp.einsum("btd,bsd->bts", Q, K) / (T ** 0.5)
    tri = jnp.tril(jnp.ones((T, T), jnp.float32))
    S = jnp.where(tri[None] == 0, jnp.float32(-2.0 ** 32 + 1), S)
    attn = jax.nn.softmax(S, axis=1)                 # F.softmax(..., dim=1)
    item_embs = jnp.einsum("bts,bsd->btd", attn, V)

    pe_w = params["pred_w"][items_to_predict]
    pe_b = params["pred_b"][items_to_predict][..., 0]
    res = jnp.einsum("bpd,bd->bp", pe_w, user_emb) + pe_b
    rel = jnp.sum(jnp.einsum("btd,bpd->btp", item_embs, pe_w), axis=1)
    return res + rel, user_emb, item_embs_conv


# ----------------------------------------------------------------------------
# Deterministic parameter / input construction
# ----------------------------------------------------------------------------
def build_params(key, *, item_num, node_num, relation_num, dim,
                 conv_layer_num, num_bases):
    D = 2 * conv_layer_num * dim
    ks = list(jax.random.split(key, 8 + 6 * 2 * conv_layer_num))
    it = iter(ks)

    def conv_params():
        return {
            "comb": jax.random.normal(next(it), (relation_num, num_bases),
                                      jnp.float32),
            "basis": jax.random.normal(next(it), (num_bases, dim, dim),
                                       jnp.float32) / jnp.sqrt(float(dim)),
            "root": jax.random.normal(next(it), (dim, dim),
                                      jnp.float32) / jnp.sqrt(float(dim)),
        }

    xav = np.sqrt(6.0 / (D + D))
    params = {
        "node_emb": jax.random.normal(next(it), (node_num, dim),
                                      jnp.float32) / dim,
        "pred_w": jax.random.normal(next(it), (item_num, D),
                                    jnp.float32) / D,
        "pred_b": jnp.zeros((item_num, 1), jnp.float32),
        "Wq": jax.random.uniform(next(it), (D, D), jnp.float32, -xav, xav),
        "Wk": jax.random.uniform(next(it), (D, D), jnp.float32, -xav, xav),
        "Wv": jax.random.uniform(next(it), (D, D), jnp.float32, -xav, xav),
        "convs": [conv_params() for _ in range(conv_layer_num)],
        "short_convs": [conv_params() for _ in range(conv_layer_num)],
    }
    return params


def build_dense_adj(key, relation_num, node_num, num_edges):
    k1, k2, k3 = jax.random.split(key, 3)
    src = jax.random.randint(k1, (num_edges,), 0, node_num)
    dst = jax.random.randint(k2, (num_edges,), 0, node_num)
    etype = jax.random.randint(k3, (num_edges,), 0, relation_num)
    A = jnp.zeros((relation_num, node_num, node_num), jnp.float32)
    A = A.at[etype, dst, src].add(1.0)
    return A


if __name__ == "__main__":
    # config (mirrors config.dim / conv_layer_num / adj_dropout / num_bases)
    dim = 32
    conv_layer_num = 2
    num_bases = 2
    relation_num = 3
    node_num = 64
    item_num = 50
    bz = 2          # batch
    T = 8           # sequence length
    P = 8           # items_to_predict per row (2*H)

    root = jax.random.PRNGKey(0)
    k_par, k_adj, k_s0, k_s1, k_u, k_seq, k_it = jax.random.split(root, 7)

    params = build_params(k_par, item_num=item_num, node_num=node_num,
                          relation_num=relation_num, dim=dim,
                          conv_layer_num=conv_layer_num, num_bases=num_bases)

    node_no = jnp.arange(node_num, dtype=jnp.int32)
    A_full = build_dense_adj(k_adj, relation_num, node_num, num_edges=256)
    A_short_list = [build_dense_adj(k_s0, relation_num, node_num, 64),
                    build_dense_adj(k_s1, relation_num, node_num, 64)]

    batch_users = jax.random.randint(k_u, (bz,), 0, node_num)
    batch_sequences = jax.random.randint(k_seq, (bz, T), 0, node_num)
    items_to_predict = jax.random.randint(k_it, (bz, P), 0, item_num)

    # hoisted preprocessing (per weight-update / per graph, not per step)
    fused_weights = prepare_fused_weights(params)
    A_full_bf = A_full.astype(jnp.bfloat16)                  # integer counts: exact
    A_short_bf = jnp.stack(A_short_list).astype(jnp.bfloat16)

    res, user_emb, item_embs_conv = gnn_sr_forward(
        params, fused_weights, node_no, A_full_bf, A_short_bf,
        batch_users, batch_sequences, items_to_predict)
    jax.block_until_ready((res, user_emb, item_embs_conv))

    # correctness check against pure-JAX reference (full attention path)
    r_res, r_user, r_item = _ref_forward(
        params, node_no, A_full, A_short_list,
        batch_users, batch_sequences, items_to_predict)
    np.testing.assert_allclose(np.asarray(res), np.asarray(r_res),
                               rtol=1e-3, atol=1e-3)
    np.testing.assert_allclose(np.asarray(user_emb), np.asarray(r_user),
                               rtol=1e-3, atol=1e-3)
    np.testing.assert_allclose(np.asarray(item_embs_conv), np.asarray(r_item),
                               rtol=1e-3, atol=1e-3)

    print("KERNEL_OK")
</pallas_src>

<mosaic_0001>
module attributes {stable_mosaic.version = 11 : i64} {
  func.func @_fused_forward_kernel(%arg0: memref<64x32xf32, #tpu.memory_space<vmem>>, %arg1: memref<3x64x64xbf16, #tpu.memory_space<vmem>>, %arg2: memref<2x3x64x64xbf16, #tpu.memory_space<vmem>>, %arg3: memref<2x128x32xbf16, #tpu.memory_space<vmem>>, %arg4: memref<2x128x32xbf16, #tpu.memory_space<vmem>>, %arg5: memref<2x1xi32, #tpu.memory_space<vmem>>, %arg6: memref<16x1xi32, #tpu.memory_space<vmem>>, %arg7: memref<2x8x128xf32, #tpu.memory_space<vmem>>, %arg8: memref<2x8xf32, #tpu.memory_space<vmem>>, %arg9: memref<128x128xf32, #tpu.memory_space<vmem>>, %arg10: memref<2x8xf32, #tpu.memory_space<vmem>>, %arg11: memref<2x128xf32, #tpu.memory_space<vmem>>, %arg12: memref<2x8x128xf32, #tpu.memory_space<vmem>>) attributes {dimension_semantics = [], scalar_prefetch = 0 : i64, scratch_operands = 0 : i64, tpu.core_type = #tpu.core_type<tc>} {
    %c0 = arith.constant 0 : index
    %c0_0 = arith.constant 0 : index
    %0 = vector.load %arg0[%c0, %c0_0] : memref<64x32xf32, #tpu.memory_space<vmem>>, vector<64x32xf32>
    %c0_1 = arith.constant 0 : index
    %c0_2 = arith.constant 0 : index
    %c0_3 = arith.constant 0 : index
    %1 = vector.load %arg3[%c0_1, %c0_2, %c0_3] : memref<2x128x32xbf16, #tpu.memory_space<vmem>>, vector<1x128x32xbf16>
    %2 = vector.shape_cast %1 : vector<1x128x32xbf16> to vector<128x32xbf16>
    %3 = arith.truncf %0 : vector<64x32xf32> to vector<64x32xbf16>
    %c0_4 = arith.constant 0 : index
    %c0_5 = arith.constant 0 : index
    %c0_6 = arith.constant 0 : index
    %4 = vector.load %arg1[%c0_4, %c0_5, %c0_6] : memref<3x64x64xbf16, #tpu.memory_space<vmem>>, vector<1x64x64xbf16>
    %5 = vector.shape_cast %4 : vector<1x64x64xbf16> to vector<64x64xbf16>
    %cst = arith.constant dense<0.000000e+00> : vector<64x32xf32>
    %6 = tpu.matmul %5, %3, %cst {dimension_numbers = #tpu.dot_dimension_numbers<[1], [0], [0], [1], [0, 0, 1, 1], [], []>} : vector<64x64xbf16>, vector<64x32xbf16>, vector<64x32xf32> -> vector<64x32xf32>
    %c1 = arith.constant 1 : index
    %c0_7 = arith.constant 0 : index
    %c0_8 = arith.constant 0 : index
    %7 = vector.load %arg1[%c1, %c0_7, %c0_8] : memref<3x64x64xbf16, #tpu.memory_space<vmem>>, vector<1x64x64xbf16>
    %8 = vector.shape_cast %7 : vector<1x64x64xbf16> to vector<64x64xbf16>
    %cst_9 = arith.constant dense<0.000000e+00> : vector<64x32xf32>
    %9 = tpu.matmul %8, %3, %cst_9 {dimension_numbers = #tpu.dot_dimension_numbers<[1], [0], [0], [1], [0, 0, 1, 1], [], []>} : vector<64x64xbf16>, vector<64x32xbf16>, vector<64x32xf32> -> vector<64x32xf32>
    %c2 = arith.constant 2 : index
    %c0_10 = arith.constant 0 : index
    %c0_11 = arith.constant 0 : index
    %10 = vector.load %arg1[%c2, %c0_10, %c0_11] : memref<3x64x64xbf16, #tpu.memory_space<vmem>>, vector<1x64x64xbf16>
    %11 = vector.shape_cast %10 : vector<1x64x64xbf16> to vector<64x64xbf16>
    %cst_12 = arith.constant dense<0.000000e+00> : vector<64x32xf32>
    %12 = tpu.matmul %11, %3, %cst_12 {dimension_numbers = #tpu.dot_dimension_numbers<[1], [0], [0], [1], [0, 0, 1, 1], [], []>} : vector<64x64xbf16>, vector<64x32xbf16>, vector<64x32xf32> -> vector<64x32xf32>
    %13 = tpu.concatenate %6, %9, %12, %0 in 1 : vector<64x32xf32>, vector<64x32xf32>, vector<64x32xf32>, vector<64x32xf32> -> vector<64x128xf32>
    %14 = arith.truncf %13 : vector<64x128xf32> to vector<64x128xbf16>
    %cst_13 = arith.constant dense<0.000000e+00> : vector<64x32xf32>
    %15 = tpu.matmul %14, %2, %cst_13 {dimension_numbers = #tpu.dot_dimension_numbers<[1], [0], [0], [1], [0, 0, 1, 1], [], []>} : vector<64x128xbf16>, vector<128x32xbf16>, vector<64x32xf32> -> vector<64x32xf32>
    %16 = math.tanh %15 : vector<64x32xf32>
    %c1_14 = arith.constant 1 : index
    %c0_15 = arith.constant 0 : index
    %c0_16 = arith.constant 0 : index
    %17 = vector.load %arg3[%c1_14, %c0_15, %c0_16] : memref<2x128x32xbf16, #tpu.memory_space<vmem>>, vector<1x128x32xbf16>
    %18 = vector.shape_cast %17 : vector<1x128x32xbf16> to vector<128x32xbf16>
    %19 = arith.truncf %16 : vector<64x32xf32> to vector<64x32xbf16>
    %c0_17 = arith.constant 0 : index
    %c0_18 = arith.constant 0 : index
    %c0_19 = arith.constant 0 : index
    %20 = vector.load %arg1[%c0_17, %c0_18, %c0_19] : memref<3x64x64xbf16, #tpu.memory_space<vmem>>, vector<1x64x64xbf16>
    %21 = vector.shape_cast %20 : vector<1x64x64xbf16> to vector<64x64xbf16>
    %cst_20 = arith.constant dense<0.000000e+00> : vector<64x32xf32>
    %22 = tpu.matmul %21, %19, %cst_20 {dimension_numbers = #tpu.dot_dimension_numbers<[1], [0], [0], [1], [0, 0, 1, 1], [], []>} : vector<64x64xbf16>, vector<64x32xbf16>, vector<64x32xf32> -> vector<64x32xf32>
    %c1_21 = arith.constant 1 : index
    %c0_22 = arith.constant 0 : index
    %c0_23 = arith.constant 0 : index
    %23 = vector.load %arg1[%c1_21, %c0_22, %c0_23] : memref<3x64x64xbf16, #tpu.memory_space<vmem>>, vector<1x64x64xbf16>
    %24 = vector.shape_cast %23 : vector<1x64x64xbf16> to vector<64x64xbf16>
    %cst_24 = arith.constant dense<0.000000e+00> : vector<64x32xf32>
    %25 = tpu.matmul %24, %19, %cst_24 {dimension_numbers = #tpu.dot_dimension_numbers<[1], [0], [0], [1], [0, 0, 1, 1], [], []>} : vector<64x64xbf16>, vector<64x32xbf16>, vector<64x32xf32> -> vector<64x32xf32>
    %c2_25 = arith.constant 2 : index
    %c0_26 = arith.constant 0 : index
    %c0_27 = arith.constant 0 : index
    %26 = vector.load %arg1[%c2_25, %c0_26, %c0_27] : memref<3x64x64xbf16, #tpu.memory_space<vmem>>, vector<1x64x64xbf16>
    %27 = vector.shape_cast %26 : vector<1x64x64xbf16> to vector<64x64xbf16>
    %cst_28 = arith.constant dense<0.000000e+00> : vector<64x32xf32>
    %28 = tpu.matmul %27, %19, %cst_28 {dimension_numbers = #tpu.dot_dimension_numbers<[1], [0], [0], [1], [0, 0, 1, 1], [], []>} : vector<64x64xbf16>, vector<64x32xbf16>, vector<64x32xf32> -> vector<64x32xf32>
    %29 = tpu.concatenate %22, %25, %28, %16 in 1 : vector<64x32xf32>, vector<64x32xf32>, vector<64x32xf32>, vector<64x32xf32> -> vector<64x128xf32>
    %30 = arith.truncf %29 : vector<64x128xf32> to vector<64x128xbf16>
    %cst_29 = arith.constant dense<0.000000e+00> : vector<64x32xf32>
    %31 = tpu.matmul %30, %18, %cst_29 {dimension_numbers = #tpu.dot_dimension_numbers<[1], [0], [0], [1], [0, 0, 1, 1], [], []>} : vector<64x128xbf16>, vector<128x32xbf16>, vector<64x32xf32> -> vector<64x32xf32>
    %32 = math.tanh %31 : vector<64x32xf32>
    %c0_30 = arith.constant 0 : index
    %c0_31 = arith.constant 0 : index
    %c0_32 = arith.constant 0 : index
    %33 = vector.load %arg4[%c0_30, %c0_31, %c0_32] : memref<2x128x32xbf16, #tpu.memory_space<vmem>>, vector<1x128x32xbf16>
    %34 = vector.shape_cast %33 : vector<1x128x32xbf16> to vector<128x32xbf16>
    %35 = arith.truncf %32 : vector<64x32xf32> to vector<64x32xbf16>
    %c0_33 = arith.constant 0 : index
    %c0_34 = arith.constant 0 : index
    %c0_35 = arith.constant 0 : index
    %c0_36 = arith.constant 0 : index
    %36 = vector.load %arg2[%c0_33, %c0_34, %c0_35, %c0_36] : memref<2x3x64x64xbf16, #tpu.memory_space<vmem>>, vector<1x1x64x64xbf16>
    %37 = vector.shape_cast %36 : vector<1x1x64x64xbf16> to vector<64x64xbf16>
    %cst_37 = arith.constant dense<0.000000e+00> : vector<64x32xf32>
    %38 = tpu.matmul %37, %35, %cst_37 {dimension_numbers = #tpu.dot_dimension_numbers<[1], [0], [0], [1], [0, 0, 1, 1], [], []>} : vector<64x64xbf16>, vector<64x32xbf16>, vector<64x32xf32> -> vector<64x32xf32>
    %c0_38 = arith.constant 0 : index
    %c1_39 = arith.constant 1 : index
    %c0_40 = arith.constant 0 : index
    %c0_41 = arith.constant 0 : index
    %39 = vector.load %arg2[%c0_38, %c1_39, %c0_40, %c0_41] : memref<2x3x64x64xbf16, #tpu.memory_space<vmem>>, vector<1x1x64x64xbf16>
    %40 = vector.shape_cast %39 : vector<1x1x64x64xbf16> to vector<64x64xbf16>
    %cst_42 = arith.constant dense<0.000000e+00> : vector<64x32xf32>
    %41 = tpu.matmul %40, %35, %cst_42 {dimension_numbers = #tpu.dot_dimension_numbers<[1], [0], [0], [1], [0, 0, 1, 1], [], []>} : vector<64x64xbf16>, vector<64x32xbf16>, vector<64x32xf32> -> vector<64x32xf32>
    %c0_43 = arith.constant 0 : index
    %c2_44 = arith.constant 2 : index
    %c0_45 = arith.constant 0 : index
    %c0_46 = arith.constant 0 : index
    %42 = vector.load %arg2[%c0_43, %c2_44, %c0_45, %c0_46] : memref<2x3x64x64xbf16, #tpu.memory_space<vmem>>, vector<1x1x64x64xbf16>
    %43 = vector.shape_cast %42 : vector<1x1x64x64xbf16> to vector<64x64xbf16>
    %cst_47 = arith.constant dense<0.000000e+00> : vector<64x32xf32>
    %44 = tpu.matmul %43, %35, %cst_47 {dimension_numbers = #tpu.dot_dimension_numbers<[1], [0], [0], [1], [0, 0, 1, 1], [], []>} : vector<64x64xbf16>, vector<64x32xbf16>, vector<64x32xf32> -> vector<64x32xf32>
    %45 = tpu.concatenate %38, %41, %44, %32 in 1 : vector<64x32xf32>, vector<64x32xf32>, vector<64x32xf32>, vector<64x32xf32> -> vector<64x128xf32>
    %46 = arith.truncf %45 : vector<64x128xf32> to vector<64x128xbf16>
    %cst_48 = arith.constant dense<0.000000e+00> : vector<64x32xf32>
    %47 = tpu.matmul %46, %34, %cst_48 {dimension_numbers = #tpu.dot_dimension_numbers<[1], [0], [0], [1], [0, 0, 1, 1], [], []>} : vector<64x128xbf16>, vector<128x32xbf16>, vector<64x32xf32> -> vector<64x32xf32>
    %48 = math.tanh %47 : vector<64x32xf32>
    %c0_49 = arith.constant 0 : index
    %c0_50 = arith.constant 0 : index
    %c0_51 = arith.constant 0 : index
    %49 = vector.load %arg4[%c0_49, %c0_50, %c0_51] : memref<2x128x32xbf16, #tpu.memory_space<vmem>>, vector<1x128x32xbf16>
    %50 = vector.shape_cast %49 : vector<1x128x32xbf16> to vector<128x32xbf16>
    %51 = arith.truncf %48 : vector<64x32xf32> to vector<64x32xbf16>
    %c1_52 = arith.constant 1 : index
    %c0_53 = arith.constant 0 : index
    %c0_54 = arith.constant 0 : index
    %c0_55 = arith.constant 0 : index
    %52 = vector.load %arg2[%c1_52, %c0_53, %c0_54, %c0_55] : memref<2x3x64x64xbf16, #tpu.memory_space<vmem>>, vector<1x1x64x64xbf16>
    %53 = vector.shape_cast %52 : vector<1x1x64x64xbf16> to vector<64x64xbf16>
    %cst_56 = arith.constant dense<0.000000e+00> : vector<64x32xf32>
    %54 = tpu.matmul %53, %51, %cst_56 {dimension_numbers = #tpu.dot_dimension_numbers<[1], [0], [0], [1], [0, 0, 1, 1], [], []>} : vector<64x64xbf16>, vector<64x32xbf16>, vector<64x32xf32> -> vector<64x32xf32>
    %c1_57 = arith.constant 1 : index
    %c1_58 = arith.constant 1 : index
    %c0_59 = arith.constant 0 : index
    %c0_60 = arith.constant 0 : index
    %55 = vector.load %arg2[%c1_57, %c1_58, %c0_59, %c0_60] : memref<2x3x64x64xbf16, #tpu.memory_space<vmem>>, vector<1x1x64x64xbf16>
    %56 = vector.shape_cast %55 : vector<1x1x64x64xbf16> to vector<64x64xbf16>
    %cst_61 = arith.constant dense<0.000000e+00> : vector<64x32xf32>
    %57 = tpu.matmul %56, %51, %cst_61 {dimension_numbers = #tpu.dot_dimension_numbers<[1], [0], [0], [1], [0, 0, 1, 1], [], []>} : vector<64x64xbf16>, vector<64x32xbf16>, vector<64x32xf32> -> vector<64x32xf32>
    %c1_62 = arith.constant 1 : index
    %c2_63 = arith.constant 2 : index
    %c0_64 = arith.constant 0 : index
    %c0_65 = arith.constant 0 : index
    %58 = vector.load %arg2[%c1_62, %c2_63, %c0_64, %c0_65] : memref<2x3x64x64xbf16, #tpu.memory_space<vmem>>, vector<1x1x64x64xbf16>
    %59 = vector.shape_cast %58 : vector<1x1x64x64xbf16> to vector<64x64xbf16>
    %cst_66 = arith.constant dense<0.000000e+00> : vector<64x32xf32>
    %60 = tpu.matmul %59, %51, %cst_66 {dimension_numbers = #tpu.dot_dimension_numbers<[1], [0], [0], [1], [0, 0, 1, 1], [], []>} : vector<64x64xbf16>, vector<64x32xbf16>, vector<64x32xf32> -> vector<64x32xf32>
    %61 = tpu.concatenate %54, %57, %60, %48 in 1 : vector<64x32xf32>, vector<64x32xf32>, vector<64x32xf32>, vector<64x32xf32> -> vector<64x128xf32>
    %62 = arith.truncf %61 : vector<64x128xf32> to vector<64x128xbf16>
    %cst_67 = arith.constant dense<0.000000e+00> : vector<64x32xf32>
    %63 = tpu.matmul %62, %50, %cst_67 {dimension_numbers = #tpu.dot_dimension_numbers<[1], [0], [0], [1], [0, 0, 1, 1], [], []>} : vector<64x128xbf16>, vector<128x32xbf16>, vector<64x32xf32> -> vector<64x32xf32>
    %64 = math.tanh %63 : vector<64x32xf32>
    %c1_68 = arith.constant 1 : index
    %c0_69 = arith.constant 0 : index
    %c0_70 = arith.constant 0 : index
    %65 = vector.load %arg4[%c1_68, %c0_69, %c0_70] : memref<2x128x32xbf16, #tpu.memory_space<vmem>>, vector<1x128x32xbf16>
    %66 = vector.shape_cast %65 : vector<1x128x32xbf16> to vector<128x32xbf16>
    %67 = arith.truncf %64 : vector<64x32xf32> to vector<64x32xbf16>
    %c0_71 = arith.constant 0 : index
    %c0_72 = arith.constant 0 : index
    %c0_73 = arith.constant 0 : index
    %c0_74 = arith.constant 0 : index
    %68 = vector.load %arg2[%c0_71, %c0_72, %c0_73, %c0_74] : memref<2x3x64x64xbf16, #tpu.memory_space<vmem>>, vector<1x1x64x64xbf16>
    %69 = vector.shape_cast %68 : vector<1x1x64x64xbf16> to vector<64x64xbf16>
    %cst_75 = arith.constant dense<0.000000e+00> : vector<64x32xf32>
    %70 = tpu.matmul %69, %67, %cst_75 {dimension_numbers = #tpu.dot_dimension_numbers<[1], [0], [0], [1], [0, 0, 1, 1], [], []>} : vector<64x64xbf16>, vector<64x32xbf16>, vector<64x32xf32> -> vector<64x32xf32>
    %c0_76 = arith.constant 0 : index
    %c1_77 = arith.constant 1 : index
    %c0_78 = arith.constant 0 : index
    %c0_79 = arith.constant 0 : index
    %71 = vector.load %arg2[%c0_76, %c1_77, %c0_78, %c0_79] : memref<2x3x64x64xbf16, #tpu.memory_space<vmem>>, vector<1x1x64x64xbf16>
    %72 = vector.shape_cast %71 : vector<1x1x64x64xbf16> to vector<64x64xbf16>
    %cst_80 = arith.constant dense<0.000000e+00> : vector<64x32xf32>
    %73 = tpu.matmul %72, %67, %cst_80 {dimension_numbers = #tpu.dot_dimension_numbers<[1], [0], [0], [1], [0, 0, 1, 1], [], []>} : vector<64x64xbf16>, vector<64x32xbf16>, vector<64x32xf32> -> vector<64x32xf32>
    %c0_81 = arith.constant 0 : index
    %c2_82 = arith.constant 2 : index
    %c0_83 = arith.constant 0 : index
    %c0_84 = arith.constant 0 : index
    %74 = vector.load %arg2[%c0_81, %c2_82, %c0_83, %c0_84] : memref<2x3x64x64xbf16, #tpu.memory_space<vmem>>, vector<1x1x64x64xbf16>
    %75 = vector.shape_cast %74 : vector<1x1x64x64xbf16> to vector<64x64xbf16>
    %cst_85 = arith.constant dense<0.000000e+00> : vector<64x32xf32>
    %76 = tpu.matmul %75, %67, %cst_85 {dimension_numbers = #tpu.dot_dimension_numbers<[1], [0], [0], [1], [0, 0, 1, 1], [], []>} : vector<64x64xbf16>, vector<64x32xbf16>, vector<64x32xf32> -> vector<64x32xf32>
    %77 = tpu.concatenate %70, %73, %76, %64 in 1 : vector<64x32xf32>, vector<64x32xf32>, vector<64x32xf32>, vector<64x32xf32> -> vector<64x128xf32>
    %78 = arith.truncf %77 : vector<64x128xf32> to vector<64x128xbf16>
    %cst_86 = arith.constant dense<0.000000e+00> : vector<64x32xf32>
    %79 = tpu.matmul %78, %66, %cst_86 {dimension_numbers = #tpu.dot_dimension_numbers<[1], [0], [0], [1], [0, 0, 1, 1], [], []>} : vector<64x128xbf16>, vector<128x32xbf16>, vector<64x32xf32> -> vector<64x32xf32>
    %80 = math.tanh %79 : vector<64x32xf32>
    %c1_87 = arith.constant 1 : index
    %c0_88 = arith.constant 0 : index
    %c0_89 = arith.constant 0 : index
    %81 = vector.load %arg4[%c1_87, %c0_88, %c0_89] : memref<2x128x32xbf16, #tpu.memory_space<vmem>>, vector<1x128x32xbf16>
    %82 = vector.shape_cast %81 : vector<1x128x32xbf16> to vector<128x32xbf16>
    %83 = arith.truncf %80 : vector<64x32xf32> to vector<64x32xbf16>
    %c1_90 = arith.constant 1 : index
    %c0_91 = arith.constant 0 : index
    %c0_92 = arith.constant 0 : index
    %c0_93 = arith.constant 0 : index
    %84 = vector.load %arg2[%c1_90, %c0_91, %c0_92, %c0_93] : memref<2x3x64x64xbf16, #tpu.memory_space<vmem>>, vector<1x1x64x64xbf16>
    %85 = vector.shape_cast %84 : vector<1x1x64x64xbf16> to vector<64x64xbf16>
    %cst_94 = arith.constant dense<0.000000e+00> : vector<64x32xf32>
    %86 = tpu.matmul %85, %83, %cst_94 {dimension_numbers = #tpu.dot_dimension_numbers<[1], [0], [0], [1], [0, 0, 1, 1], [], []>} : vector<64x64xbf16>, vector<64x32xbf16>, vector<64x32xf32> -> vector<64x32xf32>
    %c1_95 = arith.constant 1 : index
    %c1_96 = arith.constant 1 : index
    %c0_97 = arith.constant 0 : index
    %c0_98 = arith.constant 0 : index
    %87 = vector.load %arg2[%c1_95, %c1_96, %c0_97, %c0_98] : memref<2x3x64x64xbf16, #tpu.memory_space<vmem>>, vector<1x1x64x64xbf16>
    %88 = vector.shape_cast %87 : vector<1x1x64x64xbf16> to vector<64x64xbf16>
    %cst_99 = arith.constant dense<0.000000e+00> : vector<64x32xf32>
    %89 = tpu.matmul %88, %83, %cst_99 {dimension_numbers = #tpu.dot_dimension_numbers<[1], [0], [0], [1], [0, 0, 1, 1], [], []>} : vector<64x64xbf16>, vector<64x32xbf16>, vector<64x32xf32> -> vector<64x32xf32>
    %c1_100 = arith.constant 1 : index
    %c2_101 = arith.constant 2 : index
    %c0_102 = arith.constant 0 : index
    %c0_103 = arith.constant 0 : index
    %90 = vector.load %arg2[%c1_100, %c2_101, %c0_102, %c0_103] : memref<2x3x64x64xbf16, #tpu.memory_space<vmem>>, vector<1x1x64x64xbf16>
    %91 = vector.shape_cast %90 : vector<1x1x64x64xbf16> to vector<64x64xbf16>
    %cst_104 = arith.constant dense<0.000000e+00> : vector<64x32xf32>
    %92 = tpu.matmul %91, %83, %cst_104 {dimension_numbers = #tpu.dot_dimension_numbers<[1], [0], [0], [1], [0, 0, 1, 1], [], []>} : vector<64x64xbf16>, vector<64x32xbf16>, vector<64x32xf32> -> vector<64x32xf32>
    %93 = tpu.concatenate %86, %89, %92, %80 in 1 : vector<64x32xf32>, vector<64x32xf32>, vector<64x32xf32>, vector<64x32xf32> -> vector<64x128xf32>
    %94 = arith.truncf %93 : vector<64x128xf32> to vector<64x128xbf16>
    %cst_105 = arith.constant dense<0.000000e+00> : vector<64x32xf32>
    %95 = tpu.matmul %94, %82, %cst_105 {dimension_numbers = #tpu.dot_dimension_numbers<[1], [0], [0], [1], [0, 0, 1, 1], [], []>} : vector<64x128xbf16>, vector<128x32xbf16>, vector<64x32xf32> -> vector<64x32xf32>
    %96 = math.tanh %95 : vector<64x32xf32>
    %97 = tpu.concatenate %16, %32, %64, %96 in 1 : vector<64x32xf32>, vector<64x32xf32>, vector<64x32xf32>, vector<64x32xf32> -> vector<64x128xf32>
    %c0_106 = arith.constant 0 : index
    %c0_107 = arith.constant 0 : index
    %98 = vector.load %arg5[%c0_106, %c0_107] : memref<2x1xi32, #tpu.memory_space<vmem>>, vector<2x1xi32>
    %99 = tpu.iota {dimensions = array<i32: 1>} : vector<2x64xi32>
    %100 = vector.broadcast %98 : vector<2x1xi32> to vector<2x64xi32>
    %101 = arith.cmpi eq, %99, %100 : vector<2x64xi32>
    %102 = arith.extui %101 : vector<2x64xi1> to vector<2x64xi32>
    %103 = arith.sitofp %102 : vector<2x64xi32> to vector<2x64xf32>
    %cst_108 = arith.constant dense<0.000000e+00> : vector<2x128xf32>
    %104 = tpu.matmul %103, %97, %cst_108 {dimension_numbers = #tpu.dot_dimension_numbers<[1], [0], [0], [1], [0, 0, 1, 1], [], []>} : vector<2x64xf32>, vector<64x128xf32>, vector<2x128xf32> -> vector<2x128xf32>
    %c0_109 = arith.constant 0 : index
    %c0_110 = arith.constant 0 : index
    %105 = vector.load %arg6[%c0_109, %c0_110] : memref<16x1xi32, #tpu.memory_space<vmem>>, vector<16x1xi32>
    %106 = tpu.iota {dimensions = array<i32: 1>} : vector<16x64xi32>
    %107 = vector.broadcast %105 : vector<16x1xi32> to vector<16x64xi32>
    %108 = arith.cmpi eq, %106, %107 : vector<16x64xi32>
    %109 = arith.extui %108 : vector<16x64xi1> to vector<16x64xi32>
    %110 = arith.sitofp %109 : vector<16x64xi32> to vector<16x64xf32>
    %cst_111 = arith.constant dense<0.000000e+00> : vector<16x128xf32>
    %111 = tpu.matmul %110, %97, %cst_111 {dimension_numbers = #tpu.dot_dimension_numbers<[1], [0], [0], [1], [0, 0, 1, 1], [], []>} : vector<16x64xf32>, vector<64x128xf32>, vector<16x128xf32> -> vector<16x128xf32>
    %112 = vector.shape_cast %111 : vector<16x128xf32> to vector<2x8x128xf32>
    %c0_112 = arith.constant 0 : index
    %c0_113 = arith.constant 0 : index
    %113 = vector.load %arg11[%c0_112, %c0_113] : memref<2x128xf32, #tpu.memory_space<vmem>>, vector<2x128xf32>
    tpu.vector_store %arg11[%c0_112, %c0_113], %104 {strides = array<i32>} : memref<2x128xf32, #tpu.memory_space<vmem>>, vector<2x128xf32>,
    %c0_114 = arith.constant 0 : index
    %c0_115 = arith.constant 0 : index
    %c0_116 = arith.constant 0 : index
    %114 = vector.load %arg12[%c0_114, %c0_115, %c0_116] : memref<2x8x128xf32, #tpu.memory_space<vmem>>, vector<2x8x128xf32>
    tpu.vector_store %arg12[%c0_114, %c0_115, %c0_116], %112 {strides = array<i32>} : memref<2x8x128xf32, #tpu.memory_space<vmem>>, vector<2x8x128xf32>,
    %cst_117 = arith.constant dense<0.000000e+00> : vector<2x128xf32>
    %115 = vector.multi_reduction <add>, %112, %cst_117 [1] : vector<2x8x128xf32> to vector<2x128xf32>
    %c0_118 = arith.constant 0 : index
    %c0_119 = arith.constant 0 : index
    %116 = vector.load %arg9[%c0_118, %c0_119] : memref<128x128xf32, #tpu.memory_space<vmem>>, vector<128x128xf32>
    %cst_120 = arith.constant dense<0.000000e+00> : vector<2x128xf32>
    %117 = tpu.matmul %115, %116, %cst_120 {dimension_numbers = #tpu.dot_dimension_numbers<[1], [0], [0], [1], [0, 0, 1, 1], [], []>} : vector<2x128xf32>, vector<128x128xf32>, vector<2x128xf32> -> vector<2x128xf32>
    %c0_121 = arith.constant 0 : index
    %c0_122 = arith.constant 0 : index
    %c0_123 = arith.constant 0 : index
    %118 = vector.load %arg7[%c0_121, %c0_122, %c0_123] : memref<2x8x128xf32, #tpu.memory_space<vmem>>, vector<2x8x128xf32>
    %119 = arith.addf %104, %117 : vector<2x128xf32>
    %120 = vector.shape_cast %119 : vector<2x128xf32> to vector<2x1x128xf32>
    %121 = vector.broadcast %120 : vector<2x1x128xf32> to vector<2x8x128xf32>
    %122 = arith.mulf %121, %118 : vector<2x8x128xf32>
    %cst_124 = arith.constant dense<0.000000e+00> : vector<2x8xf32>
    %123 = vector.multi_reduction <add>, %122, %cst_124 [2] : vector<2x8x128xf32> to vector<2x8xf32>
    %c0_125 = arith.constant 0 : index
    %c0_126 = arith.constant 0 : index
    %124 = vector.load %arg8[%c0_125, %c0_126] : memref<2x8xf32, #tpu.memory_space<vmem>>, vector<2x8xf32>
    %125 = arith.addf %123, %124 : vector<2x8xf32>
    %c0_127 = arith.constant 0 : index
    %c0_128 = arith.constant 0 : index
    %126 = vector.load %arg10[%c0_127, %c0_128] : memref<2x8xf32, #tpu.memory_space<vmem>>, vector<2x8xf32>
    tpu.vector_store %arg10[%c0_127, %c0_128], %125 {strides = array<i32>} : memref<2x8xf32, #tpu.memory_space<vmem>>, vector<2x8xf32>,
    return
  }
}

</mosaic_0001>

<llo_original>
// kernel: tpu_custom_call.1
$region0: #{tpu_custom_call.1}
  #allocation0 [shape = 'u32[]', space=smem, size = 0x4, offset = 0x4, fixed_abs, tag = 'smem constant byte address 0x4 - core index']
  #allocation1 [shape = 'u32[144,128]{1,0:T(1,128)}', space=vmem, size = 0x12000, scoped, tag = 'internal scratch']
  %s0 = inlined_call_operand.vmem [shape: f32[64,32], index: 0, kind: input, shape index: {}]
  %s1 = inlined_call_operand.vmem [shape: bf16[3,64,64], index: 1, kind: input, shape index: {}]
  %s2 = inlined_call_operand.vmem [shape: bf16[2,3,64,64], index: 2, kind: input, shape index: {}]
  %s3 = inlined_call_operand.vmem [shape: bf16[2,128,32], index: 3, kind: input, shape index: {}]
  %s4 = inlined_call_operand.vmem [shape: bf16[2,128,32], index: 4, kind: input, shape index: {}]
  %s5 = inlined_call_operand.vmem [shape: s32[2,1], index: 5, kind: input, shape index: {}]
  %s6 = inlined_call_operand.vmem [shape: s32[16,1], index: 6, kind: input, shape index: {}]
  %s7 = inlined_call_operand.hbm [shape: f32[2,8,128], index: 7, kind: input, shape index: {}]
  %s8 = inlined_call_operand.vmem [shape: f32[2,8], index: 8, kind: input, shape index: {}]
  %s9 = inlined_call_operand.vmem [shape: f32[128,128], index: 9, kind: input, shape index: {}]
  %s10 = inlined_call_operand.hbm [shape: f32[2,8], index: 10, kind: output, shape index: {0}]
  %s11 = inlined_call_operand.hbm [shape: f32[2,128], index: 11, kind: output, shape index: {1}]
  %s12 = inlined_call_operand.hbm [shape: f32[2,8,128], index: 12, kind: output, shape index: {2}]
  %13 = xla_tuple %s10, %s11, %s12
  %s14 = sld [smem:[#allocation0]]
  $region70: #{tpu_custom_call.1} parent=0
    _
  %s16 = ssub.s32 1, %s14
  %s17 = scalar_select 0, %s16, %s14
  $region1: #{tpu_custom_call.1} parent=0
    #allocation2 [shape = 'u8[8192]{0}', space=vmem, size = 0x2000, scoped, tag = 'input window, operand 7, single buffered']
    #allocation3 [shape = 's32[1]{0}', space=sflag, size = 0x4, scoped, tag = 'scoped memory for tpu_custom_call.1']
    #allocation4 [shape = 's32[1]{0}', space=sflag, size = 0x4, scoped, tag = 'scoped memory for tpu_custom_call.1']
    #allocation5 [shape = 'u8[1024]{0}', space=vmem, size = 0x400, scoped, tag = 'output window, operand 0, single buffered']
    #allocation6 [shape = 'u8[1024]{0}', space=vmem, size = 0x400, scoped, tag = 'output window, operand 1, single buffered']
    #allocation7 [shape = 's32[1]{0}', space=sflag, size = 0x4, scoped, tag = 'scoped memory for tpu_custom_call.1']
    #allocation8 [shape = 'u8[8192]{0}', space=vmem, size = 0x2000, scoped, tag = 'output window, operand 2, single buffered']
    %18 = vsyncpa [#allocation3], 0
    %19 = vsyncpa [#allocation4], 0
    %20 = vsyncpa [#allocation7], 0
    // Predicated region
    $region2: #{tpu_custom_call.1} parent=1 // pred_check
      _
    $region3: #{tpu_custom_call.1} parent=1 // pred_check_branch
      %22 = sbr.rel (0) target = $region5
    $region4: #{tpu_custom_call.1} parent=1 // pred_region
      _
    $region5: #{tpu_custom_call.1} parent=1 // pred_fallthru
      _
    // Predicated region
    $region6: #{tpu_custom_call.1} parent=1 // pred_check
      _
    $region7: #{tpu_custom_call.1} parent=1 // pred_check_branch
      %24 = sbr.rel (0) target = $region9
    $region8: #{tpu_custom_call.1} parent=1 // pred_region
      _
    $region9: #{tpu_custom_call.1} parent=1 // pred_fallthru
      _
    // Predicated region
    $region10: #{tpu_custom_call.1} parent=1 // pred_check
      _
    $region11: #{tpu_custom_call.1} parent=1 // pred_check_branch
      %26 = sbr.rel (0) target = $region13
    $region12: #{tpu_custom_call.1} parent=1 // pred_region
      _
    $region13: #{tpu_custom_call.1} parent=1 // pred_fallthru
      _
    // Predicated region
    $region14: #{tpu_custom_call.1} parent=1 // pred_check
      _
    $region15: #{tpu_custom_call.1} parent=1 // pred_check_branch
      %28 = sbr.rel (0) target = $region17
    $region16: #{tpu_custom_call.1} parent=1 // pred_region
      _
    $region17: #{tpu_custom_call.1} parent=1 // pred_fallthru
      _
    // Predicated region
    $region18: #{tpu_custom_call.1} parent=1 // pred_check
      _
    $region19: #{tpu_custom_call.1} parent=1 // pred_check_branch
      %30 = sbr.rel (0) target = $region21
    $region20: #{tpu_custom_call.1} parent=1 // pred_region
      _
    $region21: #{tpu_custom_call.1} parent=1 // pred_fallthru
      _
    // Predicated region
    $region22: #{tpu_custom_call.1} parent=1 // pred_check
      _
    $region23: #{tpu_custom_call.1} parent=1 // pred_check_branch
      %32 = sbr.rel (0) target = $region25
    $region24: #{tpu_custom_call.1} parent=1 // pred_region
      _
    $region25: #{tpu_custom_call.1} parent=1 // pred_fallthru
      _
    // Predicated region
    $region26: #{tpu_custom_call.1} parent=1 // pred_check
      _
    $region27: #{tpu_custom_call.1} parent=1 // pred_check_branch
      %34 = sbr.rel (0) target = $region29
    $region28: #{tpu_custom_call.1} parent=1 // pred_region
      _
    $region29: #{tpu_custom_call.1} parent=1 // pred_fallthru
      _
    // Predicated region
    $region30: #{tpu_custom_call.1} parent=1 // pred_check
      _
    $region31: #{tpu_custom_call.1} parent=1 // pred_check_branch
      %36 = sbr.rel (0) target = $region33
    $region32: #{tpu_custom_call.1} parent=1 // pred_region
      %s38 = ssub.s32 256, 256
      %39 = vsyncadd [#allocation3], %s38
      %s40 = sshll.u32 [#allocation2], 4
      %s41 = int_to_ptr.vmem [resolvable:$true] %s40
      %46 = dma.hbm_to_vmem [thread:$0]  %s7, 256, %s41, [#allocation3], 128, 128, 8
    $region33: #{tpu_custom_call.1} parent=1 // pred_fallthru
      _
    // Predicated region
    $region34: #{tpu_custom_call.1} parent=1 // pred_check
      _
    $region35: #{tpu_custom_call.1} parent=1 // pred_check_branch
      %48 = sbr.rel (0) target = $region37
    $region36: #{tpu_custom_call.1} parent=1 // pred_region
      _
    $region37: #{tpu_custom_call.1} parent=1 // pred_fallthru
      _
    // Predicated region
    $region38: #{tpu_custom_call.1} parent=1 // pred_check
      _
    $region39: #{tpu_custom_call.1} parent=1 // pred_check_branch
      %50 = sbr.rel (0) target = $region41
    $region40: #{tpu_custom_call.1} parent=1 // pred_region
      _
    $region41: #{tpu_custom_call.1} parent=1 // pred_fallthru
      _
    // Predicated region
    $region42: #{tpu_custom_call.1} parent=1 // pred_check
      _
    $region43: #{tpu_custom_call.1} parent=1 // pred_check_branch
      %52 = sbr.rel (0) target = $region45
    $region44: #{tpu_custom_call.1} parent=1 // pred_region
      %53 = dma.done [#allocation3], 256
    $region45: #{tpu_custom_call.1} parent=1 // pred_fallthru
      _
    %v55 = vld [vmem:[%s0] sm:$0xff]
    %v56 = vld [vmem:[%s0 + $0x8] sm:$0xff]
    %v57 = vld [vmem:[%s0 + $0x10] sm:$0xff]
    %v58 = vld [vmem:[%s0 + $0x18] sm:$0xff]
    %v59 = vld [vmem:[%s0 + $0x20] sm:$0xff]
    %v60 = vld [vmem:[%s0 + $0x28] sm:$0xff]
    %v61 = vld [vmem:[%s0 + $0x30] sm:$0xff]
    %v62 = vld [vmem:[%s0 + $0x38] sm:$0xff]
    %v63 = vld [vmem:[%s3] sm:$0xf]
    %v64 = vld [vmem:[%s3 + $0x4] sm:$0xf]
    %v65 = vld [vmem:[%s3 + $0x8] sm:$0xf]
    %v66 = vld [vmem:[%s3 + $0xc] sm:$0xf]
    %v67 = vld [vmem:[%s3 + $0x10] sm:$0xf]
    %v68 = vld [vmem:[%s3 + $0x14] sm:$0xf]
    %v69 = vld [vmem:[%s3 + $0x18] sm:$0xf]
    %v70 = vld [vmem:[%s3 + $0x1c] sm:$0xf]
    %v71 = vld [vmem:[%s3 + $0x20] sm:$0xf]
    %v72 = vld [vmem:[%s3 + $0x24] sm:$0xf]
    %v73 = vld [vmem:[%s3 + $0x28] sm:$0xf]
    %v74 = vld [vmem:[%s3 + $0x2c] sm:$0xf]
    %v75 = vld [vmem:[%s3 + $0x30] sm:$0xf]
    %v76 = vld [vmem:[%s3 + $0x34] sm:$0xf]
    %v77 = vld [vmem:[%s3 + $0x38] sm:$0xf]
    %v78 = vld [vmem:[%s3 + $0x3c] sm:$0xf]
    %v79 = vpack.c.bf16 %v56, %v55
    %v80 = vpack.c.bf16 %v58, %v57
    %v81 = vpack.c.bf16 %v60, %v59
    %v82 = vpack.c.bf16 %v62, %v61
    %v83 = vld [vmem:[%s1] sm:$0xf]
    %v84 = vld [vmem:[%s1 + $0x4] sm:$0xf]
    %v85 = vld [vmem:[%s1 + $0x8] sm:$0xf]
    %v86 = vld [vmem:[%s1 + $0xc] sm:$0xf]
    %v87 = vld [vmem:[%s1 + $0x10] sm:$0xf]
    %v88 = vld [vmem:[%s1 + $0x14] sm:$0xf]
    %v89 = vld [vmem:[%s1 + $0x18] sm:$0xf]
    %v90 = vld [vmem:[%s1 + $0x1c] sm:$0xf]
    %v99 = vunpack.c.l.b16 %v83
    %v100 = vunpack.c.l.b16 %v84
    %v101 = vunpack.c.l.b16 %v85
    %v102 = vunpack.c.l.b16 %v86
    %v103 = vunpack.c.l.b16 %v87
    %v104 = vunpack.c.l.b16 %v88
    %v105 = vunpack.c.l.b16 %v89
    %v106 = vunpack.c.l.b16 %v90
    %v107 = vpack.c.b16 %v100, %v99
    %v108 = vpack.c.b16 %v102, %v101
    %v109 = vpack.c.b16 %v104, %v103
    %v110 = vpack.c.b16 %v106, %v105
    %vm111 = vcmask 523264
    %v113 = vsel %vm111, %v107, 0
    %v116 = vsel %vm111, %v108, 0
    %v119 = vsel %vm111, %v109, 0
    %v122 = vsel %vm111, %v110, 0
    %124 = vmatprep.subr.bf16.mxu0 0
    %125 = vmatpush1.bf16.msra.mxu0 %v79
    %126 = vmatprep.subr.bf16.mxu0 0
    %127 = vmatpush1.bf16.msra.mxu0 %v80
    %128 = vmatprep.subr.bf16.mxu0 0
    %129 = vmatpush1.bf16.msra.mxu0 %v81
    %130 = vmatprep.subr.bf16.mxu0 0
    %131 = vmatpush1.bf16.msra.mxu0 %v82
    %132 = vmatprep.subr.bf16.mxu0 0
    %133 = vmatpush1.bf16.msra.mxu0 0
    %134 = vmatprep.subr.bf16.mxu0 0
    %135 = vmatpush1.bf16.msra.mxu0 0
    %136 = vmatprep.subr.bf16.mxu0 0
    %137 = vmatpush1.bf16.msra.mxu0 0
    %138 = vmatprep.subr.bf16.mxu0 0
    %139 = vmatpush1.bf16.msra.mxu0 0
    %140 = vmatprep.subr.bf16.mxu0 0
    %141 = vmatpush1.bf16.msra.mxu0 0
    %142 = vmatprep.subr.bf16.mxu0 0
    %143 = vmatpush1.bf16.msra.mxu0 0
    %144 = vmatprep.subr.bf16.mxu0 0
    %145 = vmatpush1.bf16.msra.mxu0 0
    %146 = vmatprep.subr.bf16.mxu0 0
    %147 = vmatpush1.bf16.msra.mxu0 0
    %148 = vmatprep.subr.bf16.mxu0 0
    %149 = vmatpush1.bf16.msra.mxu0 0
    %150 = vmatprep.subr.bf16.mxu0 0
    %151 = vmatpush1.bf16.msra.mxu0 0
    %152 = vmatprep.subr.bf16.mxu0 0
    %153 = vmatpush1.bf16.msra.mxu0 0
    %154 = vmatprep.subr.bf16.mxu0 0
    %155 = vmatpush1.bf16.msra.mxu0 0
    %156 = vmatprep.mubr.bf16.mxu0 0
    %157 = vmatmul.mubr.bf16.gmra.mrb[0].mxu0 %v113
    %v158 = vpop.f32.mrb[0].mxu0
    %v159 = vadd.f32 0.0, %v158
    %v160 = vpop.f32.mrb[0].mxu0
    %v161 = vpop.f32.mrb[0].mxu0
    %v162 = vadd.f32 0.0, %v161
    %v163 = vpop.f32.mrb[0].mxu0
    %164 = vmatprep.mubr.bf16.mxu0 0
    %165 = vmatmul.mubr.bf16.gmra.mrb[0].mxu0 %v116
    %v166 = vpop.f32.mrb[0].mxu0
    %v167 = vadd.f32 0.0, %v166
    %v168 = vpop.f32.mrb[0].mxu0
    %v169 = vpop.f32.mrb[0].mxu0
    %v170 = vadd.f32 0.0, %v169
    %v171 = vpop.f32.mrb[0].mxu0
    %172 = vmatprep.mubr.bf16.mxu0 0
    %173 = vmatmul.mubr.bf16.gmra.mrb[0].mxu0 %v119
    %v174 = vpop.f32.mrb[0].mxu0
    %v175 = vadd.f32 0.0, %v174
    %v176 = vpop.f32.mrb[0].mxu0
    %v177 = vpop.f32.mrb[0].mxu0
    %v178 = vadd.f32 0.0, %v177
    %v179 = vpop.f32.mrb[0].mxu0
    %180 = vmatprep.mubr.bf16.mxu0 0
    %181 = vmatmul.mubr.bf16.gmra.mrb[0].mxu0 %v122
    %v182 = vpop.f32.mrb[0].mxu0
    %v183 = vadd.f32 0.0, %v182
    %v184 = vpop.f32.mrb[0].mxu0
    %v185 = vpop.f32.mrb[0].mxu0
    %v186 = vadd.f32 0.0, %v185
    %v187 = vpop.f32.mrb[0].mxu0
    %188 = vdwg.mxu0
    %s189 = scalar_lea.vmem %s1, 32
    %v190 = vld [vmem:[%s189] sm:$0xf]
    %v191 = vld [vmem:[%s189 + $0x4] sm:$0xf]
    %v192 = vld [vmem:[%s189 + $0x8] sm:$0xf]
    %v193 = vld [vmem:[%s189 + $0xc] sm:$0xf]
    %v194 = vld [vmem:[%s189 + $0x10] sm:$0xf]
    %v195 = vld [vmem:[%s189 + $0x14] sm:$0xf]
    %v196 = vld [vmem:[%s189 + $0x18] sm:$0xf]
    %v197 = vld [vmem:[%s189 + $0x1c] sm:$0xf]
    %v206 = vunpack.c.l.b16 %v190
    %v207 = vunpack.c.l.b16 %v191
    %v208 = vunpack.c.l.b16 %v192
    %v209 = vunpack.c.l.b16 %v193
    %v210 = vunpack.c.l.b16 %v194
    %v211 = vunpack.c.l.b16 %v195
    %v212 = vunpack.c.l.b16 %v196
    %v213 = vunpack.c.l.b16 %v197
    %v214 = vpack.c.b16 %v207, %v206
    %v215 = vpack.c.b16 %v209, %v208
    %v216 = vpack.c.b16 %v211, %v210
    %v217 = vpack.c.b16 %v213, %v212
    %v219 = vsel %vm111, %v214, 0
    %v222 = vsel %vm111, %v215, 0
    %v225 = vsel %vm111, %v216, 0
    %v228 = vsel %vm111, %v217, 0
    %230 = vmatprep.subr.bf16.mxu0 0
    %231 = vmatpush1.bf16.msra.mxu0 %v79
    %232 = vmatprep.subr.bf16.mxu0 0
    %233 = vmatpush1.bf16.msra.mxu0 %v80
    %234 = vmatprep.subr.bf16.mxu0 0
    %235 = vmatpush1.bf16.msra.mxu0 %v81
    %236 = vmatprep.subr.bf16.mxu0 0
    %237 = vmatpush1.bf16.msra.mxu0 %v82
    %238 = vmatprep.subr.bf16.mxu0 0
    %239 = vmatpush1.bf16.msra.mxu0 0
    %240 = vmatprep.subr.bf16.mxu0 0
    %241 = vmatpush1.bf16.msra.mxu0 0
    %242 = vmatprep.subr.bf16.mxu0 0
    %243 = vmatpush1.bf16.msra.mxu0 0
    %244 = vmatprep.subr.bf16.mxu0 0
    %245 = vmatpush1.bf16.msra.mxu0 0
    %246 = vmatprep.subr.bf16.mxu0 0
    %247 = vmatpush1.bf16.msra.mxu0 0
    %248 = vmatprep.subr.bf16.mxu0 0
    %249 = vmatpush1.bf16.msra.mxu0 0
    %250 = vmatprep.subr.bf16.mxu0 0
    %251 = vmatpush1.bf16.msra.mxu0 0
    %252 = vmatprep.subr.bf16.mxu0 0
    %253 = vmatpush1.bf16.msra.mxu0 0
    %254 = vmatprep.subr.bf16.mxu0 0
    %255 = vmatpush1.bf16.msra.mxu0 0
    %256 = vmatprep.subr.bf16.mxu0 0
    %257 = vmatpush1.bf16.msra.mxu0 0
    %258 = vmatprep.subr.bf16.mxu0 0
    %259 = vmatpush1.bf16.msra.mxu0 0
    %260 = vmatprep.subr.bf16.mxu0 0
    %261 = vmatpush1.bf16.msra.mxu0 0
    %262 = vmatprep.mubr.bf16.mxu0 0
    %263 = vmatmul.mubr.bf16.gmra.mrb[0].mxu0 %v219
    %v264 = vpop.f32.mrb[0].mxu0
    %v265 = vadd.f32 0.0, %v264
    %v266 = vpop.f32.mrb[0].mxu0
    %v267 = vpop.f32.mrb[0].mxu0
    %v268 = vadd.f32 0.0, %v267
    %v269 = vpop.f32.mrb[0].mxu0
    %270 = vmatprep.mubr.bf16.mxu0 0
    %271 = vmatmul.mubr.bf16.gmra.mrb[0].mxu0 %v222
    %v272 = vpop.f32.mrb[0].mxu0
    %v273 = vadd.f32 0.0, %v272
    %v274 = vpop.f32.mrb[0].mxu0
    %v275 = vpop.f32.mrb[0].mxu0
    %v276 = vadd.f32 0.0, %v275
    %v277 = vpop.f32.mrb[0].mxu0
    %278 = vmatprep.mubr.bf16.mxu0 0
    %279 = vmatmul.mubr.bf16.gmra.mrb[0].mxu0 %v225
    %v280 = vpop.f32.mrb[0].mxu0
    %v281 = vadd.f32 0.0, %v280
    %v282 = vpop.f32.mrb[0].mxu0
    %v283 = vpop.f32.mrb[0].mxu0
    %v284 = vadd.f32 0.0, %v283
    %v285 = vpop.f32.mrb[0].mxu0
    %286 = vmatprep.mubr.bf16.mxu0 0
    %287 = vmatmul.mubr.bf16.gmra.mrb[0].mxu0 %v228
    %v288 = vpop.f32.mrb[0].mxu0
    %v289 = vadd.f32 0.0, %v288
    %v290 = vpop.f32.mrb[0].mxu0
    %v291 = vpop.f32.mrb[0].mxu0
    %v292 = vadd.f32 0.0, %v291
    %v293 = vpop.f32.mrb[0].mxu0
    %294 = vdwg.mxu0
    %s295 = scalar_lea.vmem %s1, 64
    %v296 = vld [vmem:[%s295] sm:$0xf]
    %v297 = vld [vmem:[%s295 + $0x4] sm:$0xf]
    %v298 = vld [vmem:[%s295 + $0x8] sm:$0xf]
    %v299 = vld [vmem:[%s295 + $0xc] sm:$0xf]
    %v300 = vld [vmem:[%s295 + $0x10] sm:$0xf]
    %v301 = vld [vmem:[%s295 + $0x14] sm:$0xf]
    %v302 = vld [vmem:[%s295 + $0x18] sm:$0xf]
    %v303 = vld [vmem:[%s295 + $0x1c] sm:$0xf]
    %v312 = vunpack.c.l.b16 %v296
    %v313 = vunpack.c.l.b16 %v297
    %v314 = vunpack.c.l.b16 %v298
    %v315 = vunpack.c.l.b16 %v299
    %v316 = vunpack.c.l.b16 %v300
    %v317 = vunpack.c.l.b16 %v301
    %v318 = vunpack.c.l.b16 %v302
    %v319 = vunpack.c.l.b16 %v303
    %v320 = vpack.c.b16 %v313, %v312
    %v321 = vpack.c.b16 %v315, %v314
    %v322 = vpack.c.b16 %v317, %v316
    %v323 = vpack.c.b16 %v319, %v318
    %v325 = vsel %vm111, %v320, 0
    %v328 = vsel %vm111, %v321, 0
    %v331 = vsel %vm111, %v322, 0
    %v334 = vsel %vm111, %v323, 0
    %336 = vmatprep.subr.bf16.mxu0 0
    %337 = vmatpush1.bf16.msra.mxu0 %v79
    %338 = vmatprep.subr.bf16.mxu0 0
    %339 = vmatpush1.bf16.msra.mxu0 %v80
    %340 = vmatprep.subr.bf16.mxu0 0
    %341 = vmatpush1.bf16.msra.mxu0 %v81
    %342 = vmatprep.subr.bf16.mxu0 0
    %343 = vmatpush1.bf16.msra.mxu0 %v82
    %344 = vmatprep.subr.bf16.mxu0 0
    %345 = vmatpush1.bf16.msra.mxu0 0
    %346 = vmatprep.subr.bf16.mxu0 0
    %347 = vmatpush1.bf16.msra.mxu0 0
    %348 = vmatprep.subr.bf16.mxu0 0
    %349 = vmatpush1.bf16.msra.mxu0 0
    %350 = vmatprep.subr.bf16.mxu0 0
    %351 = vmatpush1.bf16.msra.mxu0 0
    %352 = vmatprep.subr.bf16.mxu0 0
    %353 = vmatpush1.bf16.msra.mxu0 0
    %354 = vmatprep.subr.bf16.mxu0 0
    %355 = vmatpush1.bf16.msra.mxu0 0
    %356 = vmatprep.subr.bf16.mxu0 0
    %357 = vmatpush1.bf16.msra.mxu0 0
    %358 = vmatprep.subr.bf16.mxu0 0
    %359 = vmatpush1.bf16.msra.mxu0 0
    %360 = vmatprep.subr.bf16.mxu0 0
    %361 = vmatpush1.bf16.msra.mxu0 0
    %362 = vmatprep.subr.bf16.mxu0 0
    %363 = vmatpush1.bf16.msra.mxu0 0
    %364 = vmatprep.subr.bf16.mxu0 0
    %365 = vmatpush1.bf16.msra.mxu0 0
    %366 = vmatprep.subr.bf16.mxu0 0
    %367 = vmatpush1.bf16.msra.mxu0 0
    %368 = vmatprep.mubr.bf16.mxu0 0
    %369 = vmatmul.mubr.bf16.gmra.mrb[0].mxu0 %v325
    %v370 = vpop.f32.mrb[0].mxu0
    %v371 = vadd.f32 0.0, %v370
    %v372 = vpop.f32.mrb[0].mxu0
    %v373 = vpop.f32.mrb[0].mxu0
    %v374 = vadd.f32 0.0, %v373
    %v375 = vpop.f32.mrb[0].mxu0
    %376 = vmatprep.mubr.bf16.mxu0 0
    %377 = vmatmul.mubr.bf16.gmra.mrb[0].mxu0 %v328
    %v378 = vpop.f32.mrb[0].mxu0
    %v379 = vadd.f32 0.0, %v378
    %v380 = vpop.f32.mrb[0].mxu0
    %v381 = vpop.f32.mrb[0].mxu0
    %v382 = vadd.f32 0.0, %v381
    %v383 = vpop.f32.mrb[0].mxu0
    %384 = vmatprep.mubr.bf16.mxu0 0
    %385 = vmatmul.mubr.bf16.gmra.mrb[0].mxu0 %v331
    %v386 = vpop.f32.mrb[0].mxu0
    %v387 = vadd.f32 0.0, %v386
    %v388 = vpop.f32.mrb[0].mxu0
    %v389 = vpop.f32.mrb[0].mxu0
    %v390 = vadd.f32 0.0, %v389
    %v391 = vpop.f32.mrb[0].mxu0
    %392 = vmatprep.mubr.bf16.mxu0 0
    %393 = vmatmul.mubr.bf16.gmra.mrb[0].mxu0 %v334
    %v394 = vpop.f32.mrb[0].mxu0
    %v395 = vadd.f32 0.0, %v394
    %v396 = vpop.f32.mrb[0].mxu0
    %v397 = vpop.f32.mrb[0].mxu0
    %v398 = vadd.f32 0.0, %v397
    %v399 = vpop.f32.mrb[0].mxu0
    %400 = vdwg.mxu0
    %409 = vrot.lane.b32.xlu0 %v265, 32
    %v410 = vpop.permute.xlu0 %409
    %411 = vrot.lane.b32.xlu0 %v268, 32
    %v412 = vpop.permute.xlu0 %411
    %413 = vrot.lane.b32.xlu0 %v273, 32
    %v414 = vpop.permute.xlu0 %413
    %415 = vrot.lane.b32.xlu0 %v276, 32
    %v416 = vpop.permute.xlu0 %415
    %417 = vrot.lane.b32.xlu0 %v281, 32
    %v418 = vpop.permute.xlu0 %417
    %419 = vrot.lane.b32.xlu0 %v284, 32
    %v420 = vpop.permute.xlu0 %419
    %421 = vrot.lane.b32.xlu0 %v289, 32
    %v422 = vpop.permute.xlu0 %421
    %423 = vrot.lane.b32.xlu0 %v292, 32
    %v424 = vpop.permute.xlu0 %423
    %441 = vrot.lane.b32.xlu0 %v371, 64
    %v442 = vpop.permute.xlu0 %441
    %443 = vrot.lane.b32.xlu0 %v374, 64
    %v444 = vpop.permute.xlu0 %443
    %445 = vrot.lane.b32.xlu0 %v379, 64
    %v446 = vpop.permute.xlu0 %445
    %447 = vrot.lane.b32.xlu0 %v382, 64
    %v448 = vpop.permute.xlu0 %447
    %449 = vrot.lane.b32.xlu0 %v387, 64
    %v450 = vpop.permute.xlu0 %449
    %451 = vrot.lane.b32.xlu0 %v390, 64
    %v452 = vpop.permute.xlu0 %451
    %453 = vrot.lane.b32.xlu0 %v395, 64
    %v454 = vpop.permute.xlu0 %453
    %455 = vrot.lane.b32.xlu0 %v398, 64
    %v456 = vpop.permute.xlu0 %455
    %473 = vrot.lane.b32.xlu0 %v55, 96
    %v474 = vpop.permute.xlu0 %473
    %475 = vrot.lane.b32.xlu0 %v56, 96
    %v476 = vpop.permute.xlu0 %475
    %477 = vrot.lane.b32.xlu0 %v57, 96
    %v478 = vpop.permute.xlu0 %477
    %479 = vrot.lane.b32.xlu0 %v58, 96
    %v480 = vpop.permute.xlu0 %479
    %481 = vrot.lane.b32.xlu0 %v59, 96
    %v482 = vpop.permute.xlu0 %481
    %483 = vrot.lane.b32.xlu0 %v60, 96
    %v484 = vpop.permute.xlu0 %483
    %485 = vrot.lane.b32.xlu0 %v61, 96
    %v486 = vpop.permute.xlu0 %485
    %487 = vrot.lane.b32.xlu0 %v62, 96
    %v488 = vpop.permute.xlu0 %487
    %vm497 = vcmask 261120
    %v498 = vsel %vm497, %v159, %v410
    %v499 = vsel %vm497, %v162, %v412
    %v500 = vsel %vm497, %v167, %v414
    %v501 = vsel %vm497, %v170, %v416
    %v502 = vsel %vm497, %v175, %v418
    %v503 = vsel %vm497, %v178, %v420
    %v504 = vsel %vm497, %v183, %v422
    %v505 = vsel %vm497, %v186, %v424
    %v506 = vsel %vm111, %v498, %v442
    %v507 = vsel %vm111, %v499, %v444
    %v508 = vsel %vm111, %v500, %v446
    %v509 = vsel %vm111, %v501, %v448
    %v510 = vsel %vm111, %v502, %v450
    %v511 = vsel %vm111, %v503, %v452
    %v512 = vsel %vm111, %v504, %v454
    %v513 = vsel %vm111, %v505, %v456
    %vm514 = vcmask 785408
    %v515 = vsel %vm514, %v506, %v474
    %v516 = vsel %vm514, %v507, %v476
    %v517 = vsel %vm514, %v508, %v478
    %v518 = vsel %vm514, %v509, %v480
    %v519 = vsel %vm514, %v510, %v482
    %v520 = vsel %vm514, %v511, %v484
    %v521 = vsel %vm514, %v512, %v486
    %v522 = vsel %vm514, %v513, %v488
    %v523 = vpack.c.bf16 %v516, %v515
    %v524 = vpack.c.bf16 %v518, %v517
    %v525 = vpack.c.bf16 %v520, %v519
    %v526 = vpack.c.bf16 %v522, %v521
    %v543 = vunpack.c.l.b16 %v63
    %v544 = vunpack.c.l.b16 %v64
    %v545 = vunpack.c.l.b16 %v65
    %v546 = vunpack.c.l.b16 %v66
    %v547 = vunpack.c.l.b16 %v67
    %v548 = vunpack.c.l.b16 %v68
    %v549 = vunpack.c.l.b16 %v69
    %v550 = vunpack.c.l.b16 %v70
    %v551 = vunpack.c.l.b16 %v71
    %v552 = vunpack.c.l.b16 %v72
    %v553 = vunpack.c.l.b16 %v73
    %v554 = vunpack.c.l.b16 %v74
    %v555 = vunpack.c.l.b16 %v75
    %v556 = vunpack.c.l.b16 %v76
    %v557 = vunpack.c.l.b16 %v77
    %v558 = vunpack.c.l.b16 %v78
    %v559 = vpack.c.b16 %v544, %v543
    %v560 = vpack.c.b16 %v546, %v545
    %v561 = vpack.c.b16 %v548, %v547
    %v562 = vpack.c.b16 %v550, %v549
    %v563 = vpack.c.b16 %v552, %v551
    %v564 = vpack.c.b16 %v554, %v553
    %v565 = vpack.c.b16 %v556, %v555
    %v566 = vpack.c.b16 %v558, %v557
    %575 = vmatprep.subr.bf16.mxu0 0
    %576 = vmatpush1.bf16.msra.mxu0 %v559
    %577 = vmatprep.subr.bf16.mxu0 0
    %578 = vmatpush1.bf16.msra.mxu0 %v560
    %579 = vmatprep.subr.bf16.mxu0 0
    %580 = vmatpush1.bf16.msra.mxu0 %v561
    %581 = vmatprep.subr.bf16.mxu0 0
    %582 = vmatpush1.bf16.msra.mxu0 %v562
    %583 = vmatprep.subr.bf16.mxu0 0
    %584 = vmatpush1.bf16.msra.mxu0 %v563
    %585 = vmatprep.subr.bf16.mxu0 0
    %586 = vmatpush1.bf16.msra.mxu0 %v564
    %587 = vmatprep.subr.bf16.mxu0 0
    %588 = vmatpush1.bf16.msra.mxu0 %v565
    %589 = vmatprep.subr.bf16.mxu0 0
    %590 = vmatpush1.bf16.msra.mxu0 %v566
    %591 = vmatprep.subr.bf16.mxu0 0
    %592 = vmatpush1.bf16.msra.mxu0 0
    %593 = vmatprep.subr.bf16.mxu0 0
    %594 = vmatpush1.bf16.msra.mxu0 0
    %595 = vmatprep.subr.bf16.mxu0 0
    %596 = vmatpush1.bf16.msra.mxu0 0
    %597 = vmatprep.subr.bf16.mxu0 0
    %598 = vmatpush1.bf16.msra.mxu0 0
    %599 = vmatprep.subr.bf16.mxu0 0
    %600 = vmatpush1.bf16.msra.mxu0 0
    %601 = vmatprep.subr.bf16.mxu0 0
    %602 = vmatpush1.bf16.msra.mxu0 0
    %603 = vmatprep.subr.bf16.mxu0 0
    %604 = vmatpush1.bf16.msra.mxu0 0
    %605 = vmatprep.subr.bf16.mxu0 0
    %606 = vmatpush1.bf16.msra.mxu0 0
    %607 = vmatprep.mubr.bf16.mxu0 0
    %608 = vmatmul.mubr.bf16.gmra.mrb[0].mxu0 %v523
    %v609 = vpop.f32.mrb[0].mxu0
    %v610 = vadd.f32 0.0, %v609
    %v611 = vpop.f32.mrb[0].mxu0
    %v612 = vpop.f32.mrb[0].mxu0
    %v613 = vadd.f32 0.0, %v612
    %v614 = vpop.f32.mrb[0].mxu0
    %615 = vmatprep.mubr.bf16.mxu0 0
    %616 = vmatmul.mubr.bf16.gmra.mrb[0].mxu0 %v524
    %v617 = vpop.f32.mrb[0].mxu0
    %v618 = vadd.f32 0.0, %v617
    %v619 = vpop.f32.mrb[0].mxu0
    %v620 = vpop.f32.mrb[0].mxu0
    %v621 = vadd.f32 0.0, %v620
    %v622 = vpop.f32.mrb[0].mxu0
    %623 = vmatprep.mubr.bf16.mxu0 0
    %624 = vmatmul.mubr.bf16.gmra.mrb[0].mxu0 %v525
    %v625 = vpop.f32.mrb[0].mxu0
    %v626 = vadd.f32 0.0, %v625
    %v627 = vpop.f32.mrb[0].mxu0
    %v628 = vpop.f32.mrb[0].mxu0
    %v629 = vadd.f32 0.0, %v628
    %v630 = vpop.f32.mrb[0].mxu0
    %631 = vmatprep.mubr.bf16.mxu0 0
    %632 = vmatmul.mubr.bf16.gmra.mrb[0].mxu0 %v526
    %v633 = vpop.f32.mrb[0].mxu0
    %v634 = vadd.f32 0.0, %v633
    %v635 = vpop.f32.mrb[0].mxu0
    %v636 = vpop.f32.mrb[0].mxu0
    %v637 = vadd.f32 0.0, %v636
    %v638 = vpop.f32.mrb[0].mxu0
    %639 = vdwg.mxu0
    %v640 = vtanh.pop %v610
    %v641 = vtanh.pop %v613
    %v642 = vtanh.pop %v618
    %v643 = vtanh.pop %v621
    %v644 = vtanh.pop %v626
    %v645 = vtanh.pop %v629
    %v646 = vtanh.pop %v634
    %v647 = vtanh.pop %v637
    %s648 = scalar_lea.vmem %s3, 64
    %v649 = vld [vmem:[%s648] sm:$0xf]
    %v650 = vld [vmem:[%s648 + $0x4] sm:$0xf]
    %v651 = vld [vmem:[%s648 + $0x8] sm:$0xf]
    %v652 = vld [vmem:[%s648 + $0xc] sm:$0xf]
    %v653 = vld [vmem:[%s648 + $0x10] sm:$0xf]
    %v654 = vld [vmem:[%s648 + $0x14] sm:$0xf]
    %v655 = vld [vmem:[%s648 + $0x18] sm:$0xf]
    %v656 = vld [vmem:[%s648 + $0x1c] sm:$0xf]
    %v657 = vld [vmem:[%s648 + $0x20] sm:$0xf]
    %v658 = vld [vmem:[%s648 + $0x24] sm:$0xf]
    %v659 = vld [vmem:[%s648 + $0x28] sm:$0xf]
    %v660 = vld [vmem:[%s648 + $0x2c] sm:$0xf]
    %v661 = vld [vmem:[%s648 + $0x30] sm:$0xf]
    %v662 = vld [vmem:[%s648 + $0x34] sm:$0xf]
    %v663 = vld [vmem:[%s648 + $0x38] sm:$0xf]
    %v664 = vld [vmem:[%s648 + $0x3c] sm:$0xf]
    %v665 = vpack.c.bf16 %v641, %v640
    %v666 = vpack.c.bf16 %v643, %v642
    %v667 = vpack.c.bf16 %v645, %v644
    %v668 = vpack.c.bf16 %v647, %v646
    %669 = vmatprep.subr.bf16.mxu0 0
    %670 = vmatpush1.bf16.msra.mxu0 %v665
    %671 = vmatprep.subr.bf16.mxu0 0
    %672 = vmatpush1.bf16.msra.mxu0 %v666
    %673 = vmatprep.subr.bf16.mxu0 0
    %674 = vmatpush1.bf16.msra.mxu0 %v667
    %675 = vmatprep.subr.bf16.mxu0 0
    %676 = vmatpush1.bf16.msra.mxu0 %v668
    %677 = vmatprep.subr.bf16.mxu0 0
    %678 = vmatpush1.bf16.msra.mxu0 0
    %679 = vmatprep.subr.bf16.mxu0 0
    %680 = vmatpush1.bf16.msra.mxu0 0
    %681 = vmatprep.subr.bf16.mxu0 0
    %682 = vmatpush1.bf16.msra.mxu0 0
    %683 = vmatprep.subr.bf16.mxu0 0
    %684 = vmatpush1.bf16.msra.mxu0 0
    %685 = vmatprep.subr.bf16.mxu0 0
    %686 = vmatpush1.bf16.msra.mxu0 0
    %687 = vmatprep.subr.bf16.mxu0 0
    %688 = vmatpush1.bf16.msra.mxu0 0
    %689 = vmatprep.subr.bf16.mxu0 0
    %690 = vmatpush1.bf16.msra.mxu0 0
    %691 = vmatprep.subr.bf16.mxu0 0
    %692 = vmatpush1.bf16.msra.mxu0 0
    %693 = vmatprep.subr.bf16.mxu0 0
    %694 = vmatpush1.bf16.msra.mxu0 0
    %695 = vmatprep.subr.bf16.mxu0 0
    %696 = vmatpush1.bf16.msra.mxu0 0
    %697 = vmatprep.subr.bf16.mxu0 0
    %698 = vmatpush1.bf16.msra.mxu0 0
    %699 = vmatprep.subr.bf16.mxu0 0
    %700 = vmatpush1.bf16.msra.mxu0 0
    %701 = vmatprep.mubr.bf16.mxu0 0
    %702 = vmatmul.mubr.bf16.gmra.mrb[0].mxu0 %v113
    %v703 = vpop.f32.mrb[0].mxu0
    %v704 = vadd.f32 0.0, %v703
    %v705 = vpop.f32.mrb[0].mxu0
    %v706 = vpop.f32.mrb[0].mxu0
    %v707 = vadd.f32 0.0, %v706
    %v708 = vpop.f32.mrb[0].mxu0
    %709 = vmatprep.mubr.bf16.mxu0 0
    %710 = vmatmul.mubr.bf16.gmra.mrb[0].mxu0 %v116
    %v711 = vpop.f32.mrb[0].mxu0
    %v712 = vadd.f32 0.0, %v711
    %v713 = vpop.f32.mrb[0].mxu0
    %v714 = vpop.f32.mrb[0].mxu0
    %v715 = vadd.f32 0.0, %v714
    %v716 = vpop.f32.mrb[0].mxu0
    %717 = vmatprep.mubr.bf16.mxu0 0
    %718 = vmatmul.mubr.bf16.gmra.mrb[0].mxu0 %v119
    %v719 = vpop.f32.mrb[0].mxu0
    %v720 = vadd.f32 0.0, %v719
    %v721 = vpop.f32.mrb[0].mxu0
    %v722 = vpop.f32.mrb[0].mxu0
    %v723 = vadd.f32 0.0, %v722
    %v724 = vpop.f32.mrb[0].mxu0
    %725 = vmatprep.mubr.bf16.mxu0 0
    %726 = vmatmul.mubr.bf16.gmra.mrb[0].mxu0 %v122
    %v727 = vpop.f32.mrb[0].mxu0
    %v728 = vadd.f32 0.0, %v727
    %v729 = vpop.f32.mrb[0].mxu0
    %v730 = vpop.f32.mrb[0].mxu0
    %v731 = vadd.f32 0.0, %v730
    %v732 = vpop.f32.mrb[0].mxu0
    %733 = vdwg.mxu0
    %734 = vmatprep.subr.bf16.mxu0 0
    %735 = vmatpush1.bf16.msra.mxu0 %v665
    %736 = vmatprep.subr.bf16.mxu0 0
    %737 = vmatpush1.bf16.msra.mxu0 %v666
    %738 = vmatprep.subr.bf16.mxu0 0
    %739 = vmatpush1.bf16.msra.mxu0 %v667
    %740 = vmatprep.subr.bf16.mxu0 0
    %741 = vmatpush1.bf16.msra.mxu0 %v668
    %742 = vmatprep.subr.bf16.mxu0 0
    %743 = vmatpush1.bf16.msra.mxu0 0
    %744 = vmatprep.subr.bf16.mxu0 0
    %745 = vmatpush1.bf16.msra.mxu0 0
    %746 = vmatprep.subr.bf16.mxu0 0
    %747 = vmatpush1.bf16.msra.mxu0 0
    %748 = vmatprep.subr.bf16.mxu0 0
    %749 = vmatpush1.bf16.msra.mxu0 0
    %750 = vmatprep.subr.bf16.mxu0 0
    %751 = vmatpush1.bf16.msra.mxu0 0
    %752 = vmatprep.subr.bf16.mxu0 0
    %753 = vmatpush1.bf16.msra.mxu0 0
    %754 = vmatprep.subr.bf16.mxu0 0
    %755 = vmatpush1.bf16.msra.mxu0 0
    %756 = vmatprep.subr.bf16.mxu0 0
    %757 = vmatpush1.bf16.msra.mxu0 0
    %758 = vmatprep.subr.bf16.mxu0 0
    %759 = vmatpush1.bf16.msra.mxu0 0
    %760 = vmatprep.subr.bf16.mxu0 0
    %761 = vmatpush1.bf16.msra.mxu0 0
    %762 = vmatprep.subr.bf16.mxu0 0
    %763 = vmatpush1.bf16.msra.mxu0 0
    %764 = vmatprep.subr.bf16.mxu0 0
    %765 = vmatpush1.bf16.msra.mxu0 0
    %766 = vmatprep.mubr.bf16.mxu0 0
    %767 = vmatmul.mubr.bf16.gmra.mrb[0].mxu0 %v219
    %v768 = vpop.f32.mrb[0].mxu0
    %v769 = vadd.f32 0.0, %v768
    %v770 = vpop.f32.mrb[0].mxu0
    %v771 = vpop.f32.mrb[0].mxu0
    %v772 = vadd.f32 0.0, %v771
    %v773 = vpop.f32.mrb[0].mxu0
    %774 = vmatprep.mubr.bf16.mxu0 0
    %775 = vmatmul.mubr.bf16.gmra.mrb[0].mxu0 %v222
    %v776 = vpop.f32.mrb[0].mxu0
    %v777 = vadd.f32 0.0, %v776
    %v778 = vpop.f32.mrb[0].mxu0
    %v779 = vpop.f32.mrb[0].mxu0
    %v780 = vadd.f32 0.0, %v779
    %v781 = vpop.f32.mrb[0].mxu0
    %782 = vmatprep.mubr.bf16.mxu0 0
    %783 = vmatmul.mubr.bf16.gmra.mrb[0].mxu0 %v225
    %v784 = vpop.f32.mrb[0].mxu0
    %v785 = vadd.f32 0.0, %v784
    %v786 = vpop.f32.mrb[0].mxu0
    %v787 = vpop.f32.mrb[0].mxu0
    %v788 = vadd.f32 0.0, %v787
    %v789 = vpop.f32.mrb[0].mxu0
    %790 = vmatprep.mubr.bf16.mxu0 0
    %791 = vmatmul.mubr.bf16.gmra.mrb[0].mxu0 %v228
    %v792 = vpop.f32.mrb[0].mxu0
    %v793 = vadd.f32 0.0, %v792
    %v794 = vpop.f32.mrb[0].mxu0
    %v795 = vpop.f32.mrb[0].mxu0
    %v796 = vadd.f32 0.0, %v795
    %v797 = vpop.f32.mrb[0].mxu0
    %798 = vdwg.mxu0
    %799 = vmatprep.subr.bf16.mxu0 0
    %800 = vmatpush1.bf16.msra.mxu0 %v665
    %801 = vmatprep.subr.bf16.mxu0 0
    %802 = vmatpush1.bf16.msra.mxu0 %v666
    %803 = vmatprep.subr.bf16.mxu0 0
    %804 = vmatpush1.bf16.msra.mxu0 %v667
    %805 = vmatprep.subr.bf16.mxu0 0
    %806 = vmatpush1.bf16.msra.mxu0 %v668
    %807 = vmatprep.subr.bf16.mxu0 0
    %808 = vmatpush1.bf16.msra.mxu0 0
    %809 = vmatprep.subr.bf16.mxu0 0
    %810 = vmatpush1.bf16.msra.mxu0 0
    %811 = vmatprep.subr.bf16.mxu0 0
    %812 = vmatpush1.bf16.msra.mxu0 0
    %813 = vmatprep.subr.bf16.mxu0 0
    %814 = vmatpush1.bf16.msra.mxu0 0
    %815 = vmatprep.subr.bf16.mxu0 0
    %816 = vmatpush1.bf16.msra.mxu0 0
    %817 = vmatprep.subr.bf16.mxu0 0
    %818 = vmatpush1.bf16.msra.mxu0 0
    %819 = vmatprep.subr.bf16.mxu0 0
    %820 = vmatpush1.bf16.msra.mxu0 0
    %821 = vmatprep.subr.bf16.mxu0 0
    %822 = vmatpush1.bf16.msra.mxu0 0
    %823 = vmatprep.subr.bf16.mxu0 0
    %824 = vmatpush1.bf16.msra.mxu0 0
    %825 = vmatprep.subr.bf16.mxu0 0
    %826 = vmatpush1.bf16.msra.mxu0 0
    %827 = vmatprep.subr.bf16.mxu0 0
    %828 = vmatpush1.bf16.msra.mxu0 0
    %829 = vmatprep.subr.bf16.mxu0 0
    %830 = vmatpush1.bf16.msra.mxu0 0
    %831 = vmatprep.mubr.bf16.mxu0 0
    %832 = vmatmul.mubr.bf16.gmra.mrb[0].mxu0 %v325
    %v833 = vpop.f32.mrb[0].mxu0
    %v834 = vadd.f32 0.0, %v833
    %v835 = vpop.f32.mrb[0].mxu0
    %v836 = vpop.f32.mrb[0].mxu0
    %v837 = vadd.f32 0.0, %v836
    %v838 = vpop.f32.mrb[0].mxu0
    %839 = vmatprep.mubr.bf16.mxu0 0
    %840 = vmatmul.mubr.bf16.gmra.mrb[0].mxu0 %v328
    %v841 = vpop.f32.mrb[0].mxu0
    %v842 = vadd.f32 0.0, %v841
    %v843 = vpop.f32.mrb[0].mxu0
    %v844 = vpop.f32.mrb[0].mxu0
    %v845 = vadd.f32 0.0, %v844
    %v846 = vpop.f32.mrb[0].mxu0
    %847 = vmatprep.mubr.bf16.mxu0 0
    %848 = vmatmul.mubr.bf16.gmra.mrb[0].mxu0 %v331
    %v849 = vpop.f32.mrb[0].mxu0
    %v850 = vadd.f32 0.0, %v849
    %v851 = vpop.f32.mrb[0].mxu0
    %v852 = vpop.f32.mrb[0].mxu0
    %v853 = vadd.f32 0.0, %v852
    %v854 = vpop.f32.mrb[0].mxu0
    %855 = vmatprep.mubr.bf16.mxu0 0
    %856 = vmatmul.mubr.bf16.gmra.mrb[0].mxu0 %v334
    %v857 = vpop.f32.mrb[0].mxu0
    %v858 = vadd.f32 0.0, %v857
    %v859 = vpop.f32.mrb[0].mxu0
    %v860 = vpop.f32.mrb[0].mxu0
    %v861 = vadd.f32 0.0, %v860
    %v862 = vpop.f32.mrb[0].mxu0
    %863 = vdwg.mxu0
    %872 = vrot.lane.b32.xlu0 %v769, 32
    %v873 = vpop.permute.xlu0 %872
    %874 = vrot.lane.b32.xlu0 %v772, 32
    %v875 = vpop.permute.xlu0 %874
    %876 = vrot.lane.b32.xlu0 %v777, 32
    %v877 = vpop.permute.xlu0 %876
    %878 = vrot.lane.b32.xlu0 %v780, 32
    %v879 = vpop.permute.xlu0 %878
    %880 = vrot.lane.b32.xlu0 %v785, 32
    %v881 = vpop.permute.xlu0 %880
    %882 = vrot.lane.b32.xlu0 %v788, 32
    %v883 = vpop.permute.xlu0 %882
    %884 = vrot.lane.b32.xlu0 %v793, 32
    %v885 = vpop.permute.xlu0 %884
    %886 = vrot.lane.b32.xlu0 %v796, 32
    %v887 = vpop.permute.xlu0 %886
    %904 = vrot.lane.b32.xlu0 %v834, 64
    %v905 = vpop.permute.xlu0 %904
    %906 = vrot.lane.b32.xlu0 %v837, 64
    %v907 = vpop.permute.xlu0 %906
    %908 = vrot.lane.b32.xlu0 %v842, 64
    %v909 = vpop.permute.xlu0 %908
    %910 = vrot.lane.b32.xlu0 %v845, 64
    %v911 = vpop.permute.xlu0 %910
    %912 = vrot.lane.b32.xlu0 %v850, 64
    %v913 = vpop.permute.xlu0 %912
    %914 = vrot.lane.b32.xlu0 %v853, 64
    %v915 = vpop.permute.xlu0 %914
    %916 = vrot.lane.b32.xlu0 %v858, 64
    %v917 = vpop.permute.xlu0 %916
    %918 = vrot.lane.b32.xlu0 %v861, 64
    %v919 = vpop.permute.xlu0 %918
    %936 = vrot.lane.b32.xlu0 %v640, 96
    %v937 = vpop.permute.xlu0 %936
    %938 = vrot.lane.b32.xlu0 %v641, 96
    %v939 = vpop.permute.xlu0 %938
    %940 = vrot.lane.b32.xlu0 %v642, 96
    %v941 = vpop.permute.xlu0 %940
    %942 = vrot.lane.b32.xlu0 %v643, 96
    %v943 = vpop.permute.xlu0 %942
    %944 = vrot.lane.b32.xlu0 %v644, 96
    %v945 = vpop.permute.xlu0 %944
    %946 = vrot.lane.b32.xlu0 %v645, 96
    %v947 = vpop.permute.xlu0 %946
    %948 = vrot.lane.b32.xlu0 %v646, 96
    %v949 = vpop.permute.xlu0 %948
    %950 = vrot.lane.b32.xlu0 %v647, 96
    %v951 = vpop.permute.xlu0 %950
    %v960 = vsel %vm497, %v704, %v873
    %v961 = vsel %vm497, %v707, %v875
    %v962 = vsel %vm497, %v712, %v877
    %v963 = vsel %vm497, %v715, %v879
    %v964 = vsel %vm497, %v720, %v881
    %v965 = vsel %vm497, %v723, %v883
    %v966 = vsel %vm497, %v728, %v885
    %v967 = vsel %vm497, %v731, %v887
    %v968 = vsel %vm111, %v960, %v905
    %v969 = vsel %vm111, %v961, %v907
    %v970 = vsel %vm111, %v962, %v909
    %v971 = vsel %vm111, %v963, %v911
    %v972 = vsel %vm111, %v964, %v913
    %v973 = vsel %vm111, %v965, %v915
    %v974 = vsel %vm111, %v966, %v917
    %v975 = vsel %vm111, %v967, %v919
    %v976 = vsel %vm514, %v968, %v937
    %v977 = vsel %vm514, %v969, %v939
    %v978 = vsel %vm514, %v970, %v941
    %v979 = vsel %vm514, %v971, %v943
    %v980 = vsel %vm514, %v972, %v945
    %v981 = vsel %vm514, %v973, %v947
    %v982 = vsel %vm514, %v974, %v949
    %v983 = vsel %vm514, %v975, %v951
    %v984 = vpack.c.bf16 %v977, %v976
    %v985 = vpack.c.bf16 %v979, %v978
    %v986 = vpack.c.bf16 %v981, %v980
    %v987 = vpack.c.bf16 %v983, %v982
    %v1004 = vunpack.c.l.b16 %v649
    %v1005 = vunpack.c.l.b16 %v650
    %v1006 = vunpack.c.l.b16 %v651
    %v1007 = vunpack.c.l.b16 %v652
    %v1008 = vunpack.c.l.b16 %v653
    %v1009 = vunpack.c.l.b16 %v654
    %v1010 = vunpack.c.l.b16 %v655
    %v1011 = vunpack.c.l.b16 %v656
    %v1012 = vunpack.c.l.b16 %v657
    %v1013 = vunpack.c.l.b16 %v658
    %v1014 = vunpack.c.l.b16 %v659
    %v1015 = vunpack.c.l.b16 %v660
    %v1016 = vunpack.c.l.b16 %v661
    %v1017 = vunpack.c.l.b16 %v662
    %v1018 = vunpack.c.l.b16 %v663
    %v1019 = vunpack.c.l.b16 %v664
    %v1020 = vpack.c.b16 %v1005, %v1004
    %v1021 = vpack.c.b16 %v1007, %v1006
    %v1022 = vpack.c.b16 %v1009, %v1008
    %v1023 = vpack.c.b16 %v1011, %v1010
    %v1024 = vpack.c.b16 %v1013, %v1012
    %v1025 = vpack.c.b16 %v1015, %v1014
    %v1026 = vpack.c.b16 %v1017, %v1016
    %v1027 = vpack.c.b16 %v1019, %v1018
    %1036 = vmatprep.subr.bf16.mxu0 0
    %1037 = vmatpush1.bf16.msra.mxu0 %v1020
    %1038 = vmatprep.subr.bf16.mxu0 0
    %1039 = vmatpush1.bf16.msra.mxu0 %v1021
    %1040 = vmatprep.subr.bf16.mxu0 0
    %1041 = vmatpush1.bf16.msra.mxu0 %v1022
    %1042 = vmatprep.subr.bf16.mxu0 0
    %1043 = vmatpush1.bf16.msra.mxu0 %v1023
    %1044 = vmatprep.subr.bf16.mxu0 0
    %1045 = vmatpush1.bf16.msra.mxu0 %v1024
    %1046 = vmatprep.subr.bf16.mxu0 0
    %1047 = vmatpush1.bf16.msra.mxu0 %v1025
    %1048 = vmatprep.subr.bf16.mxu0 0
    %1049 = vmatpush1.bf16.msra.mxu0 %v1026
    %1050 = vmatprep.subr.bf16.mxu0 0
    %1051 = vmatpush1.bf16.msra.mxu0 %v1027
    %1052 = vmatprep.subr.bf16.mxu0 0
    %1053 = vmatpush1.bf16.msra.mxu0 0
    %1054 = vmatprep.subr.bf16.mxu0 0
    %1055 = vmatpush1.bf16.msra.mxu0 0
    %1056 = vmatprep.subr.bf16.mxu0 0
    %1057 = vmatpush1.bf16.msra.mxu0 0
    %1058 = vmatprep.subr.bf16.mxu0 0
    %1059 = vmatpush1.bf16.msra.mxu0 0
    %1060 = vmatprep.subr.bf16.mxu0 0
    %1061 = vmatpush1.bf16.msra.mxu0 0
    %1062 = vmatprep.subr.bf16.mxu0 0
    %1063 = vmatpush1.bf16.msra.mxu0 0
    %1064 = vmatprep.subr.bf16.mxu0 0
    %1065 = vmatpush1.bf16.msra.mxu0 0
    %1066 = vmatprep.subr.bf16.mxu0 0
    %1067 = vmatpush1.bf16.msra.mxu0 0
    %1068 = vmatprep.mubr.bf16.mxu0 0
    %1069 = vmatmul.mubr.bf16.gmra.mrb[0].mxu0 %v984
    %v1070 = vpop.f32.mrb[0].mxu0
    %v1071 = vadd.f32 0.0, %v1070
    %v1072 = vpop.f32.mrb[0].mxu0
    %v1073 = vpop.f32.mrb[0].mxu0
    %v1074 = vadd.f32 0.0, %v1073
    %v1075 = vpop.f32.mrb[0].mxu0
    %1076 = vmatprep.mubr.bf16.mxu0 0
    %1077 = vmatmul.mubr.bf16.gmra.mrb[0].mxu0 %v985
    %v1078 = vpop.f32.mrb[0].mxu0
    %v1079 = vadd.f32 0.0, %v1078
    %v1080 = vpop.f32.mrb[0].mxu0
    %v1081 = vpop.f32.mrb[0].mxu0
    %v1082 = vadd.f32 0.0, %v1081
    %v1083 = vpop.f32.mrb[0].mxu0
    %1084 = vmatprep.mubr.bf16.mxu0 0
    %1085 = vmatmul.mubr.bf16.gmra.mrb[0].mxu0 %v986
    %v1086 = vpop.f32.mrb[0].mxu0
    %v1087 = vadd.f32 0.0, %v1086
    %v1088 = vpop.f32.mrb[0].mxu0
    %v1089 = vpop.f32.mrb[0].mxu0
    %v1090 = vadd.f32 0.0, %v1089
    %v1091 = vpop.f32.mrb[0].mxu0
    %1092 = vmatprep.mubr.bf16.mxu0 0
    %1093 = vmatmul.mubr.bf16.gmra.mrb[0].mxu0 %v987
    %v1094 = vpop.f32.mrb[0].mxu0
    %v1095 = vadd.f32 0.0, %v1094
    %v1096 = vpop.f32.mrb[0].mxu0
    %v1097 = vpop.f32.mrb[0].mxu0
    %v1098 = vadd.f32 0.0, %v1097
    %v1099 = vpop.f32.mrb[0].mxu0
    %1100 = vdwg.mxu0
    %v1101 = vtanh.pop %v1071
    %v1102 = vtanh.pop %v1074
    %v1103 = vtanh.pop %v1079
    %v1104 = vtanh.pop %v1082
    %v1105 = vtanh.pop %v1087
    %v1106 = vtanh.pop %v1090
    %v1107 = vtanh.pop %v1095
    %v1108 = vtanh.pop %v1098
    %v1109 = vld [vmem:[%s4] sm:$0xf]
    %v1110 = vld [vmem:[%s4 + $0x4] sm:$0xf]
    %v1111 = vld [vmem:[%s4 + $0x8] sm:$0xf]
    %v1112 = vld [vmem:[%s4 + $0xc] sm:$0xf]
    %v1113 = vld [vmem:[%s4 + $0x10] sm:$0xf]
    %v1114 = vld [vmem:[%s4 + $0x14] sm:$0xf]
    %v1115 = vld [vmem:[%s4 + $0x18] sm:$0xf]
    %v1116 = vld [vmem:[%s4 + $0x1c] sm:$0xf]
    %v1117 = vld [vmem:[%s4 + $0x20] sm:$0xf]
    %v1118 = vld [vmem:[%s4 + $0x24] sm:$0xf]
    %v1119 = vld [vmem:[%s4 + $0x28] sm:$0xf]
    %v1120 = vld [vmem:[%s4 + $0x2c] sm:$0xf]
    %v1121 = vld [vmem:[%s4 + $0x30] sm:$0xf]
    %v1122 = vld [vmem:[%s4 + $0x34] sm:$0xf]
    %v1123 = vld [vmem:[%s4 + $0x38] sm:$0xf]
    %v1124 = vld [vmem:[%s4 + $0x3c] sm:$0xf]
    %v1125 = vpack.c.bf16 %v1102, %v1101
    %v1126 = vpack.c.bf16 %v1104, %v1103
    %v1127 = vpack.c.bf16 %v1106, %v1105
    %v1128 = vpack.c.bf16 %v1108, %v1107
    %v1129 = vld [vmem:[%s2] sm:$0xf]
    %v1130 = vld [vmem:[%s2 + $0x4] sm:$0xf]
    %v1131 = vld [vmem:[%s2 + $0x8] sm:$0xf]
    %v1132 = vld [vmem:[%s2 + $0xc] sm:$0xf]
    %v1133 = vld [vmem:[%s2 + $0x10] sm:$0xf]
    %v1134 = vld [vmem:[%s2 + $0x14] sm:$0xf]
    %v1135 = vld [vmem:[%s2 + $0x18] sm:$0xf]
    %v1136 = vld [vmem:[%s2 + $0x1c] sm:$0xf]
    %v1145 = vunpack.c.l.b16 %v1129
    %v1146 = vunpack.c.l.b16 %v1130
    %v1147 = vunpack.c.l.b16 %v1131
    %v1148 = vunpack.c.l.b16 %v1132
    %v1149 = vunpack.c.l.b16 %v1133
    %v1150 = vunpack.c.l.b16 %v1134
    %v1151 = vunpack.c.l.b16 %v1135
    %v1152 = vunpack.c.l.b16 %v1136
    %v1153 = vpack.c.b16 %v1146, %v1145
    %v1154 = vpack.c.b16 %v1148, %v1147
    %v1155 = vpack.c.b16 %v1150, %v1149
    %v1156 = vpack.c.b16 %v1152, %v1151
    %v1158 = vsel %vm111, %v1153, 0
    %v1161 = vsel %vm111, %v1154, 0
    %v1164 = vsel %vm111, %v1155, 0
    %v1167 = vsel %vm111, %v1156, 0
    %1169 = vmatprep.subr.bf16.mxu0 0
    %1170 = vmatpush1.bf16.msra.mxu0 %v1125
    %1171 = vmatprep.subr.bf16.mxu0 0
    %1172 = vmatpush1.bf16.msra.mxu0 %v1126
    %1173 = vmatprep.subr.bf16.mxu0 0
    %1174 = vmatpush1.bf16.msra.mxu0 %v1127
    %1175 = vmatprep.subr.bf16.mxu0 0
    %1176 = vmatpush1.bf16.msra.mxu0 %v1128
    %1177 = vmatprep.subr.bf16.mxu0 0
    %1178 = vmatpush1.bf16.msra.mxu0 0
    %1179 = vmatprep.subr.bf16.mxu0 0
    %1180 = vmatpush1.bf16.msra.mxu0 0
    %1181 = vmatprep.subr.bf16.mxu0 0
    %1182 = vmatpush1.bf16.msra.mxu0 0
    %1183 = vmatprep.subr.bf16.mxu0 0
    %1184 = vmatpush1.bf16.msra.mxu0 0
    %1185 = vmatprep.subr.bf16.mxu0 0
    %1186 = vmatpush1.bf16.msra.mxu0 0
    %1187 = vmatprep.subr.bf16.mxu0 0
    %1188 = vmatpush1.bf16.msra.mxu0 0
    %1189 = vmatprep.subr.bf16.mxu0 0
    %1190 = vmatpush1.bf16.msra.mxu0 0
    %1191 = vmatprep.subr.bf16.mxu0 0
    %1192 = vmatpush1.bf16.msra.mxu0 0
    %1193 = vmatprep.subr.bf16.mxu0 0
    %1194 = vmatpush1.bf16.msra.mxu0 0
    %1195 = vmatprep.subr.bf16.mxu0 0
    %1196 = vmatpush1.bf16.msra.mxu0 0
    %1197 = vmatprep.subr.bf16.mxu0 0
    %1198 = vmatpush1.bf16.msra.mxu0 0
    %1199 = vmatprep.subr.bf16.mxu0 0
    %1200 = vmatpush1.bf16.msra.mxu0 0
    %1201 = vmatprep.mubr.bf16.mxu0 0
    %1202 = vmatmul.mubr.bf16.gmra.mrb[0].mxu0 %v1158
    %v1203 = vpop.f32.mrb[0].mxu0
    %v1204 = vadd.f32 0.0, %v1203
    %v1205 = vpop.f32.mrb[0].mxu0
    %v1206 = vpop.f32.mrb[0].mxu0
    %v1207 = vadd.f32 0.0, %v1206
    %v1208 = vpop.f32.mrb[0].mxu0
    %1209 = vmatprep.mubr.bf16.mxu0 0
    %1210 = vmatmul.mubr.bf16.gmra.mrb[0].mxu0 %v1161
    %v1211 = vpop.f32.mrb[0].mxu0
    %v1212 = vadd.f32 0.0, %v1211
    %v1213 = vpop.f32.mrb[0].mxu0
    %v1214 = vpop.f32.mrb[0].mxu0
    %v1215 = vadd.f32 0.0, %v1214
    %v1216 = vpop.f32.mrb[0].mxu0
    %1217 = vmatprep.mubr.bf16.mxu0 0
    %1218 = vmatmul.mubr.bf16.gmra.mrb[0].mxu0 %v1164
    %v1219 = vpop.f32.mrb[0].mxu0
    %v1220 = vadd.f32 0.0, %v1219
    %v1221 = vpop.f32.mrb[0].mxu0
    %v1222 = vpop.f32.mrb[0].mxu0
    %v1223 = vadd.f32 0.0, %v1222
    %v1224 = vpop.f32.mrb[0].mxu0
    %1225 = vmatprep.mubr.bf16.mxu0 0
    %1226 = vmatmul.mubr.bf16.gmra.mrb[0].mxu0 %v1167
    %v1227 = vpop.f32.mrb[0].mxu0
    %v1228 = vadd.f32 0.0, %v1227
    %v1229 = vpop.f32.mrb[0].mxu0
    %v1230 = vpop.f32.mrb[0].mxu0
    %v1231 = vadd.f32 0.0, %v1230
    %v1232 = vpop.f32.mrb[0].mxu0
    %1233 = vdwg.mxu0
    %s1234 = scalar_lea.vmem %s2, 32
    %v1235 = vld [vmem:[%s1234] sm:$0xf]
    %v1236 = vld [vmem:[%s1234 + $0x4] sm:$0xf]
    %v1237 = vld [vmem:[%s1234 + $0x8] sm:$0xf]
    %v1238 = vld [vmem:[%s1234 + $0xc] sm:$0xf]
    %v1239 = vld [vmem:[%s1234 + $0x10] sm:$0xf]
    %v1240 = vld [vmem:[%s1234 + $0x14] sm:$0xf]
    %v1241 = vld [vmem:[%s1234 + $0x18] sm:$0xf]
    %v1242 = vld [vmem:[%s1234 + $0x1c] sm:$0xf]
    %v1251 = vunpack.c.l.b16 %v1235
    %v1252 = vunpack.c.l.b16 %v1236
    %v1253 = vunpack.c.l.b16 %v1237
    %v1254 = vunpack.c.l.b16 %v1238
    %v1255 = vunpack.c.l.b16 %v1239
    %v1256 = vunpack.c.l.b16 %v1240
    %v1257 = vunpack.c.l.b16 %v1241
    %v1258 = vunpack.c.l.b16 %v1242
    %v1259 = vpack.c.b16 %v1252, %v1251
    %v1260 = vpack.c.b16 %v1254, %v1253
    %v1261 = vpack.c.b16 %v1256, %v1255
    %v1262 = vpack.c.b16 %v1258, %v1257
    %v1264 = vsel %vm111, %v1259, 0
    %v1267 = vsel %vm111, %v1260, 0
    %v1270 = vsel %vm111, %v1261, 0
    %v1273 = vsel %vm111, %v1262, 0
    %1275 = vmatprep.subr.bf16.mxu0 0
    %1276 = vmatpush1.bf16.msra.mxu0 %v1125
    %1277 = vmatprep.subr.bf16.mxu0 0
    %1278 = vmatpush1.bf16.msra.mxu0 %v1126
    %1279 = vmatprep.subr.bf16.mxu0 0
    %1280 = vmatpush1.bf16.msra.mxu0 %v1127
    %1281 = vmatprep.subr.bf16.mxu0 0
    %1282 = vmatpush1.bf16.msra.mxu0 %v1128
    %1283 = vmatprep.subr.bf16.mxu0 0
    %1284 = vmatpush1.bf16.msra.mxu0 0
    %1285 = vmatprep.subr.bf16.mxu0 0
    %1286 = vmatpush1.bf16.msra.mxu0 0
    %1287 = vmatprep.subr.bf16.mxu0 0
    %1288 = vmatpush1.bf16.msra.mxu0 0
    %1289 = vmatprep.subr.bf16.mxu0 0
    %1290 = vmatpush1.bf16.msra.mxu0 0
    %1291 = vmatprep.subr.bf16.mxu0 0
    %1292 = vmatpush1.bf16.msra.mxu0 0
    %1293 = vmatprep.subr.bf16.mxu0 0
    %1294 = vmatpush1.bf16.msra.mxu0 0
    %1295 = vmatprep.subr.bf16.mxu0 0
    %1296 = vmatpush1.bf16.msra.mxu0 0
    %1297 = vmatprep.subr.bf16.mxu0 0
    %1298 = vmatpush1.bf16.msra.mxu0 0
    %1299 = vmatprep.subr.bf16.mxu0 0
    %1300 = vmatpush1.bf16.msra.mxu0 0
    %1301 = vmatprep.subr.bf16.mxu0 0
    %1302 = vmatpush1.bf16.msra.mxu0 0
    %1303 = vmatprep.subr.bf16.mxu0 0
    %1304 = vmatpush1.bf16.msra.mxu0 0
    %1305 = vmatprep.subr.bf16.mxu0 0
    %1306 = vmatpush1.bf16.msra.mxu0 0
    %1307 = vmatprep.mubr.bf16.mxu0 0
    %1308 = vmatmul.mubr.bf16.gmra.mrb[0].mxu0 %v1264
    %v1309 = vpop.f32.mrb[0].mxu0
    %v1310 = vadd.f32 0.0, %v1309
    %v1311 = vpop.f32.mrb[0].mxu0
    %v1312 = vpop.f32.mrb[0].mxu0
    %v1313 = vadd.f32 0.0, %v1312
    %v1314 = vpop.f32.mrb[0].mxu0
    %1315 = vmatprep.mubr.bf16.mxu0 0
    %1316 = vmatmul.mubr.bf16.gmra.mrb[0].mxu0 %v1267
    %v1317 = vpop.f32.mrb[0].mxu0
    %v1318 = vadd.f32 0.0, %v1317
    %v1319 = vpop.f32.mrb[0].mxu0
    %v1320 = vpop.f32.mrb[0].mxu0
    %v1321 = vadd.f32 0.0, %v1320
    %v1322 = vpop.f32.mrb[0].mxu0
    %1323 = vmatprep.mubr.bf16.mxu0 0
    %1324 = vmatmul.mubr.bf16.gmra.mrb[0].mxu0 %v1270
    %v1325 = vpop.f32.mrb[0].mxu0
    %v1326 = vadd.f32 0.0, %v1325
    %v1327 = vpop.f32.mrb[0].mxu0
    %v1328 = vpop.f32.mrb[0].mxu0
    %v1329 = vadd.f32 0.0, %v1328
    %v1330 = vpop.f32.mrb[0].mxu0
    %1331 = vmatprep.mubr.bf16.mxu0 0
    %1332 = vmatmul.mubr.bf16.gmra.mrb[0].mxu0 %v1273
    %v1333 = vpop.f32.mrb[0].mxu0
    %v1334 = vadd.f32 0.0, %v1333
    %v1335 = vpop.f32.mrb[0].mxu0
    %v1336 = vpop.f32.mrb[0].mxu0
    %v1337 = vadd.f32 0.0, %v1336
    %v1338 = vpop.f32.mrb[0].mxu0
    %1339 = vdwg.mxu0
    %s1340 = scalar_lea.vmem %s2, 64
    %v1341 = vld [vmem:[%s1340] sm:$0xf]
    %v1342 = vld [vmem:[%s1340 + $0x4] sm:$0xf]
    %v1343 = vld [vmem:[%s1340 + $0x8] sm:$0xf]
    %v1344 = vld [vmem:[%s1340 + $0xc] sm:$0xf]
    %v1345 = vld [vmem:[%s1340 + $0x10] sm:$0xf]
    %v1346 = vld [vmem:[%s1340 + $0x14] sm:$0xf]
    %v1347 = vld [vmem:[%s1340 + $0x18] sm:$0xf]
    %v1348 = vld [vmem:[%s1340 + $0x1c] sm:$0xf]
    %v1357 = vunpack.c.l.b16 %v1341
    %v1358 = vunpack.c.l.b16 %v1342
    %v1359 = vunpack.c.l.b16 %v1343
    %v1360 = vunpack.c.l.b16 %v1344
    %v1361 = vunpack.c.l.b16 %v1345
    %v1362 = vunpack.c.l.b16 %v1346
    %v1363 = vunpack.c.l.b16 %v1347
    %v1364 = vunpack.c.l.b16 %v1348
    %v1365 = vpack.c.b16 %v1358, %v1357
    %v1366 = vpack.c.b16 %v1360, %v1359
    %v1367 = vpack.c.b16 %v1362, %v1361
    %v1368 = vpack.c.b16 %v1364, %v1363
    %v1370 = vsel %vm111, %v1365, 0
    %v1373 = vsel %vm111, %v1366, 0
    %v1376 = vsel %vm111, %v1367, 0
    %v1379 = vsel %vm111, %v1368, 0
    %1381 = vmatprep.subr.bf16.mxu0 0
    %1382 = vmatpush1.bf16.msra.mxu0 %v1125
    %1383 = vmatprep.subr.bf16.mxu0 0
    %1384 = vmatpush1.bf16.msra.mxu0 %v1126
    %1385 = vmatprep.subr.bf16.mxu0 0
    %1386 = vmatpush1.bf16.msra.mxu0 %v1127
    %1387 = vmatprep.subr.bf16.mxu0 0
    %1388 = vmatpush1.bf16.msra.mxu0 %v1128
    %1389 = vmatprep.subr.bf16.mxu0 0
    %1390 = vmatpush1.bf16.msra.mxu0 0
    %1391 = vmatprep.subr.bf16.mxu0 0
    %1392 = vmatpush1.bf16.msra.mxu0 0
    %1393 = vmatprep.subr.bf16.mxu0 0
    %1394 = vmatpush1.bf16.msra.mxu0 0
    %1395 = vmatprep.subr.bf16.mxu0 0
    %1396 = vmatpush1.bf16.msra.mxu0 0
    %1397 = vmatprep.subr.bf16.mxu0 0
    %1398 = vmatpush1.bf16.msra.mxu0 0
    %1399 = vmatprep.subr.bf16.mxu0 0
    %1400 = vmatpush1.bf16.msra.mxu0 0
    %1401 = vmatprep.subr.bf16.mxu0 0
    %1402 = vmatpush1.bf16.msra.mxu0 0
    %1403 = vmatprep.subr.bf16.mxu0 0
    %1404 = vmatpush1.bf16.msra.mxu0 0
    %1405 = vmatprep.subr.bf16.mxu0 0
    %1406 = vmatpush1.bf16.msra.mxu0 0
    %1407 = vmatprep.subr.bf16.mxu0 0
    %1408 = vmatpush1.bf16.msra.mxu0 0
    %1409 = vmatprep.subr.bf16.mxu0 0
    %1410 = vmatpush1.bf16.msra.mxu0 0
    %1411 = vmatprep.subr.bf16.mxu0 0
    %1412 = vmatpush1.bf16.msra.mxu0 0
    %1413 = vmatprep.mubr.bf16.mxu0 0
    %1414 = vmatmul.mubr.bf16.gmra.mrb[0].mxu0 %v1370
    %v1415 = vpop.f32.mrb[0].mxu0
    %v1416 = vadd.f32 0.0, %v1415
    %v1417 = vpop.f32.mrb[0].mxu0
    %v1418 = vpop.f32.mrb[0].mxu0
    %v1419 = vadd.f32 0.0, %v1418
    %v1420 = vpop.f32.mrb[0].mxu0
    %1421 = vmatprep.mubr.bf16.mxu0 0
    %1422 = vmatmul.mubr.bf16.gmra.mrb[0].mxu0 %v1373
    %v1423 = vpop.f32.mrb[0].mxu0
    %v1424 = vadd.f32 0.0, %v1423
    %v1425 = vpop.f32.mrb[0].mxu0
    %v1426 = vpop.f32.mrb[0].mxu0
    %v1427 = vadd.f32 0.0, %v1426
    %v1428 = vpop.f32.mrb[0].mxu0
    %1429 = vmatprep.mubr.bf16.mxu0 0
    %1430 = vmatmul.mubr.bf16.gmra.mrb[0].mxu0 %v1376
    %v1431 = vpop.f32.mrb[0].mxu0
    %v1432 = vadd.f32 0.0, %v1431
    %v1433 = vpop.f32.mrb[0].mxu0
    %v1434 = vpop.f32.mrb[0].mxu0
    %v1435 = vadd.f32 0.0, %v1434
    %v1436 = vpop.f32.mrb[0].mxu0
    %1437 = vmatprep.mubr.bf16.mxu0 0
    %1438 = vmatmul.mubr.bf16.gmra.mrb[0].mxu0 %v1379
    %v1439 = vpop.f32.mrb[0].mxu0
    %v1440 = vadd.f32 0.0, %v1439
    %v1441 = vpop.f32.mrb[0].mxu0
    %v1442 = vpop.f32.mrb[0].mxu0
    %v1443 = vadd.f32 0.0, %v1442
    %v1444 = vpop.f32.mrb[0].mxu0
    %1445 = vdwg.mxu0
    %1454 = vrot.lane.b32.xlu0 %v1310, 32
    %v1455 = vpop.permute.xlu0 %1454
    %1456 = vrot.lane.b32.xlu0 %v1313, 32
    %v1457 = vpop.permute.xlu0 %1456
    %1458 = vrot.lane.b32.xlu0 %v1318, 32
    %v1459 = vpop.permute.xlu0 %1458
    %1460 = vrot.lane.b32.xlu0 %v1321, 32
    %v1461 = vpop.permute.xlu0 %1460
    %1462 = vrot.lane.b32.xlu0 %v1326, 32
    %v1463 = vpop.permute.xlu0 %1462
    %1464 = vrot.lane.b32.xlu0 %v1329, 32
    %v1465 = vpop.permute.xlu0 %1464
    %1466 = vrot.lane.b32.xlu0 %v1334, 32
    %v1467 = vpop.permute.xlu0 %1466
    %1468 = vrot.lane.b32.xlu0 %v1337, 32
    %v1469 = vpop.permute.xlu0 %1468
    %1486 = vrot.lane.b32.xlu0 %v1416, 64
    %v1487 = vpop.permute.xlu0 %1486
    %1488 = vrot.lane.b32.xlu0 %v1419, 64
    %v1489 = vpop.permute.xlu0 %1488
    %1490 = vrot.lane.b32.xlu0 %v1424, 64
    %v1491 = vpop.permute.xlu0 %1490
    %1492 = vrot.lane.b32.xlu0 %v1427, 64
    %v1493 = vpop.permute.xlu0 %1492
    %1494 = vrot.lane.b32.xlu0 %v1432, 64
    %v1495 = vpop.permute.xlu0 %1494
    %1496 = vrot.lane.b32.xlu0 %v1435, 64
    %v1497 = vpop.permute.xlu0 %1496
    %1498 = vrot.lane.b32.xlu0 %v1440, 64
    %v1499 = vpop.permute.xlu0 %1498
    %1500 = vrot.lane.b32.xlu0 %v1443, 64
    %v1501 = vpop.permute.xlu0 %1500
    %1518 = vrot.lane.b32.xlu0 %v1101, 96
    %v1519 = vpop.permute.xlu0 %1518
    %1520 = vrot.lane.b32.xlu0 %v1102, 96
    %v1521 = vpop.permute.xlu0 %1520
    %1522 = vrot.lane.b32.xlu0 %v1103, 96
    %v1523 = vpop.permute.xlu0 %1522
    %1524 = vrot.lane.b32.xlu0 %v1104, 96
    %v1525 = vpop.permute.xlu0 %1524
    %1526 = vrot.lane.b32.xlu0 %v1105, 96
    %v1527 = vpop.permute.xlu0 %1526
    %1528 = vrot.lane.b32.xlu0 %v1106, 96
    %v1529 = vpop.permute.xlu0 %1528
    %1530 = vrot.lane.b32.xlu0 %v1107, 96
    %v1531 = vpop.permute.xlu0 %1530
    %1532 = vrot.lane.b32.xlu0 %v1108, 96
    %v1533 = vpop.permute.xlu0 %1532
    %v1542 = vsel %vm497, %v1204, %v1455
    %v1543 = vsel %vm497, %v1207, %v1457
    %v1544 = vsel %vm497, %v1212, %v1459
    %v1545 = vsel %vm497, %v1215, %v1461
    %v1546 = vsel %vm497, %v1220, %v1463
    %v1547 = vsel %vm497, %v1223, %v1465
    %v1548 = vsel %vm497, %v1228, %v1467
    %v1549 = vsel %vm497, %v1231, %v1469
    %v1550 = vsel %vm111, %v1542, %v1487
    %v1551 = vsel %vm111, %v1543, %v1489
    %v1552 = vsel %vm111, %v1544, %v1491
    %v1553 = vsel %vm111, %v1545, %v1493
    %v1554 = vsel %vm111, %v1546, %v1495
    %v1555 = vsel %vm111, %v1547, %v1497
    %v1556 = vsel %vm111, %v1548, %v1499
    %v1557 = vsel %vm111, %v1549, %v1501
    %v1558 = vsel %vm514, %v1550, %v1519
    %v1559 = vsel %vm514, %v1551, %v1521
    %v1560 = vsel %vm514, %v1552, %v1523
    %v1561 = vsel %vm514, %v1553, %v1525
    %v1562 = vsel %vm514, %v1554, %v1527
    %v1563 = vsel %vm514, %v1555, %v1529
    %v1564 = vsel %vm514, %v1556, %v1531
    %v1565 = vsel %vm514, %v1557, %v1533
    %v1566 = vpack.c.bf16 %v1559, %v1558
    %v1567 = vpack.c.bf16 %v1561, %v1560
    %v1568 = vpack.c.bf16 %v1563, %v1562
    %v1569 = vpack.c.bf16 %v1565, %v1564
    %v1586 = vunpack.c.l.b16 %v1109
    %v1587 = vunpack.c.l.b16 %v1110
    %v1588 = vunpack.c.l.b16 %v1111
    %v1589 = vunpack.c.l.b16 %v1112
    %v1590 = vunpack.c.l.b16 %v1113
    %v1591 = vunpack.c.l.b16 %v1114
    %v1592 = vunpack.c.l.b16 %v1115
    %v1593 = vunpack.c.l.b16 %v1116
    %v1594 = vunpack.c.l.b16 %v1117
    %v1595 = vunpack.c.l.b16 %v1118
    %v1596 = vunpack.c.l.b16 %v1119
    %v1597 = vunpack.c.l.b16 %v1120
    %v1598 = vunpack.c.l.b16 %v1121
    %v1599 = vunpack.c.l.b16 %v1122
    %v1600 = vunpack.c.l.b16 %v1123
    %v1601 = vunpack.c.l.b16 %v1124
    %v1602 = vpack.c.b16 %v1587, %v1586
    %v1603 = vpack.c.b16 %v1589, %v1588
    %v1604 = vpack.c.b16 %v1591, %v1590
    %v1605 = vpack.c.b16 %v1593, %v1592
    %v1606 = vpack.c.b16 %v1595, %v1594
    %v1607 = vpack.c.b16 %v1597, %v1596
    %v1608 = vpack.c.b16 %v1599, %v1598
    %v1609 = vpack.c.b16 %v1601, %v1600
    %1618 = vmatprep.subr.bf16.mxu0 0
    %1619 = vmatpush1.bf16.msra.mxu0 %v1602
    %1620 = vmatprep.subr.bf16.mxu0 0
    %1621 = vmatpush1.bf16.msra.mxu0 %v1603
    %1622 = vmatprep.subr.bf16.mxu0 0
    %1623 = vmatpush1.bf16.msra.mxu0 %v1604
    %1624 = vmatprep.subr.bf16.mxu0 0
    %1625 = vmatpush1.bf16.msra.mxu0 %v1605
    %1626 = vmatprep.subr.bf16.mxu0 0
    %1627 = vmatpush1.bf16.msra.mxu0 %v1606
    %1628 = vmatprep.subr.bf16.mxu0 0
    %1629 = vmatpush1.bf16.msra.mxu0 %v1607
    %1630 = vmatprep.subr.bf16.mxu0 0
    %1631 = vmatpush1.bf16.msra.mxu0 %v1608
    %1632 = vmatprep.subr.bf16.mxu0 0
    %1633 = vmatpush1.bf16.msra.mxu0 %v1609
    %1634 = vmatprep.subr.bf16.mxu0 0
    %1635 = vmatpush1.bf16.msra.mxu0 0
    %1636 = vmatprep.subr.bf16.mxu0 0
    %1637 = vmatpush1.bf16.msra.mxu0 0
    %1638 = vmatprep.subr.bf16.mxu0 0
    %1639 = vmatpush1.bf16.msra.mxu0 0
    %1640 = vmatprep.subr.bf16.mxu0 0
    %1641 = vmatpush1.bf16.msra.mxu0 0
    %1642 = vmatprep.subr.bf16.mxu0 0
    %1643 = vmatpush1.bf16.msra.mxu0 0
    %1644 = vmatprep.subr.bf16.mxu0 0
    %1645 = vmatpush1.bf16.msra.mxu0 0
    %1646 = vmatprep.subr.bf16.mxu0 0
    %1647 = vmatpush1.bf16.msra.mxu0 0
    %1648 = vmatprep.subr.bf16.mxu0 0
    %1649 = vmatpush1.bf16.msra.mxu0 0
    %1650 = vmatprep.mubr.bf16.mxu0 0
    %1651 = vmatmul.mubr.bf16.gmra.mrb[0].mxu0 %v1566
    %v1652 = vpop.f32.mrb[0].mxu0
    %v1653 = vadd.f32 0.0, %v1652
    %v1654 = vpop.f32.mrb[0].mxu0
    %v1655 = vpop.f32.mrb[0].mxu0
    %v1656 = vadd.f32 0.0, %v1655
    %v1657 = vpop.f32.mrb[0].mxu0
    %1658 = vmatprep.mubr.bf16.mxu0 0
    %1659 = vmatmul.mubr.bf16.gmra.mrb[0].mxu0 %v1567
    %v1660 = vpop.f32.mrb[0].mxu0
    %v1661 = vadd.f32 0.0, %v1660
    %v1662 = vpop.f32.mrb[0].mxu0
    %v1663 = vpop.f32.mrb[0].mxu0
    %v1664 = vadd.f32 0.0, %v1663
    %v1665 = vpop.f32.mrb[0].mxu0
    %1666 = vmatprep.mubr.bf16.mxu0 0
    %1667 = vmatmul.mubr.bf16.gmra.mrb[0].mxu0 %v1568
    %v1668 = vpop.f32.mrb[0].mxu0
    %v1669 = vadd.f32 0.0, %v1668
    %v1670 = vpop.f32.mrb[0].mxu0
    %v1671 = vpop.f32.mrb[0].mxu0
    %v1672 = vadd.f32 0.0, %v1671
    %v1673 = vpop.f32.mrb[0].mxu0
    %1674 = vmatprep.mubr.bf16.mxu0 0
    %1675 = vmatmul.mubr.bf16.gmra.mrb[0].mxu0 %v1569
    %v1676 = vpop.f32.mrb[0].mxu0
    %v1677 = vadd.f32 0.0, %v1676
    %v1678 = vpop.f32.mrb[0].mxu0
    %v1679 = vpop.f32.mrb[0].mxu0
    %v1680 = vadd.f32 0.0, %v1679
    %v1681 = vpop.f32.mrb[0].mxu0
    %1682 = vdwg.mxu0
    %v1683 = vtanh.pop %v1653
    %v1684 = vtanh.pop %v1656
    %v1685 = vtanh.pop %v1661
    %v1686 = vtanh.pop %v1664
    %v1687 = vtanh.pop %v1669
    %v1688 = vtanh.pop %v1672
    %v1689 = vtanh.pop %v1677
    %v1690 = vtanh.pop %v1680
    %v1691 = vpack.c.bf16 %v1684, %v1683
    %v1692 = vpack.c.bf16 %v1686, %v1685
    %v1693 = vpack.c.bf16 %v1688, %v1687
    %v1694 = vpack.c.bf16 %v1690, %v1689
    %s1695 = scalar_lea.vmem %s2, 96
    %v1696 = vld [vmem:[%s1695] sm:$0xf]
    %v1697 = vld [vmem:[%s1695 + $0x4] sm:$0xf]
    %v1698 = vld [vmem:[%s1695 + $0x8] sm:$0xf]
    %v1699 = vld [vmem:[%s1695 + $0xc] sm:$0xf]
    %v1700 = vld [vmem:[%s1695 + $0x10] sm:$0xf]
    %v1701 = vld [vmem:[%s1695 + $0x14] sm:$0xf]
    %v1702 = vld [vmem:[%s1695 + $0x18] sm:$0xf]
    %v1703 = vld [vmem:[%s1695 + $0x1c] sm:$0xf]
    %v1712 = vunpack.c.l.b16 %v1696
    %v1713 = vunpack.c.l.b16 %v1697
    %v1714 = vunpack.c.l.b16 %v1698
    %v1715 = vunpack.c.l.b16 %v1699
    %v1716 = vunpack.c.l.b16 %v1700
    %v1717 = vunpack.c.l.b16 %v1701
    %v1718 = vunpack.c.l.b16 %v1702
    %v1719 = vunpack.c.l.b16 %v1703
    %v1720 = vpack.c.b16 %v1713, %v1712
    %v1721 = vpack.c.b16 %v1715, %v1714
    %v1722 = vpack.c.b16 %v1717, %v1716
    %v1723 = vpack.c.b16 %v1719, %v1718
    %v1725 = vsel %vm111, %v1720, 0
    %v1728 = vsel %vm111, %v1721, 0
    %v1731 = vsel %vm111, %v1722, 0
    %v1734 = vsel %vm111, %v1723, 0
    %1736 = vmatprep.subr.bf16.mxu0 0
    %1737 = vmatpush1.bf16.msra.mxu0 %v1691
    %1738 = vmatprep.subr.bf16.mxu0 0
    %1739 = vmatpush1.bf16.msra.mxu0 %v1692
    %1740 = vmatprep.subr.bf16.mxu0 0
    %1741 = vmatpush1.bf16.msra.mxu0 %v1693
    %1742 = vmatprep.subr.bf16.mxu0 0
    %1743 = vmatpush1.bf16.msra.mxu0 %v1694
    %1744 = vmatprep.subr.bf16.mxu0 0
    %1745 = vmatpush1.bf16.msra.mxu0 0
    %1746 = vmatprep.subr.bf16.mxu0 0
    %1747 = vmatpush1.bf16.msra.mxu0 0
    %1748 = vmatprep.subr.bf16.mxu0 0
    %1749 = vmatpush1.bf16.msra.mxu0 0
    %1750 = vmatprep.subr.bf16.mxu0 0
    %1751 = vmatpush1.bf16.msra.mxu0 0
    %1752 = vmatprep.subr.bf16.mxu0 0
    %1753 = vmatpush1.bf16.msra.mxu0 0
    %1754 = vmatprep.subr.bf16.mxu0 0
    %1755 = vmatpush1.bf16.msra.mxu0 0
    %1756 = vmatprep.subr.bf16.mxu0 0
    %1757 = vmatpush1.bf16.msra.mxu0 0
    %1758 = vmatprep.subr.bf16.mxu0 0
    %1759 = vmatpush1.bf16.msra.mxu0 0
    %1760 = vmatprep.subr.bf16.mxu0 0
    %1761 = vmatpush1.bf16.msra.mxu0 0
    %1762 = vmatprep.subr.bf16.mxu0 0
    %1763 = vmatpush1.bf16.msra.mxu0 0
    %1764 = vmatprep.subr.bf16.mxu0 0
    %1765 = vmatpush1.bf16.msra.mxu0 0
    %1766 = vmatprep.subr.bf16.mxu0 0
    %1767 = vmatpush1.bf16.msra.mxu0 0
    %1768 = vmatprep.mubr.bf16.mxu0 0
    %1769 = vmatmul.mubr.bf16.gmra.mrb[0].mxu0 %v1725
    %v1770 = vpop.f32.mrb[0].mxu0
    %v1771 = vadd.f32 0.0, %v1770
    %v1772 = vpop.f32.mrb[0].mxu0
    %v1773 = vpop.f32.mrb[0].mxu0
    %v1774 = vadd.f32 0.0, %v1773
    %v1775 = vpop.f32.mrb[0].mxu0
    %1776 = vmatprep.mubr.bf16.mxu0 0
    %1777 = vmatmul.mubr.bf16.gmra.mrb[0].mxu0 %v1728
    %v1778 = vpop.f32.mrb[0].mxu0
    %v1779 = vadd.f32 0.0, %v1778
    %v1780 = vpop.f32.mrb[0].mxu0
    %v1781 = vpop.f32.mrb[0].mxu0
    %v1782 = vadd.f32 0.0, %v1781
    %v1783 = vpop.f32.mrb[0].mxu0
    %1784 = vmatprep.mubr.bf16.mxu0 0
    %1785 = vmatmul.mubr.bf16.gmra.mrb[0].mxu0 %v1731
    %v1786 = vpop.f32.mrb[0].mxu0
    %v1787 = vadd.f32 0.0, %v1786
    %v1788 = vpop.f32.mrb[0].mxu0
    %v1789 = vpop.f32.mrb[0].mxu0
    %v1790 = vadd.f32 0.0, %v1789
    %v1791 = vpop.f32.mrb[0].mxu0
    %1792 = vmatprep.mubr.bf16.mxu0 0
    %1793 = vmatmul.mubr.bf16.gmra.mrb[0].mxu0 %v1734
    %v1794 = vpop.f32.mrb[0].mxu0
    %v1795 = vadd.f32 0.0, %v1794
    %v1796 = vpop.f32.mrb[0].mxu0
    %v1797 = vpop.f32.mrb[0].mxu0
    %v1798 = vadd.f32 0.0, %v1797
    %v1799 = vpop.f32.mrb[0].mxu0
    %1800 = vdwg.mxu0
    %s1801 = scalar_lea.vmem %s2, 128
    %v1802 = vld [vmem:[%s1801] sm:$0xf]
    %v1803 = vld [vmem:[%s1801 + $0x4] sm:$0xf]
    %v1804 = vld [vmem:[%s1801 + $0x8] sm:$0xf]
    %v1805 = vld [vmem:[%s1801 + $0xc] sm:$0xf]
    %v1806 = vld [vmem:[%s1801 + $0x10] sm:$0xf]
    %v1807 = vld [vmem:[%s1801 + $0x14] sm:$0xf]
    %v1808 = vld [vmem:[%s1801 + $0x18] sm:$0xf]
    %v1809 = vld [vmem:[%s1801 + $0x1c] sm:$0xf]
    %v1818 = vunpack.c.l.b16 %v1802
    %v1819 = vunpack.c.l.b16 %v1803
    %v1820 = vunpack.c.l.b16 %v1804
    %v1821 = vunpack.c.l.b16 %v1805
    %v1822 = vunpack.c.l.b16 %v1806
    %v1823 = vunpack.c.l.b16 %v1807
    %v1824 = vunpack.c.l.b16 %v1808
    %v1825 = vunpack.c.l.b16 %v1809
    %v1826 = vpack.c.b16 %v1819, %v1818
    %v1827 = vpack.c.b16 %v1821, %v1820
    %v1828 = vpack.c.b16 %v1823, %v1822
    %v1829 = vpack.c.b16 %v1825, %v1824
    %v1831 = vsel %vm111, %v1826, 0
    %v1834 = vsel %vm111, %v1827, 0
    %v1837 = vsel %vm111, %v1828, 0
    %v1840 = vsel %vm111, %v1829, 0
    %1842 = vmatprep.subr.bf16.mxu0 0
    %1843 = vmatpush1.bf16.msra.mxu0 %v1691
    %1844 = vmatprep.subr.bf16.mxu0 0
    %1845 = vmatpush1.bf16.msra.mxu0 %v1692
    %1846 = vmatprep.subr.bf16.mxu0 0
    %1847 = vmatpush1.bf16.msra.mxu0 %v1693
    %1848 = vmatprep.subr.bf16.mxu0 0
    %1849 = vmatpush1.bf16.msra.mxu0 %v1694
    %1850 = vmatprep.subr.bf16.mxu0 0
    %1851 = vmatpush1.bf16.msra.mxu0 0
    %1852 = vmatprep.subr.bf16.mxu0 0
    %1853 = vmatpush1.bf16.msra.mxu0 0
    %1854 = vmatprep.subr.bf16.mxu0 0
    %1855 = vmatpush1.bf16.msra.mxu0 0
    %1856 = vmatprep.subr.bf16.mxu0 0
    %1857 = vmatpush1.bf16.msra.mxu0 0
    %1858 = vmatprep.subr.bf16.mxu0 0
    %1859 = vmatpush1.bf16.msra.mxu0 0
    %1860 = vmatprep.subr.bf16.mxu0 0
    %1861 = vmatpush1.bf16.msra.mxu0 0
    %1862 = vmatprep.subr.bf16.mxu0 0
    %1863 = vmatpush1.bf16.msra.mxu0 0
    %1864 = vmatprep.subr.bf16.mxu0 0
    %1865 = vmatpush1.bf16.msra.mxu0 0
    %1866 = vmatprep.subr.bf16.mxu0 0
    %1867 = vmatpush1.bf16.msra.mxu0 0
    %1868 = vmatprep.subr.bf16.mxu0 0
    %1869 = vmatpush1.bf16.msra.mxu0 0
    %1870 = vmatprep.subr.bf16.mxu0 0
    %1871 = vmatpush1.bf16.msra.mxu0 0
    %1872 = vmatprep.subr.bf16.mxu0 0
    %1873 = vmatpush1.bf16.msra.mxu0 0
    %1874 = vmatprep.mubr.bf16.mxu0 0
    %1875 = vmatmul.mubr.bf16.gmra.mrb[0].mxu0 %v1831
    %v1876 = vpop.f32.mrb[0].mxu0
    %v1877 = vadd.f32 0.0, %v1876
    %v1878 = vpop.f32.mrb[0].mxu0
    %v1879 = vpop.f32.mrb[0].mxu0
    %v1880 = vadd.f32 0.0, %v1879
    %v1881 = vpop.f32.mrb[0].mxu0
    %1882 = vmatprep.mubr.bf16.mxu0 0
    %1883 = vmatmul.mubr.bf16.gmra.mrb[0].mxu0 %v1834
    %v1884 = vpop.f32.mrb[0].mxu0
    %v1885 = vadd.f32 0.0, %v1884
    %v1886 = vpop.f32.mrb[0].mxu0
    %v1887 = vpop.f32.mrb[0].mxu0
    %v1888 = vadd.f32 0.0, %v1887
    %v1889 = vpop.f32.mrb[0].mxu0
    %1890 = vmatprep.mubr.bf16.mxu0 0
    %1891 = vmatmul.mubr.bf16.gmra.mrb[0].mxu0 %v1837
    %v1892 = vpop.f32.mrb[0].mxu0
    %v1893 = vadd.f32 0.0, %v1892
    %v1894 = vpop.f32.mrb[0].mxu0
    %v1895 = vpop.f32.mrb[0].mxu0
    %v1896 = vadd.f32 0.0, %v1895
    %v1897 = vpop.f32.mrb[0].mxu0
    %1898 = vmatprep.mubr.bf16.mxu0 0
    %1899 = vmatmul.mubr.bf16.gmra.mrb[0].mxu0 %v1840
    %v1900 = vpop.f32.mrb[0].mxu0
    %v1901 = vadd.f32 0.0, %v1900
    %v1902 = vpop.f32.mrb[0].mxu0
    %v1903 = vpop.f32.mrb[0].mxu0
    %v1904 = vadd.f32 0.0, %v1903
    %v1905 = vpop.f32.mrb[0].mxu0
    %1906 = vdwg.mxu0
    %s1907 = scalar_lea.vmem %s2, 160
    %v1908 = vld [vmem:[%s1907] sm:$0xf]
    %v1909 = vld [vmem:[%s1907 + $0x4] sm:$0xf]
    %v1910 = vld [vmem:[%s1907 + $0x8] sm:$0xf]
    %v1911 = vld [vmem:[%s1907 + $0xc] sm:$0xf]
    %v1912 = vld [vmem:[%s1907 + $0x10] sm:$0xf]
    %v1913 = vld [vmem:[%s1907 + $0x14] sm:$0xf]
    %v1914 = vld [vmem:[%s1907 + $0x18] sm:$0xf]
    %v1915 = vld [vmem:[%s1907 + $0x1c] sm:$0xf]
    %v1924 = vunpack.c.l.b16 %v1908
    %v1925 = vunpack.c.l.b16 %v1909
    %v1926 = vunpack.c.l.b16 %v1910
    %v1927 = vunpack.c.l.b16 %v1911
    %v1928 = vunpack.c.l.b16 %v1912
    %v1929 = vunpack.c.l.b16 %v1913
    %v1930 = vunpack.c.l.b16 %v1914
    %v1931 = vunpack.c.l.b16 %v1915
    %v1932 = vpack.c.b16 %v1925, %v1924
    %v1933 = vpack.c.b16 %v1927, %v1926
    %v1934 = vpack.c.b16 %v1929, %v1928
    %v1935 = vpack.c.b16 %v1931, %v1930
    %v1937 = vsel %vm111, %v1932, 0
    %v1940 = vsel %vm111, %v1933, 0
    %v1943 = vsel %vm111, %v1934, 0
    %v1946 = vsel %vm111, %v1935, 0
    %1948 = vmatprep.subr.bf16.mxu0 0
    %1949 = vmatpush1.bf16.msra.mxu0 %v1691
    %1950 = vmatprep.subr.bf16.mxu0 0
    %1951 = vmatpush1.bf16.msra.mxu0 %v1692
    %1952 = vmatprep.subr.bf16.mxu0 0
    %1953 = vmatpush1.bf16.msra.mxu0 %v1693
    %1954 = vmatprep.subr.bf16.mxu0 0
    %1955 = vmatpush1.bf16.msra.mxu0 %v1694
    %1956 = vmatprep.subr.bf16.mxu0 0
    %1957 = vmatpush1.bf16.msra.mxu0 0
    %1958 = vmatprep.subr.bf16.mxu0 0
    %1959 = vmatpush1.bf16.msra.mxu0 0
    %1960 = vmatprep.subr.bf16.mxu0 0
    %1961 = vmatpush1.bf16.msra.mxu0 0
    %1962 = vmatprep.subr.bf16.mxu0 0
    %1963 = vmatpush1.bf16.msra.mxu0 0
    %1964 = vmatprep.subr.bf16.mxu0 0
    %1965 = vmatpush1.bf16.msra.mxu0 0
    %1966 = vmatprep.subr.bf16.mxu0 0
    %1967 = vmatpush1.bf16.msra.mxu0 0
    %1968 = vmatprep.subr.bf16.mxu0 0
    %1969 = vmatpush1.bf16.msra.mxu0 0
    %1970 = vmatprep.subr.bf16.mxu0 0
    %1971 = vmatpush1.bf16.msra.mxu0 0
    %1972 = vmatprep.subr.bf16.mxu0 0
    %1973 = vmatpush1.bf16.msra.mxu0 0
    %1974 = vmatprep.subr.bf16.mxu0 0
    %1975 = vmatpush1.bf16.msra.mxu0 0
    %1976 = vmatprep.subr.bf16.mxu0 0
    %1977 = vmatpush1.bf16.msra.mxu0 0
    %1978 = vmatprep.subr.bf16.mxu0 0
    %1979 = vmatpush1.bf16.msra.mxu0 0
    %1980 = vmatprep.mubr.bf16.mxu0 0
    %1981 = vmatmul.mubr.bf16.gmra.mrb[0].mxu0 %v1937
    %v1982 = vpop.f32.mrb[0].mxu0
    %v1983 = vadd.f32 0.0, %v1982
    %v1984 = vpop.f32.mrb[0].mxu0
    %v1985 = vpop.f32.mrb[0].mxu0
    %v1986 = vadd.f32 0.0, %v1985
    %v1987 = vpop.f32.mrb[0].mxu0
    %1988 = vmatprep.mubr.bf16.mxu0 0
    %1989 = vmatmul.mubr.bf16.gmra.mrb[0].mxu0 %v1940
    %v1990 = vpop.f32.mrb[0].mxu0
    %v1991 = vadd.f32 0.0, %v1990
    %v1992 = vpop.f32.mrb[0].mxu0
    %v1993 = vpop.f32.mrb[0].mxu0
    %v1994 = vadd.f32 0.0, %v1993
    %v1995 = vpop.f32.mrb[0].mxu0
    %1996 = vmatprep.mubr.bf16.mxu0 0
    %1997 = vmatmul.mubr.bf16.gmra.mrb[0].mxu0 %v1943
    %v1998 = vpop.f32.mrb[0].mxu0
    %v1999 = vadd.f32 0.0, %v1998
    %v2000 = vpop.f32.mrb[0].mxu0
    %v2001 = vpop.f32.mrb[0].mxu0
    %v2002 = vadd.f32 0.0, %v2001
    %v2003 = vpop.f32.mrb[0].mxu0
    %2004 = vmatprep.mubr.bf16.mxu0 0
    %2005 = vmatmul.mubr.bf16.gmra.mrb[0].mxu0 %v1946
    %v2006 = vpop.f32.mrb[0].mxu0
    %v2007 = vadd.f32 0.0, %v2006
    %v2008 = vpop.f32.mrb[0].mxu0
    %v2009 = vpop.f32.mrb[0].mxu0
    %v2010 = vadd.f32 0.0, %v2009
    %v2011 = vpop.f32.mrb[0].mxu0
    %2012 = vdwg.mxu0
    %2021 = vrot.lane.b32.xlu0 %v1877, 32
    %v2022 = vpop.permute.xlu0 %2021
    %2023 = vrot.lane.b32.xlu0 %v1880, 32
    %v2024 = vpop.permute.xlu0 %2023
    %2025 = vrot.lane.b32.xlu0 %v1885, 32
    %v2026 = vpop.permute.xlu0 %2025
    %2027 = vrot.lane.b32.xlu0 %v1888, 32
    %v2028 = vpop.permute.xlu0 %2027
    %2029 = vrot.lane.b32.xlu0 %v1893, 32
    %v2030 = vpop.permute.xlu0 %2029
    %2031 = vrot.lane.b32.xlu0 %v1896, 32
    %v2032 = vpop.permute.xlu0 %2031
    %2033 = vrot.lane.b32.xlu0 %v1901, 32
    %v2034 = vpop.permute.xlu0 %2033
    %2035 = vrot.lane.b32.xlu0 %v1904, 32
    %v2036 = vpop.permute.xlu0 %2035
    %2053 = vrot.lane.b32.xlu0 %v1983, 64
    %v2054 = vpop.permute.xlu0 %2053
    %2055 = vrot.lane.b32.xlu0 %v1986, 64
    %v2056 = vpop.permute.xlu0 %2055
    %2057 = vrot.lane.b32.xlu0 %v1991, 64
    %v2058 = vpop.permute.xlu0 %2057
    %2059 = vrot.lane.b32.xlu0 %v1994, 64
    %v2060 = vpop.permute.xlu0 %2059
    %2061 = vrot.lane.b32.xlu0 %v1999, 64
    %v2062 = vpop.permute.xlu0 %2061
    %2063 = vrot.lane.b32.xlu0 %v2002, 64
    %v2064 = vpop.permute.xlu0 %2063
    %2065 = vrot.lane.b32.xlu0 %v2007, 64
    %v2066 = vpop.permute.xlu0 %2065
    %2067 = vrot.lane.b32.xlu0 %v2010, 64
    %v2068 = vpop.permute.xlu0 %2067
    %2085 = vrot.lane.b32.xlu0 %v1683, 96
    %v2086 = vpop.permute.xlu0 %2085
    %2087 = vrot.lane.b32.xlu0 %v1684, 96
    %v2088 = vpop.permute.xlu0 %2087
    %2089 = vrot.lane.b32.xlu0 %v1685, 96
    %v2090 = vpop.permute.xlu0 %2089
    %2091 = vrot.lane.b32.xlu0 %v1686, 96
    %v2092 = vpop.permute.xlu0 %2091
    %2093 = vrot.lane.b32.xlu0 %v1687, 96
    %v2094 = vpop.permute.xlu0 %2093
    %2095 = vrot.lane.b32.xlu0 %v1688, 96
    %v2096 = vpop.permute.xlu0 %2095
    %2097 = vrot.lane.b32.xlu0 %v1689, 96
    %v2098 = vpop.permute.xlu0 %2097
    %2099 = vrot.lane.b32.xlu0 %v1690, 96
    %v2100 = vpop.permute.xlu0 %2099
    %v2109 = vsel %vm497, %v1771, %v2022
    %v2110 = vsel %vm497, %v1774, %v2024
    %v2111 = vsel %vm497, %v1779, %v2026
    %v2112 = vsel %vm497, %v1782, %v2028
    %v2113 = vsel %vm497, %v1787, %v2030
    %v2114 = vsel %vm497, %v1790, %v2032
    %v2115 = vsel %vm497, %v1795, %v2034
    %v2116 = vsel %vm497, %v1798, %v2036
    %v2117 = vsel %vm111, %v2109, %v2054
    %v2118 = vsel %vm111, %v2110, %v2056
    %v2119 = vsel %vm111, %v2111, %v2058
    %v2120 = vsel %vm111, %v2112, %v2060
    %v2121 = vsel %vm111, %v2113, %v2062
    %v2122 = vsel %vm111, %v2114, %v2064
    %v2123 = vsel %vm111, %v2115, %v2066
    %v2124 = vsel %vm111, %v2116, %v2068
    %v2125 = vsel %vm514, %v2117, %v2086
    %v2126 = vsel %vm514, %v2118, %v2088
    %v2127 = vsel %vm514, %v2119, %v2090
    %v2128 = vsel %vm514, %v2120, %v2092
    %v2129 = vsel %vm514, %v2121, %v2094
    %v2130 = vsel %vm514, %v2122, %v2096
    %v2131 = vsel %vm514, %v2123, %v2098
    %v2132 = vsel %vm514, %v2124, %v2100
    %v2133 = vpack.c.bf16 %v2126, %v2125
    %v2134 = vpack.c.bf16 %v2128, %v2127
    %v2135 = vpack.c.bf16 %v2130, %v2129
    %v2136 = vpack.c.bf16 %v2132, %v2131
    %2137 = vmatprep.subr.bf16.mxu0 0
    %2138 = vmatpush1.bf16.msra.mxu0 %v1602
    %2139 = vmatprep.subr.bf16.mxu0 0
    %2140 = vmatpush1.bf16.msra.mxu0 %v1603
    %2141 = vmatprep.subr.bf16.mxu0 0
    %2142 = vmatpush1.bf16.msra.mxu0 %v1604
    %2143 = vmatprep.subr.bf16.mxu0 0
    %2144 = vmatpush1.bf16.msra.mxu0 %v1605
    %2145 = vmatprep.subr.bf16.mxu0 0
    %2146 = vmatpush1.bf16.msra.mxu0 %v1606
    %2147 = vmatprep.subr.bf16.mxu0 0
    %2148 = vmatpush1.bf16.msra.mxu0 %v1607
    %2149 = vmatprep.subr.bf16.mxu0 0
    %2150 = vmatpush1.bf16.msra.mxu0 %v1608
    %2151 = vmatprep.subr.bf16.mxu0 0
    %2152 = vmatpush1.bf16.msra.mxu0 %v1609
    %2153 = vmatprep.subr.bf16.mxu0 0
    %2154 = vmatpush1.bf16.msra.mxu0 0
    %2155 = vmatprep.subr.bf16.mxu0 0
    %2156 = vmatpush1.bf16.msra.mxu0 0
    %2157 = vmatprep.subr.bf16.mxu0 0
    %2158 = vmatpush1.bf16.msra.mxu0 0
    %2159 = vmatprep.subr.bf16.mxu0 0
    %2160 = vmatpush1.bf16.msra.mxu0 0
    %2161 = vmatprep.subr.bf16.mxu0 0
    %2162 = vmatpush1.bf16.msra.mxu0 0
    %2163 = vmatprep.subr.bf16.mxu0 0
    %2164 = vmatpush1.bf16.msra.mxu0 0
    %2165 = vmatprep.subr.bf16.mxu0 0
    %2166 = vmatpush1.bf16.msra.mxu0 0
    %2167 = vmatprep.subr.bf16.mxu0 0
    %2168 = vmatpush1.bf16.msra.mxu0 0
    %2169 = vmatprep.mubr.bf16.mxu0 0
    %2170 = vmatmul.mubr.bf16.gmra.mrb[0].mxu0 %v2133
    %v2171 = vpop.f32.mrb[0].mxu0
    %v2172 = vadd.f32 0.0, %v2171
    %v2173 = vpop.f32.mrb[0].mxu0
    %v2174 = vpop.f32.mrb[0].mxu0
    %v2175 = vadd.f32 0.0, %v2174
    %v2176 = vpop.f32.mrb[0].mxu0
    %2177 = vmatprep.mubr.bf16.mxu0 0
    %2178 = vmatmul.mubr.bf16.gmra.mrb[0].mxu0 %v2134
    %v2179 = vpop.f32.mrb[0].mxu0
    %v2180 = vadd.f32 0.0, %v2179
    %v2181 = vpop.f32.mrb[0].mxu0
    %v2182 = vpop.f32.mrb[0].mxu0
    %v2183 = vadd.f32 0.0, %v2182
    %v2184 = vpop.f32.mrb[0].mxu0
    %2185 = vmatprep.mubr.bf16.mxu0 0
    %2186 = vmatmul.mubr.bf16.gmra.mrb[0].mxu0 %v2135
    %v2187 = vpop.f32.mrb[0].mxu0
    %v2188 = vadd.f32 0.0, %v2187
    %v2189 = vpop.f32.mrb[0].mxu0
    %v2190 = vpop.f32.mrb[0].mxu0
    %v2191 = vadd.f32 0.0, %v2190
    %v2192 = vpop.f32.mrb[0].mxu0
    %2193 = vmatprep.mubr.bf16.mxu0 0
    %2194 = vmatmul.mubr.bf16.gmra.mrb[0].mxu0 %v2136
    %v2195 = vpop.f32.mrb[0].mxu0
    %v2196 = vadd.f32 0.0, %v2195
    %v2197 = vpop.f32.mrb[0].mxu0
    %v2198 = vpop.f32.mrb[0].mxu0
    %v2199 = vadd.f32 0.0, %v2198
    %v2200 = vpop.f32.mrb[0].mxu0
    %2201 = vdwg.mxu0
    %v2202 = vtanh.pop %v2172
    %v2203 = vtanh.pop %v2175
    %v2204 = vtanh.pop %v2180
    %v2205 = vtanh.pop %v2183
    %v2206 = vtanh.pop %v2188
    %v2207 = vtanh.pop %v2191
    %v2208 = vtanh.pop %v2196
    %v2209 = vtanh.pop %v2199
    %s2210 = scalar_lea.vmem %s4, 64
    %v2211 = vld [vmem:[%s2210] sm:$0xf]
    %v2212 = vld [vmem:[%s2210 + $0x4] sm:$0xf]
    %v2213 = vld [vmem:[%s2210 + $0x8] sm:$0xf]
    %v2214 = vld [vmem:[%s2210 + $0xc] sm:$0xf]
    %v2215 = vld [vmem:[%s2210 + $0x10] sm:$0xf]
    %v2216 = vld [vmem:[%s2210 + $0x14] sm:$0xf]
    %v2217 = vld [vmem:[%s2210 + $0x18] sm:$0xf]
    %v2218 = vld [vmem:[%s2210 + $0x1c] sm:$0xf]
    %v2219 = vld [vmem:[%s2210 + $0x20] sm:$0xf]
    %v2220 = vld [vmem:[%s2210 + $0x24] sm:$0xf]
    %v2221 = vld [vmem:[%s2210 + $0x28] sm:$0xf]
    %v2222 = vld [vmem:[%s2210 + $0x2c] sm:$0xf]
    %v2223 = vld [vmem:[%s2210 + $0x30] sm:$0xf]
    %v2224 = vld [vmem:[%s2210 + $0x34] sm:$0xf]
    %v2225 = vld [vmem:[%s2210 + $0x38] sm:$0xf]
    %v2226 = vld [vmem:[%s2210 + $0x3c] sm:$0xf]
    %v2227 = vpack.c.bf16 %v2203, %v2202
    %v2228 = vpack.c.bf16 %v2205, %v2204
    %v2229 = vpack.c.bf16 %v2207, %v2206
    %v2230 = vpack.c.bf16 %v2209, %v2208
    %2231 = vmatprep.subr.bf16.mxu0 0
    %2232 = vmatpush1.bf16.msra.mxu0 %v2227
    %2233 = vmatprep.subr.bf16.mxu0 0
    %2234 = vmatpush1.bf16.msra.mxu0 %v2228
    %2235 = vmatprep.subr.bf16.mxu0 0
    %2236 = vmatpush1.bf16.msra.mxu0 %v2229
    %2237 = vmatprep.subr.bf16.mxu0 0
    %2238 = vmatpush1.bf16.msra.mxu0 %v2230
    %2239 = vmatprep.subr.bf16.mxu0 0
    %2240 = vmatpush1.bf16.msra.mxu0 0
    %2241 = vmatprep.subr.bf16.mxu0 0
    %2242 = vmatpush1.bf16.msra.mxu0 0
    %2243 = vmatprep.subr.bf16.mxu0 0
    %2244 = vmatpush1.bf16.msra.mxu0 0
    %2245 = vmatprep.subr.bf16.mxu0 0
    %2246 = vmatpush1.bf16.msra.mxu0 0
    %2247 = vmatprep.subr.bf16.mxu0 0
    %2248 = vmatpush1.bf16.msra.mxu0 0
    %2249 = vmatprep.subr.bf16.mxu0 0
    %2250 = vmatpush1.bf16.msra.mxu0 0
    %2251 = vmatprep.subr.bf16.mxu0 0
    %2252 = vmatpush1.bf16.msra.mxu0 0
    %2253 = vmatprep.subr.bf16.mxu0 0
    %2254 = vmatpush1.bf16.msra.mxu0 0
    %2255 = vmatprep.subr.bf16.mxu0 0
    %2256 = vmatpush1.bf16.msra.mxu0 0
    %2257 = vmatprep.subr.bf16.mxu0 0
    %2258 = vmatpush1.bf16.msra.mxu0 0
    %2259 = vmatprep.subr.bf16.mxu0 0
    %2260 = vmatpush1.bf16.msra.mxu0 0
    %2261 = vmatprep.subr.bf16.mxu0 0
    %2262 = vmatpush1.bf16.msra.mxu0 0
    %2263 = vmatprep.mubr.bf16.mxu0 0
    %2264 = vmatmul.mubr.bf16.gmra.mrb[0].mxu0 %v1158
    %v2265 = vpop.f32.mrb[0].mxu0
    %v2266 = vadd.f32 0.0, %v2265
    %v2267 = vpop.f32.mrb[0].mxu0
    %v2268 = vpop.f32.mrb[0].mxu0
    %v2269 = vadd.f32 0.0, %v2268
    %v2270 = vpop.f32.mrb[0].mxu0
    %2271 = vmatprep.mubr.bf16.mxu0 0
    %2272 = vmatmul.mubr.bf16.gmra.mrb[0].mxu0 %v1161
    %v2273 = vpop.f32.mrb[0].mxu0
    %v2274 = vadd.f32 0.0, %v2273
    %v2275 = vpop.f32.mrb[0].mxu0
    %v2276 = vpop.f32.mrb[0].mxu0
    %v2277 = vadd.f32 0.0, %v2276
    %v2278 = vpop.f32.mrb[0].mxu0
    %2279 = vmatprep.mubr.bf16.mxu0 0
    %2280 = vmatmul.mubr.bf16.gmra.mrb[0].mxu0 %v1164
    %v2281 = vpop.f32.mrb[0].mxu0
    %v2282 = vadd.f32 0.0, %v2281
    %v2283 = vpop.f32.mrb[0].mxu0
    %v2284 = vpop.f32.mrb[0].mxu0
    %v2285 = vadd.f32 0.0, %v2284
    %v2286 = vpop.f32.mrb[0].mxu0
    %2287 = vmatprep.mubr.bf16.mxu0 0
    %2288 = vmatmul.mubr.bf16.gmra.mrb[0].mxu0 %v1167
    %v2289 = vpop.f32.mrb[0].mxu0
    %v2290 = vadd.f32 0.0, %v2289
    %v2291 = vpop.f32.mrb[0].mxu0
    %v2292 = vpop.f32.mrb[0].mxu0
    %v2293 = vadd.f32 0.0, %v2292
    %v2294 = vpop.f32.mrb[0].mxu0
    %2295 = vdwg.mxu0
    %2296 = vmatprep.subr.bf16.mxu0 0
    %2297 = vmatpush1.bf16.msra.mxu0 %v2227
    %2298 = vmatprep.subr.bf16.mxu0 0
    %2299 = vmatpush1.bf16.msra.mxu0 %v2228
    %2300 = vmatprep.subr.bf16.mxu0 0
    %2301 = vmatpush1.bf16.msra.mxu0 %v2229
    %2302 = vmatprep.subr.bf16.mxu0 0
    %2303 = vmatpush1.bf16.msra.mxu0 %v2230
    %2304 = vmatprep.subr.bf16.mxu0 0
    %2305 = vmatpush1.bf16.msra.mxu0 0
    %2306 = vmatprep.subr.bf16.mxu0 0
    %2307 = vmatpush1.bf16.msra.mxu0 0
    %2308 = vmatprep.subr.bf16.mxu0 0
    %2309 = vmatpush1.bf16.msra.mxu0 0
    %2310 = vmatprep.subr.bf16.mxu0 0
    %2311 = vmatpush1.bf16.msra.mxu0 0
    %2312 = vmatprep.subr.bf16.mxu0 0
    %2313 = vmatpush1.bf16.msra.mxu0 0
    %2314 = vmatprep.subr.bf16.mxu0 0
    %2315 = vmatpush1.bf16.msra.mxu0 0
    %2316 = vmatprep.subr.bf16.mxu0 0
    %2317 = vmatpush1.bf16.msra.mxu0 0
    %2318 = vmatprep.subr.bf16.mxu0 0
    %2319 = vmatpush1.bf16.msra.mxu0 0
    %2320 = vmatprep.subr.bf16.mxu0 0
    %2321 = vmatpush1.bf16.msra.mxu0 0
    %2322 = vmatprep.subr.bf16.mxu0 0
    %2323 = vmatpush1.bf16.msra.mxu0 0
    %2324 = vmatprep.subr.bf16.mxu0 0
    %2325 = vmatpush1.bf16.msra.mxu0 0
    %2326 = vmatprep.subr.bf16.mxu0 0
    %2327 = vmatpush1.bf16.msra.mxu0 0
    %2328 = vmatprep.mubr.bf16.mxu0 0
    %2329 = vmatmul.mubr.bf16.gmra.mrb[0].mxu0 %v1264
    %v2330 = vpop.f32.mrb[0].mxu0
    %v2331 = vadd.f32 0.0, %v2330
    %v2332 = vpop.f32.mrb[0].mxu0
    %v2333 = vpop.f32.mrb[0].mxu0
    %v2334 = vadd.f32 0.0, %v2333
    %v2335 = vpop.f32.mrb[0].mxu0
    %2336 = vmatprep.mubr.bf16.mxu0 0
    %2337 = vmatmul.mubr.bf16.gmra.mrb[0].mxu0 %v1267
    %v2338 = vpop.f32.mrb[0].mxu0
    %v2339 = vadd.f32 0.0, %v2338
    %v2340 = vpop.f32.mrb[0].mxu0
    %v2341 = vpop.f32.mrb[0].mxu0
    %v2342 = vadd.f32 0.0, %v2341
    %v2343 = vpop.f32.mrb[0].mxu0
    %2344 = vmatprep.mubr.bf16.mxu0 0
    %2345 = vmatmul.mubr.bf16.gmra.mrb[0].mxu0 %v1270
    %v2346 = vpop.f32.mrb[0].mxu0
    %v2347 = vadd.f32 0.0, %v2346
    %v2348 = vpop.f32.mrb[0].mxu0
    %v2349 = vpop.f32.mrb[0].mxu0
    %v2350 = vadd.f32 0.0, %v2349
    %v2351 = vpop.f32.mrb[0].mxu0
    %2352 = vmatprep.mubr.bf16.mxu0 0
    %2353 = vmatmul.mubr.bf16.gmra.mrb[0].mxu0 %v1273
    %v2354 = vpop.f32.mrb[0].mxu0
    %v2355 = vadd.f32 0.0, %v2354
    %v2356 = vpop.f32.mrb[0].mxu0
    %v2357 = vpop.f32.mrb[0].mxu0
    %v2358 = vadd.f32 0.0, %v2357
    %v2359 = vpop.f32.mrb[0].mxu0
    %2360 = vdwg.mxu0
    %2361 = vmatprep.subr.bf16.mxu0 0
    %2362 = vmatpush1.bf16.msra.mxu0 %v2227
    %2363 = vmatprep.subr.bf16.mxu0 0
    %2364 = vmatpush1.bf16.msra.mxu0 %v2228
    %2365 = vmatprep.subr.bf16.mxu0 0
    %2366 = vmatpush1.bf16.msra.mxu0 %v2229
    %2367 = vmatprep.subr.bf16.mxu0 0
    %2368 = vmatpush1.bf16.msra.mxu0 %v2230
    %2369 = vmatprep.subr.bf16.mxu0 0
    %2370 = vmatpush1.bf16.msra.mxu0 0
    %2371 = vmatprep.subr.bf16.mxu0 0
    %2372 = vmatpush1.bf16.msra.mxu0 0
    %2373 = vmatprep.subr.bf16.mxu0 0
    %2374 = vmatpush1.bf16.msra.mxu0 0
    %2375 = vmatprep.subr.bf16.mxu0 0
    %2376 = vmatpush1.bf16.msra.mxu0 0
    %2377 = vmatprep.subr.bf16.mxu0 0
    %2378 = vmatpush1.bf16.msra.mxu0 0
    %2379 = vmatprep.subr.bf16.mxu0 0
    %2380 = vmatpush1.bf16.msra.mxu0 0
    %2381 = vmatprep.subr.bf16.mxu0 0
    %2382 = vmatpush1.bf16.msra.mxu0 0
    %2383 = vmatprep.subr.bf16.mxu0 0
    %2384 = vmatpush1.bf16.msra.mxu0 0
    %2385 = vmatprep.subr.bf16.mxu0 0
    %2386 = vmatpush1.bf16.msra.mxu0 0
    %2387 = vmatprep.subr.bf16.mxu0 0
    %2388 = vmatpush1.bf16.msra.mxu0 0
    %2389 = vmatprep.subr.bf16.mxu0 0
    %2390 = vmatpush1.bf16.msra.mxu0 0
    %2391 = vmatprep.subr.bf16.mxu0 0
    %2392 = vmatpush1.bf16.msra.mxu0 0
    %2393 = vmatprep.mubr.bf16.mxu0 0
    %2394 = vmatmul.mubr.bf16.gmra.mrb[0].mxu0 %v1370
    %v2395 = vpop.f32.mrb[0].mxu0
    %v2396 = vadd.f32 0.0, %v2395
    %v2397 = vpop.f32.mrb[0].mxu0
    %v2398 = vpop.f32.mrb[0].mxu0
    %v2399 = vadd.f32 0.0, %v2398
    %v2400 = vpop.f32.mrb[0].mxu0
    %2401 = vmatprep.mubr.bf16.mxu0 0
    %2402 = vmatmul.mubr.bf16.gmra.mrb[0].mxu0 %v1373
    %v2403 = vpop.f32.mrb[0].mxu0
    %v2404 = vadd.f32 0.0, %v2403
    %v2405 = vpop.f32.mrb[0].mxu0
    %v2406 = vpop.f32.mrb[0].mxu0
    %v2407 = vadd.f32 0.0, %v2406
    %v2408 = vpop.f32.mrb[0].mxu0
    %2409 = vmatprep.mubr.bf16.mxu0 0
    %2410 = vmatmul.mubr.bf16.gmra.mrb[0].mxu0 %v1376
    %v2411 = vpop.f32.mrb[0].mxu0
    %v2412 = vadd.f32 0.0, %v2411
    %v2413 = vpop.f32.mrb[0].mxu0
    %v2414 = vpop.f32.mrb[0].mxu0
    %v2415 = vadd.f32 0.0, %v2414
    %v2416 = vpop.f32.mrb[0].mxu0
    %2417 = vmatprep.mubr.bf16.mxu0 0
    %2418 = vmatmul.mubr.bf16.gmra.mrb[0].mxu0 %v1379
    %v2419 = vpop.f32.mrb[0].mxu0
    %v2420 = vadd.f32 0.0, %v2419
    %v2421 = vpop.f32.mrb[0].mxu0
    %v2422 = vpop.f32.mrb[0].mxu0
    %v2423 = vadd.f32 0.0, %v2422
    %v2424 = vpop.f32.mrb[0].mxu0
    %2425 = vdwg.mxu0
    %2434 = vrot.lane.b32.xlu0 %v2331, 32
    %v2435 = vpop.permute.xlu0 %2434
    %2436 = vrot.lane.b32.xlu0 %v2334, 32
    %v2437 = vpop.permute.xlu0 %2436
    %2438 = vrot.lane.b32.xlu0 %v2339, 32
    %v2439 = vpop.permute.xlu0 %2438
    %2440 = vrot.lane.b32.xlu0 %v2342, 32
    %v2441 = vpop.permute.xlu0 %2440
    %2442 = vrot.lane.b32.xlu0 %v2347, 32
    %v2443 = vpop.permute.xlu0 %2442
    %2444 = vrot.lane.b32.xlu0 %v2350, 32
    %v2445 = vpop.permute.xlu0 %2444
    %2446 = vrot.lane.b32.xlu0 %v2355, 32
    %v2447 = vpop.permute.xlu0 %2446
    %2448 = vrot.lane.b32.xlu0 %v2358, 32
    %v2449 = vpop.permute.xlu0 %2448
    %2466 = vrot.lane.b32.xlu0 %v2396, 64
    %v2467 = vpop.permute.xlu0 %2466
    %2468 = vrot.lane.b32.xlu0 %v2399, 64
    %v2469 = vpop.permute.xlu0 %2468
    %2470 = vrot.lane.b32.xlu0 %v2404, 64
    %v2471 = vpop.permute.xlu0 %2470
    %2472 = vrot.lane.b32.xlu0 %v2407, 64
    %v2473 = vpop.permute.xlu0 %2472
    %2474 = vrot.lane.b32.xlu0 %v2412, 64
    %v2475 = vpop.permute.xlu0 %2474
    %2476 = vrot.lane.b32.xlu0 %v2415, 64
    %v2477 = vpop.permute.xlu0 %2476
    %2478 = vrot.lane.b32.xlu0 %v2420, 64
    %v2479 = vpop.permute.xlu0 %2478
    %2480 = vrot.lane.b32.xlu0 %v2423, 64
    %v2481 = vpop.permute.xlu0 %2480
    %2498 = vrot.lane.b32.xlu0 %v2202, 96
    %v2499 = vpop.permute.xlu0 %2498
    %2500 = vrot.lane.b32.xlu0 %v2203, 96
    %v2501 = vpop.permute.xlu0 %2500
    %2502 = vrot.lane.b32.xlu0 %v2204, 96
    %v2503 = vpop.permute.xlu0 %2502
    %2504 = vrot.lane.b32.xlu0 %v2205, 96
    %v2505 = vpop.permute.xlu0 %2504
    %2506 = vrot.lane.b32.xlu0 %v2206, 96
    %v2507 = vpop.permute.xlu0 %2506
    %2508 = vrot.lane.b32.xlu0 %v2207, 96
    %v2509 = vpop.permute.xlu0 %2508
    %2510 = vrot.lane.b32.xlu0 %v2208, 96
    %v2511 = vpop.permute.xlu0 %2510
    %2512 = vrot.lane.b32.xlu0 %v2209, 96
    %v2513 = vpop.permute.xlu0 %2512
    %v2522 = vsel %vm497, %v2266, %v2435
    %v2523 = vsel %vm497, %v2269, %v2437
    %v2524 = vsel %vm497, %v2274, %v2439
    %v2525 = vsel %vm497, %v2277, %v2441
    %v2526 = vsel %vm497, %v2282, %v2443
    %v2527 = vsel %vm497, %v2285, %v2445
    %v2528 = vsel %vm497, %v2290, %v2447
    %v2529 = vsel %vm497, %v2293, %v2449
    %v2530 = vsel %vm111, %v2522, %v2467
    %v2531 = vsel %vm111, %v2523, %v2469
    %v2532 = vsel %vm111, %v2524, %v2471
    %v2533 = vsel %vm111, %v2525, %v2473
    %v2534 = vsel %vm111, %v2526, %v2475
    %v2535 = vsel %vm111, %v2527, %v2477
    %v2536 = vsel %vm111, %v2528, %v2479
    %v2537 = vsel %vm111, %v2529, %v2481
    %v2538 = vsel %vm514, %v2530, %v2499
    %v2539 = vsel %vm514, %v2531, %v2501
    %v2540 = vsel %vm514, %v2532, %v2503
    %v2541 = vsel %vm514, %v2533, %v2505
    %v2542 = vsel %vm514, %v2534, %v2507
    %v2543 = vsel %vm514, %v2535, %v2509
    %v2544 = vsel %vm514, %v2536, %v2511
    %v2545 = vsel %vm514, %v2537, %v2513
    %v2546 = vpack.c.bf16 %v2539, %v2538
    %v2547 = vpack.c.bf16 %v2541, %v2540
    %v2548 = vpack.c.bf16 %v2543, %v2542
    %v2549 = vpack.c.bf16 %v2545, %v2544
    %v2566 = vunpack.c.l.b16 %v2211
    %v2567 = vunpack.c.l.b16 %v2212
    %v2568 = vunpack.c.l.b16 %v2213
    %v2569 = vunpack.c.l.b16 %v2214
    %v2570 = vunpack.c.l.b16 %v2215
    %v2571 = vunpack.c.l.b16 %v2216
    %v2572 = vunpack.c.l.b16 %v2217
    %v2573 = vunpack.c.l.b16 %v2218
    %v2574 = vunpack.c.l.b16 %v2219
    %v2575 = vunpack.c.l.b16 %v2220
    %v2576 = vunpack.c.l.b16 %v2221
    %v2577 = vunpack.c.l.b16 %v2222
    %v2578 = vunpack.c.l.b16 %v2223
    %v2579 = vunpack.c.l.b16 %v2224
    %v2580 = vunpack.c.l.b16 %v2225
    %v2581 = vunpack.c.l.b16 %v2226
    %v2582 = vpack.c.b16 %v2567, %v2566
    %v2583 = vpack.c.b16 %v2569, %v2568
    %v2584 = vpack.c.b16 %v2571, %v2570
    %v2585 = vpack.c.b16 %v2573, %v2572
    %v2586 = vpack.c.b16 %v2575, %v2574
    %v2587 = vpack.c.b16 %v2577, %v2576
    %v2588 = vpack.c.b16 %v2579, %v2578
    %v2589 = vpack.c.b16 %v2581, %v2580
    %2598 = vmatprep.subr.bf16.mxu0 0
    %2599 = vmatpush1.bf16.msra.mxu0 %v2582
    %2600 = vmatprep.subr.bf16.mxu0 0
    %2601 = vmatpush1.bf16.msra.mxu0 %v2583
    %2602 = vmatprep.subr.bf16.mxu0 0
    %2603 = vmatpush1.bf16.msra.mxu0 %v2584
    %2604 = vmatprep.subr.bf16.mxu0 0
    %2605 = vmatpush1.bf16.msra.mxu0 %v2585
    %2606 = vmatprep.subr.bf16.mxu0 0
    %2607 = vmatpush1.bf16.msra.mxu0 %v2586
    %2608 = vmatprep.subr.bf16.mxu0 0
    %2609 = vmatpush1.bf16.msra.mxu0 %v2587
    %2610 = vmatprep.subr.bf16.mxu0 0
    %2611 = vmatpush1.bf16.msra.mxu0 %v2588
    %2612 = vmatprep.subr.bf16.mxu0 0
    %2613 = vmatpush1.bf16.msra.mxu0 %v2589
    %2614 = vmatprep.subr.bf16.mxu0 0
    %2615 = vmatpush1.bf16.msra.mxu0 0
    %2616 = vmatprep.subr.bf16.mxu0 0
    %2617 = vmatpush1.bf16.msra.mxu0 0
    %2618 = vmatprep.subr.bf16.mxu0 0
    %2619 = vmatpush1.bf16.msra.mxu0 0
    %2620 = vmatprep.subr.bf16.mxu0 0
    %2621 = vmatpush1.bf16.msra.mxu0 0
    %2622 = vmatprep.subr.bf16.mxu0 0
    %2623 = vmatpush1.bf16.msra.mxu0 0
    %2624 = vmatprep.subr.bf16.mxu0 0
    %2625 = vmatpush1.bf16.msra.mxu0 0
    %2626 = vmatprep.subr.bf16.mxu0 0
    %2627 = vmatpush1.bf16.msra.mxu0 0
    %2628 = vmatprep.subr.bf16.mxu0 0
    %2629 = vmatpush1.bf16.msra.mxu0 0
    %2630 = vmatprep.mubr.bf16.mxu0 0
    %2631 = vmatmul.mubr.bf16.gmra.mrb[0].mxu0 %v2546
    %v2632 = vpop.f32.mrb[0].mxu0
    %v2633 = vadd.f32 0.0, %v2632
    %v2634 = vpop.f32.mrb[0].mxu0
    %v2635 = vpop.f32.mrb[0].mxu0
    %v2636 = vadd.f32 0.0, %v2635
    %v2637 = vpop.f32.mrb[0].mxu0
    %2638 = vmatprep.mubr.bf16.mxu0 0
    %2639 = vmatmul.mubr.bf16.gmra.mrb[0].mxu0 %v2547
    %v2640 = vpop.f32.mrb[0].mxu0
    %v2641 = vadd.f32 0.0, %v2640
    %v2642 = vpop.f32.mrb[0].mxu0
    %v2643 = vpop.f32.mrb[0].mxu0
    %v2644 = vadd.f32 0.0, %v2643
    %v2645 = vpop.f32.mrb[0].mxu0
    %2646 = vmatprep.mubr.bf16.mxu0 0
    %2647 = vmatmul.mubr.bf16.gmra.mrb[0].mxu0 %v2548
    %v2648 = vpop.f32.mrb[0].mxu0
    %v2649 = vadd.f32 0.0, %v2648
    %v2650 = vpop.f32.mrb[0].mxu0
    %v2651 = vpop.f32.mrb[0].mxu0
    %v2652 = vadd.f32 0.0, %v2651
    %v2653 = vpop.f32.mrb[0].mxu0
    %2654 = vmatprep.mubr.bf16.mxu0 0
    %2655 = vmatmul.mubr.bf16.gmra.mrb[0].mxu0 %v2549
    %v2656 = vpop.f32.mrb[0].mxu0
    %v2657 = vadd.f32 0.0, %v2656
    %v2658 = vpop.f32.mrb[0].mxu0
    %v2659 = vpop.f32.mrb[0].mxu0
    %v2660 = vadd.f32 0.0, %v2659
    %v2661 = vpop.f32.mrb[0].mxu0
    %2662 = vdwg.mxu0
    %v2663 = vtanh.pop %v2633
    %v2664 = vtanh.pop %v2636
    %v2665 = vtanh.pop %v2641
    %v2666 = vtanh.pop %v2644
    %v2667 = vtanh.pop %v2649
    %v2668 = vtanh.pop %v2652
    %v2669 = vtanh.pop %v2657
    %v2670 = vtanh.pop %v2660
    %v2671 = vpack.c.bf16 %v2664, %v2663
    %v2672 = vpack.c.bf16 %v2666, %v2665
    %v2673 = vpack.c.bf16 %v2668, %v2667
    %v2674 = vpack.c.bf16 %v2670, %v2669
    %2675 = vmatprep.subr.bf16.mxu0 0
    %2676 = vmatpush1.bf16.msra.mxu0 %v2671
    %2677 = vmatprep.subr.bf16.mxu0 0
    %2678 = vmatpush1.bf16.msra.mxu0 %v2672
    %2679 = vmatprep.subr.bf16.mxu0 0
    %2680 = vmatpush1.bf16.msra.mxu0 %v2673
    %2681 = vmatprep.subr.bf16.mxu0 0
    %2682 = vmatpush1.bf16.msra.mxu0 %v2674
    %2683 = vmatprep.subr.bf16.mxu0 0
    %2684 = vmatpush1.bf16.msra.mxu0 0
    %2685 = vmatprep.subr.bf16.mxu0 0
    %2686 = vmatpush1.bf16.msra.mxu0 0
    %2687 = vmatprep.subr.bf16.mxu0 0
    %2688 = vmatpush1.bf16.msra.mxu0 0
    %2689 = vmatprep.subr.bf16.mxu0 0
    %2690 = vmatpush1.bf16.msra.mxu0 0
    %2691 = vmatprep.subr.bf16.mxu0 0
    %2692 = vmatpush1.bf16.msra.mxu0 0
    %2693 = vmatprep.subr.bf16.mxu0 0
    %2694 = vmatpush1.bf16.msra.mxu0 0
    %2695 = vmatprep.subr.bf16.mxu0 0
    %2696 = vmatpush1.bf16.msra.mxu0 0
    %2697 = vmatprep.subr.bf16.mxu0 0
    %2698 = vmatpush1.bf16.msra.mxu0 0
    %2699 = vmatprep.subr.bf16.mxu0 0
    %2700 = vmatpush1.bf16.msra.mxu0 0
    %2701 = vmatprep.subr.bf16.mxu0 0
    %2702 = vmatpush1.bf16.msra.mxu0 0
    %2703 = vmatprep.subr.bf16.mxu0 0
    %2704 = vmatpush1.bf16.msra.mxu0 0
    %2705 = vmatprep.subr.bf16.mxu0 0
    %2706 = vmatpush1.bf16.msra.mxu0 0
    %2707 = vmatprep.mubr.bf16.mxu0 0
    %2708 = vmatmul.mubr.bf16.gmra.mrb[0].mxu0 %v1725
    %v2709 = vpop.f32.mrb[0].mxu0
    %v2710 = vadd.f32 0.0, %v2709
    %v2711 = vpop.f32.mrb[0].mxu0
    %v2712 = vpop.f32.mrb[0].mxu0
    %v2713 = vadd.f32 0.0, %v2712
    %v2714 = vpop.f32.mrb[0].mxu0
    %2715 = vmatprep.mubr.bf16.mxu0 0
    %2716 = vmatmul.mubr.bf16.gmra.mrb[0].mxu0 %v1728
    %v2717 = vpop.f32.mrb[0].mxu0
    %v2718 = vadd.f32 0.0, %v2717
    %v2719 = vpop.f32.mrb[0].mxu0
    %v2720 = vpop.f32.mrb[0].mxu0
    %v2721 = vadd.f32 0.0, %v2720
    %v2722 = vpop.f32.mrb[0].mxu0
    %2723 = vmatprep.mubr.bf16.mxu0 0
    %2724 = vmatmul.mubr.bf16.gmra.mrb[0].mxu0 %v1731
    %v2725 = vpop.f32.mrb[0].mxu0
    %v2726 = vadd.f32 0.0, %v2725
    %v2727 = vpop.f32.mrb[0].mxu0
    %v2728 = vpop.f32.mrb[0].mxu0
    %v2729 = vadd.f32 0.0, %v2728
    %v2730 = vpop.f32.mrb[0].mxu0
    %2731 = vmatprep.mubr.bf16.mxu0 0
    %2732 = vmatmul.mubr.bf16.gmra.mrb[0].mxu0 %v1734
    %v2733 = vpop.f32.mrb[0].mxu0
    %v2734 = vadd.f32 0.0, %v2733
    %v2735 = vpop.f32.mrb[0].mxu0
    %v2736 = vpop.f32.mrb[0].mxu0
    %v2737 = vadd.f32 0.0, %v2736
    %v2738 = vpop.f32.mrb[0].mxu0
    %2739 = vdwg.mxu0
    %2740 = vmatprep.subr.bf16.mxu0 0
    %2741 = vmatpush1.bf16.msra.mxu0 %v2671
    %2742 = vmatprep.subr.bf16.mxu0 0
    %2743 = vmatpush1.bf16.msra.mxu0 %v2672
    %2744 = vmatprep.subr.bf16.mxu0 0
    %2745 = vmatpush1.bf16.msra.mxu0 %v2673
    %2746 = vmatprep.subr.bf16.mxu0 0
    %2747 = vmatpush1.bf16.msra.mxu0 %v2674
    %2748 = vmatprep.subr.bf16.mxu0 0
    %2749 = vmatpush1.bf16.msra.mxu0 0
    %2750 = vmatprep.subr.bf16.mxu0 0
    %2751 = vmatpush1.bf16.msra.mxu0 0
    %2752 = vmatprep.subr.bf16.mxu0 0
    %2753 = vmatpush1.bf16.msra.mxu0 0
    %2754 = vmatprep.subr.bf16.mxu0 0
    %2755 = vmatpush1.bf16.msra.mxu0 0
    %2756 = vmatprep.subr.bf16.mxu0 0
    %2757 = vmatpush1.bf16.msra.mxu0 0
    %2758 = vmatprep.subr.bf16.mxu0 0
    %2759 = vmatpush1.bf16.msra.mxu0 0
    %2760 = vmatprep.subr.bf16.mxu0 0
    %2761 = vmatpush1.bf16.msra.mxu0 0
    %2762 = vmatprep.subr.bf16.mxu0 0
    %2763 = vmatpush1.bf16.msra.mxu0 0
    %2764 = vmatprep.subr.bf16.mxu0 0
    %2765 = vmatpush1.bf16.msra.mxu0 0
    %2766 = vmatprep.subr.bf16.mxu0 0
    %2767 = vmatpush1.bf16.msra.mxu0 0
    %2768 = vmatprep.subr.bf16.mxu0 0
    %2769 = vmatpush1.bf16.msra.mxu0 0
    %2770 = vmatprep.subr.bf16.mxu0 0
    %2771 = vmatpush1.bf16.msra.mxu0 0
    %2772 = vmatprep.mubr.bf16.mxu0 0
    %2773 = vmatmul.mubr.bf16.gmra.mrb[0].mxu0 %v1831
    %v2774 = vpop.f32.mrb[0].mxu0
    %v2775 = vadd.f32 0.0, %v2774
    %v2776 = vpop.f32.mrb[0].mxu0
    %v2777 = vpop.f32.mrb[0].mxu0
    %v2778 = vadd.f32 0.0, %v2777
    %v2779 = vpop.f32.mrb[0].mxu0
    %2780 = vmatprep.mubr.bf16.mxu0 0
    %2781 = vmatmul.mubr.bf16.gmra.mrb[0].mxu0 %v1834
    %v2782 = vpop.f32.mrb[0].mxu0
    %v2783 = vadd.f32 0.0, %v2782
    %v2784 = vpop.f32.mrb[0].mxu0
    %v2785 = vpop.f32.mrb[0].mxu0
    %v2786 = vadd.f32 0.0, %v2785
    %v2787 = vpop.f32.mrb[0].mxu0
    %2788 = vmatprep.mubr.bf16.mxu0 0
    %2789 = vmatmul.mubr.bf16.gmra.mrb[0].mxu0 %v1837
    %v2790 = vpop.f32.mrb[0].mxu0
    %v2791 = vadd.f32 0.0, %v2790
    %v2792 = vpop.f32.mrb[0].mxu0
    %v2793 = vpop.f32.mrb[0].mxu0
    %v2794 = vadd.f32 0.0, %v2793
    %v2795 = vpop.f32.mrb[0].mxu0
    %2796 = vmatprep.mubr.bf16.mxu0 0
    %2797 = vmatmul.mubr.bf16.gmra.mrb[0].mxu0 %v1840
    %v2798 = vpop.f32.mrb[0].mxu0
    %v2799 = vadd.f32 0.0, %v2798
    %v2800 = vpop.f32.mrb[0].mxu0
    %v2801 = vpop.f32.mrb[0].mxu0
    %v2802 = vadd.f32 0.0, %v2801
    %v2803 = vpop.f32.mrb[0].mxu0
    %2804 = vdwg.mxu0
    %2805 = vmatprep.subr.bf16.mxu0 0
    %2806 = vmatpush1.bf16.msra.mxu0 %v2671
    %2807 = vmatprep.subr.bf16.mxu0 0
    %2808 = vmatpush1.bf16.msra.mxu0 %v2672
    %2809 = vmatprep.subr.bf16.mxu0 0
    %2810 = vmatpush1.bf16.msra.mxu0 %v2673
    %2811 = vmatprep.subr.bf16.mxu0 0
    %2812 = vmatpush1.bf16.msra.mxu0 %v2674
    %2813 = vmatprep.subr.bf16.mxu0 0
    %2814 = vmatpush1.bf16.msra.mxu0 0
    %2815 = vmatprep.subr.bf16.mxu0 0
    %2816 = vmatpush1.bf16.msra.mxu0 0
    %2817 = vmatprep.subr.bf16.mxu0 0
    %2818 = vmatpush1.bf16.msra.mxu0 0
    %2819 = vmatprep.subr.bf16.mxu0 0
    %2820 = vmatpush1.bf16.msra.mxu0 0
    %2821 = vmatprep.subr.bf16.mxu0 0
    %2822 = vmatpush1.bf16.msra.mxu0 0
    %2823 = vmatprep.subr.bf16.mxu0 0
    %2824 = vmatpush1.bf16.msra.mxu0 0
    %2825 = vmatprep.subr.bf16.mxu0 0
    %2826 = vmatpush1.bf16.msra.mxu0 0
    %2827 = vmatprep.subr.bf16.mxu0 0
    %2828 = vmatpush1.bf16.msra.mxu0 0
    %2829 = vmatprep.subr.bf16.mxu0 0
    %2830 = vmatpush1.bf16.msra.mxu0 0
    %2831 = vmatprep.subr.bf16.mxu0 0
    %2832 = vmatpush1.bf16.msra.mxu0 0
    %2833 = vmatprep.subr.bf16.mxu0 0
    %2834 = vmatpush1.bf16.msra.mxu0 0
    %2835 = vmatprep.subr.bf16.mxu0 0
    %2836 = vmatpush1.bf16.msra.mxu0 0
    %2837 = vmatprep.mubr.bf16.mxu0 0
    %2838 = vmatmul.mubr.bf16.gmra.mrb[0].mxu0 %v1937
    %v2839 = vpop.f32.mrb[0].mxu0
    %v2840 = vadd.f32 0.0, %v2839
    %v2841 = vpop.f32.mrb[0].mxu0
    %v2842 = vpop.f32.mrb[0].mxu0
    %v2843 = vadd.f32 0.0, %v2842
    %v2844 = vpop.f32.mrb[0].mxu0
    %2845 = vmatprep.mubr.bf16.mxu0 0
    %2846 = vmatmul.mubr.bf16.gmra.mrb[0].mxu0 %v1940
    %v2847 = vpop.f32.mrb[0].mxu0
    %v2848 = vadd.f32 0.0, %v2847
    %v2849 = vpop.f32.mrb[0].mxu0
    %v2850 = vpop.f32.mrb[0].mxu0
    %v2851 = vadd.f32 0.0, %v2850
    %v2852 = vpop.f32.mrb[0].mxu0
    %2853 = vmatprep.mubr.bf16.mxu0 0
    %2854 = vmatmul.mubr.bf16.gmra.mrb[0].mxu0 %v1943
    %v2855 = vpop.f32.mrb[0].mxu0
    %v2856 = vadd.f32 0.0, %v2855
    %v2857 = vpop.f32.mrb[0].mxu0
    %v2858 = vpop.f32.mrb[0].mxu0
    %v2859 = vadd.f32 0.0, %v2858
    %v2860 = vpop.f32.mrb[0].mxu0
    %2861 = vmatprep.mubr.bf16.mxu0 0
    %2862 = vmatmul.mubr.bf16.gmra.mrb[0].mxu0 %v1946
    %v2863 = vpop.f32.mrb[0].mxu0
    %v2864 = vadd.f32 0.0, %v2863
    %v2865 = vpop.f32.mrb[0].mxu0
    %v2866 = vpop.f32.mrb[0].mxu0
    %v2867 = vadd.f32 0.0, %v2866
    %v2868 = vpop.f32.mrb[0].mxu0
    %2869 = vdwg.mxu0
    %2878 = vrot.lane.b32.xlu0 %v2775, 32
    %v2879 = vpop.permute.xlu0 %2878
    %2880 = vrot.lane.b32.xlu0 %v2778, 32
    %v2881 = vpop.permute.xlu0 %2880
    %2882 = vrot.lane.b32.xlu0 %v2783, 32
    %v2883 = vpop.permute.xlu0 %2882
    %2884 = vrot.lane.b32.xlu0 %v2786, 32
    %v2885 = vpop.permute.xlu0 %2884
    %2886 = vrot.lane.b32.xlu0 %v2791, 32
    %v2887 = vpop.permute.xlu0 %2886
    %2888 = vrot.lane.b32.xlu0 %v2794, 32
    %v2889 = vpop.permute.xlu0 %2888
    %2890 = vrot.lane.b32.xlu0 %v2799, 32
    %v2891 = vpop.permute.xlu0 %2890
    %2892 = vrot.lane.b32.xlu0 %v2802, 32
    %v2893 = vpop.permute.xlu0 %2892
    %2910 = vrot.lane.b32.xlu0 %v2840, 64
    %v2911 = vpop.permute.xlu0 %2910
    %2912 = vrot.lane.b32.xlu0 %v2843, 64
    %v2913 = vpop.permute.xlu0 %2912
    %2914 = vrot.lane.b32.xlu0 %v2848, 64
    %v2915 = vpop.permute.xlu0 %2914
    %2916 = vrot.lane.b32.xlu0 %v2851, 64
    %v2917 = vpop.permute.xlu0 %2916
    %2918 = vrot.lane.b32.xlu0 %v2856, 64
    %v2919 = vpop.permute.xlu0 %2918
    %2920 = vrot.lane.b32.xlu0 %v2859, 64
    %v2921 = vpop.permute.xlu0 %2920
    %2922 = vrot.lane.b32.xlu0 %v2864, 64
    %v2923 = vpop.permute.xlu0 %2922
    %2924 = vrot.lane.b32.xlu0 %v2867, 64
    %v2925 = vpop.permute.xlu0 %2924
    %2942 = vrot.lane.b32.xlu0 %v2663, 96
    %v2943 = vpop.permute.xlu0 %2942
    %2944 = vrot.lane.b32.xlu0 %v2664, 96
    %v2945 = vpop.permute.xlu0 %2944
    %2946 = vrot.lane.b32.xlu0 %v2665, 96
    %v2947 = vpop.permute.xlu0 %2946
    %2948 = vrot.lane.b32.xlu0 %v2666, 96
    %v2949 = vpop.permute.xlu0 %2948
    %2950 = vrot.lane.b32.xlu0 %v2667, 96
    %v2951 = vpop.permute.xlu0 %2950
    %2952 = vrot.lane.b32.xlu0 %v2668, 96
    %v2953 = vpop.permute.xlu0 %2952
    %2954 = vrot.lane.b32.xlu0 %v2669, 96
    %v2955 = vpop.permute.xlu0 %2954
    %2956 = vrot.lane.b32.xlu0 %v2670, 96
    %v2957 = vpop.permute.xlu0 %2956
    %v2966 = vsel %vm497, %v2710, %v2879
    %v2967 = vsel %vm497, %v2713, %v2881
    %v2968 = vsel %vm497, %v2718, %v2883
    %v2969 = vsel %vm497, %v2721, %v2885
    %v2970 = vsel %vm497, %v2726, %v2887
    %v2971 = vsel %vm497, %v2729, %v2889
    %v2972 = vsel %vm497, %v2734, %v2891
    %v2973 = vsel %vm497, %v2737, %v2893
    %v2974 = vsel %vm111, %v2966, %v2911
    %v2975 = vsel %vm111, %v2967, %v2913
    %v2976 = vsel %vm111, %v2968, %v2915
    %v2977 = vsel %vm111, %v2969, %v2917
    %v2978 = vsel %vm111, %v2970, %v2919
    %v2979 = vsel %vm111, %v2971, %v2921
    %v2980 = vsel %vm111, %v2972, %v2923
    %v2981 = vsel %vm111, %v2973, %v2925
    %v2982 = vsel %vm514, %v2974, %v2943
    %v2983 = vsel %vm514, %v2975, %v2945
    %v2984 = vsel %vm514, %v2976, %v2947
    %v2985 = vsel %vm514, %v2977, %v2949
    %v2986 = vsel %vm514, %v2978, %v2951
    %v2987 = vsel %vm514, %v2979, %v2953
    %v2988 = vsel %vm514, %v2980, %v2955
    %v2989 = vsel %vm514, %v2981, %v2957
    %v2990 = vpack.c.bf16 %v2983, %v2982
    %v2991 = vpack.c.bf16 %v2985, %v2984
    %v2992 = vpack.c.bf16 %v2987, %v2986
    %v2993 = vpack.c.bf16 %v2989, %v2988
    %2994 = vmatprep.subr.bf16.mxu0 0
    %2995 = vmatpush1.bf16.msra.mxu0 %v2582
    %2996 = vmatprep.subr.bf16.mxu0 0
    %2997 = vmatpush1.bf16.msra.mxu0 %v2583
    %2998 = vmatprep.subr.bf16.mxu0 0
    %2999 = vmatpush1.bf16.msra.mxu0 %v2584
    %3000 = vmatprep.subr.bf16.mxu0 0
    %3001 = vmatpush1.bf16.msra.mxu0 %v2585
    %3002 = vmatprep.subr.bf16.mxu0 0
    %3003 = vmatpush1.bf16.msra.mxu0 %v2586
    %3004 = vmatprep.subr.bf16.mxu0 0
    %3005 = vmatpush1.bf16.msra.mxu0 %v2587
    %3006 = vmatprep.subr.bf16.mxu0 0
    %3007 = vmatpush1.bf16.msra.mxu0 %v2588
    %3008 = vmatprep.subr.bf16.mxu0 0
    %3009 = vmatpush1.bf16.msra.mxu0 %v2589
    %3010 = vmatprep.subr.bf16.mxu0 0
    %3011 = vmatpush1.bf16.msra.mxu0 0
    %3012 = vmatprep.subr.bf16.mxu0 0
    %3013 = vmatpush1.bf16.msra.mxu0 0
    %3014 = vmatprep.subr.bf16.mxu0 0
    %3015 = vmatpush1.bf16.msra.mxu0 0
    %3016 = vmatprep.subr.bf16.mxu0 0
    %3017 = vmatpush1.bf16.msra.mxu0 0
    %3018 = vmatprep.subr.bf16.mxu0 0
    %3019 = vmatpush1.bf16.msra.mxu0 0
    %3020 = vmatprep.subr.bf16.mxu0 0
    %3021 = vmatpush1.bf16.msra.mxu0 0
    %3022 = vmatprep.subr.bf16.mxu0 0
    %3023 = vmatpush1.bf16.msra.mxu0 0
    %3024 = vmatprep.subr.bf16.mxu0 0
    %3025 = vmatpush1.bf16.msra.mxu0 0
    %3026 = vmatprep.mubr.bf16.mxu0 0
    %3027 = vmatmul.mubr.bf16.gmra.mrb[0].mxu0 %v2990
    %v3028 = vpop.f32.mrb[0].mxu0
    %v3029 = vadd.f32 0.0, %v3028
    %v3030 = vpop.f32.mrb[0].mxu0
    %v3031 = vpop.f32.mrb[0].mxu0
    %v3032 = vadd.f32 0.0, %v3031
    %v3033 = vpop.f32.mrb[0].mxu0
    %3034 = vmatprep.mubr.bf16.mxu0 0
    %3035 = vmatmul.mubr.bf16.gmra.mrb[0].mxu0 %v2991
    %v3036 = vpop.f32.mrb[0].mxu0
    %v3037 = vadd.f32 0.0, %v3036
    %v3038 = vpop.f32.mrb[0].mxu0
    %v3039 = vpop.f32.mrb[0].mxu0
    %v3040 = vadd.f32 0.0, %v3039
    %v3041 = vpop.f32.mrb[0].mxu0
    %3042 = vmatprep.mubr.bf16.mxu0 0
    %3043 = vmatmul.mubr.bf16.gmra.mrb[0].mxu0 %v2992
    %v3044 = vpop.f32.mrb[0].mxu0
    %v3045 = vadd.f32 0.0, %v3044
    %v3046 = vpop.f32.mrb[0].mxu0
    %v3047 = vpop.f32.mrb[0].mxu0
    %v3048 = vadd.f32 0.0, %v3047
    %v3049 = vpop.f32.mrb[0].mxu0
    %3050 = vmatprep.mubr.bf16.mxu0 0
    %3051 = vmatmul.mubr.bf16.gmra.mrb[0].mxu0 %v2993
    %v3052 = vpop.f32.mrb[0].mxu0
    %v3053 = vadd.f32 0.0, %v3052
    %v3054 = vpop.f32.mrb[0].mxu0
    %v3055 = vpop.f32.mrb[0].mxu0
    %v3056 = vadd.f32 0.0, %v3055
    %v3057 = vpop.f32.mrb[0].mxu0
    %3058 = vdwg.mxu0
    %v3059 = vtanh.pop %v3029
    %v3060 = vtanh.pop %v3032
    %v3061 = vtanh.pop %v3037
    %v3062 = vtanh.pop %v3040
    %v3063 = vtanh.pop %v3045
    %v3064 = vtanh.pop %v3048
    %v3065 = vtanh.pop %v3053
    %v3066 = vtanh.pop %v3056
    %3067 = vrot.lane.b32.xlu0 %v1101, 32
    %v3068 = vpop.permute.xlu0 %3067
    %3069 = vrot.lane.b32.xlu0 %v1102, 32
    %v3070 = vpop.permute.xlu0 %3069
    %3071 = vrot.lane.b32.xlu0 %v1103, 32
    %v3072 = vpop.permute.xlu0 %3071
    %3073 = vrot.lane.b32.xlu0 %v1104, 32
    %v3074 = vpop.permute.xlu0 %3073
    %3075 = vrot.lane.b32.xlu0 %v1105, 32
    %v3076 = vpop.permute.xlu0 %3075
    %3077 = vrot.lane.b32.xlu0 %v1106, 32
    %v3078 = vpop.permute.xlu0 %3077
    %3079 = vrot.lane.b32.xlu0 %v1107, 32
    %v3080 = vpop.permute.xlu0 %3079
    %3081 = vrot.lane.b32.xlu0 %v1108, 32
    %v3082 = vpop.permute.xlu0 %3081
    %3091 = vrot.lane.b32.xlu0 %v2202, 64
    %v3092 = vpop.permute.xlu0 %3091
    %3093 = vrot.lane.b32.xlu0 %v2203, 64
    %v3094 = vpop.permute.xlu0 %3093
    %3095 = vrot.lane.b32.xlu0 %v2204, 64
    %v3096 = vpop.permute.xlu0 %3095
    %3097 = vrot.lane.b32.xlu0 %v2205, 64
    %v3098 = vpop.permute.xlu0 %3097
    %3099 = vrot.lane.b32.xlu0 %v2206, 64
    %v3100 = vpop.permute.xlu0 %3099
    %3101 = vrot.lane.b32.xlu0 %v2207, 64
    %v3102 = vpop.permute.xlu0 %3101
    %3103 = vrot.lane.b32.xlu0 %v2208, 64
    %v3104 = vpop.permute.xlu0 %3103
    %3105 = vrot.lane.b32.xlu0 %v2209, 64
    %v3106 = vpop.permute.xlu0 %3105
    %3123 = vrot.lane.b32.xlu0 %v3059, 96
    %v3124 = vpop.permute.xlu0 %3123
    %3125 = vrot.lane.b32.xlu0 %v3060, 96
    %v3126 = vpop.permute.xlu0 %3125
    %3127 = vrot.lane.b32.xlu0 %v3061, 96
    %v3128 = vpop.permute.xlu0 %3127
    %3129 = vrot.lane.b32.xlu0 %v3062, 96
    %v3130 = vpop.permute.xlu0 %3129
    %3131 = vrot.lane.b32.xlu0 %v3063, 96
    %v3132 = vpop.permute.xlu0 %3131
    %3133 = vrot.lane.b32.xlu0 %v3064, 96
    %v3134 = vpop.permute.xlu0 %3133
    %3135 = vrot.lane.b32.xlu0 %v3065, 96
    %v3136 = vpop.permute.xlu0 %3135
    %3137 = vrot.lane.b32.xlu0 %v3066, 96
    %v3138 = vpop.permute.xlu0 %3137
    %v3147 = vsel %vm497, %v640, %v3068
    %v3148 = vsel %vm497, %v641, %v3070
    %v3149 = vsel %vm497, %v642, %v3072
    %v3150 = vsel %vm497, %v643, %v3074
    %v3151 = vsel %vm497, %v644, %v3076
    %v3152 = vsel %vm497, %v645, %v3078
    %v3153 = vsel %vm497, %v646, %v3080
    %v3154 = vsel %vm497, %v647, %v3082
    %v3155 = vsel %vm111, %v3147, %v3092
    %v3156 = vsel %vm111, %v3148, %v3094
    %v3157 = vsel %vm111, %v3149, %v3096
    %v3158 = vsel %vm111, %v3150, %v3098
    %v3159 = vsel %vm111, %v3151, %v3100
    %v3160 = vsel %vm111, %v3152, %v3102
    %v3161 = vsel %vm111, %v3153, %v3104
    %v3162 = vsel %vm111, %v3154, %v3106
    %v3163 = vsel %vm514, %v3155, %v3124
    %v3164 = vsel %vm514, %v3156, %v3126
    %v3165 = vsel %vm514, %v3157, %v3128
    %v3166 = vsel %vm514, %v3158, %v3130
    %v3167 = vsel %vm514, %v3159, %v3132
    %v3168 = vsel %vm514, %v3160, %v3134
    %v3169 = vsel %vm514, %v3161, %v3136
    %v3170 = vsel %vm514, %v3162, %v3138
    %v3171 = vld [vmem:[%s5] sm:$0x3]
    %v3172 = vlaneseq
    %v3173 = vand.u32 %v3172, 127
    %3174 = vset.pattern.permute.xlu0 0
    %3175 = vperm.xlu0 %3174, %v3171
    %v3176 = vpop.permute.xlu0 %3175
    %vm3177 = vcmp.eq.s32.totalorder %v3173, %v3176
    %v3178 = vsel %vm3177, 1, 0
    %v3179 = vcvt.s32.f32 %v3178
    %v3181 = vsel %vm111, %v3179, 0
    %3183 = vmatprep.subr.mxu0 0.0
    %3184 = vmatpush1.msra.mxu0 %v3163
    %3185 = vmatprep.subr.mxu0 0.0
    %3186 = vmatpush1.msra.mxu0 %v3164
    %3187 = vmatprep.subr.mxu0 0.0
    %3188 = vmatpush1.msra.mxu0 %v3165
    %3189 = vmatprep.subr.mxu0 0.0
    %3190 = vmatpush1.msra.mxu0 %v3166
    %3191 = vmatprep.subr.mxu0 0.0
    %3192 = vmatpush1.msra.mxu0 %v3167
    %3193 = vmatprep.subr.mxu0 0.0
    %3194 = vmatpush1.msra.mxu0 %v3168
    %3195 = vmatprep.subr.mxu0 0.0
    %3196 = vmatpush1.msra.mxu0 %v3169
    %3197 = vmatprep.subr.mxu0 0.0
    %3198 = vmatpush1.msra.mxu0 %v3170
    %3199 = vmatprep.subr.mxu0 0.0
    %3200 = vmatpush1.msra.mxu0 0.0
    %3201 = vmatprep.subr.mxu0 0.0
    %3202 = vmatpush1.msra.mxu0 0.0
    %3203 = vmatprep.subr.mxu0 0.0
    %3204 = vmatpush1.msra.mxu0 0.0
    %3205 = vmatprep.subr.mxu0 0.0
    %3206 = vmatpush1.msra.mxu0 0.0
    %3207 = vmatprep.subr.mxu0 0.0
    %3208 = vmatpush1.msra.mxu0 0.0
    %3209 = vmatprep.subr.mxu0 0.0
    %3210 = vmatpush1.msra.mxu0 0.0
    %3211 = vmatprep.subr.mxu0 0.0
    %3212 = vmatpush1.msra.mxu0 0.0
    %3213 = vmatprep.subr.mxu0 0.0
    %3214 = vmatpush1.msra.mxu0 0.0
    %3215 = vmatprep.subr.mxu0 0.0
    %3216 = vmatpush1.msra.mxu0 0.0
    %3217 = vmatprep.subr.mxu0 0.0
    %3218 = vmatpush1.msra.mxu0 0.0
    %3219 = vmatprep.subr.mxu0 0.0
    %3220 = vmatpush1.msra.mxu0 0.0
    %3221 = vmatprep.subr.mxu0 0.0
    %3222 = vmatpush1.msra.mxu0 0.0
    %3223 = vmatprep.subr.mxu0 0.0
    %3224 = vmatpush1.msra.mxu0 0.0
    %3225 = vmatprep.subr.mxu0 0.0
    %3226 = vmatpush1.msra.mxu0 0.0
    %3227 = vmatprep.subr.mxu0 0.0
    %3228 = vmatpush1.msra.mxu0 0.0
    %3229 = vmatprep.subr.mxu0 0.0
    %3230 = vmatpush1.msra.mxu0 0.0
    %3231 = vmatprep.subr.mxu0 0.0
    %3232 = vmatpush1.msra.mxu0 0.0
    %3233 = vmatprep.subr.mxu0 0.0
    %3234 = vmatpush1.msra.mxu0 0.0
    %3235 = vmatprep.subr.mxu0 0.0
    %3236 = vmatpush1.msra.mxu0 0.0
    %3237 = vmatprep.subr.mxu0 0.0
    %3238 = vmatpush1.msra.mxu0 0.0
    %3239 = vmatprep.subr.mxu0 0.0
    %3240 = vmatpush1.msra.mxu0 0.0
    %3241 = vmatprep.subr.mxu0 0.0
    %3242 = vmatpush1.msra.mxu0 0.0
    %3243 = vmatprep.subr.mxu0 0.0
    %3244 = vmatpush1.msra.mxu0 0.0
    %3245 = vmatprep.subr.mxu0 0.0
    %3246 = vmatpush1.msra.mxu0 0.0
    %3247 = vmatprep.mubr.f32.mxu0 0.0
    %3248 = vmatmul.mubr.f32.gmra.mrb[0].mxu0 %v3181
    %v3249 = vpop.f32.mrb[0].mxu0
    %v3250 = vadd.f32 0.0, %v3249
    %v3251 = vpop.f32.mrb[0].mxu0
    %3252 = vdwg.mxu0
    %v3253 = vld [vmem:[%s6] sm:$0xff]
    %v3254 = vld [vmem:[%s6 + $0x8] sm:$0xff]
    %3255 = vset.pattern.permute.xlu0 0
    %3256 = vperm.xlu0 %3255, %v3253
    %v3257 = vpop.permute.xlu0 %3256
    %3258 = vset.pattern.permute.xlu0 0
    %3259 = vperm.xlu0 %3258, %v3254
    %v3260 = vpop.permute.xlu0 %3259
    %vm3261 = vcmp.eq.s32.totalorder %v3173, %v3257
    %vm3262 = vcmp.eq.s32.totalorder %v3173, %v3260
    %v3263 = vsel %vm3261, 1, 0
    %v3264 = vsel %vm3262, 1, 0
    %v3265 = vcvt.s32.f32 %v3263
    %v3266 = vcvt.s32.f32 %v3264
    %v3268 = vsel %vm111, %v3265, 0
    %v3271 = vsel %vm111, %v3266, 0
    %3273 = vmatprep.subr.mxu0 0.0
    %3274 = vmatpush1.msra.mxu0 %v3163
    %3275 = vmatprep.subr.mxu0 0.0
    %3276 = vmatpush1.msra.mxu0 %v3164
    %3277 = vmatprep.subr.mxu0 0.0
    %3278 = vmatpush1.msra.mxu0 %v3165
    %3279 = vmatprep.subr.mxu0 0.0
    %3280 = vmatpush1.msra.mxu0 %v3166
    %3281 = vmatprep.subr.mxu0 0.0
    %3282 = vmatpush1.msra.mxu0 %v3167
    %3283 = vmatprep.subr.mxu0 0.0
    %3284 = vmatpush1.msra.mxu0 %v3168
    %3285 = vmatprep.subr.mxu0 0.0
    %3286 = vmatpush1.msra.mxu0 %v3169
    %3287 = vmatprep.subr.mxu0 0.0
    %3288 = vmatpush1.msra.mxu0 %v3170
    %3289 = vmatprep.subr.mxu0 0.0
    %3290 = vmatpush1.msra.mxu0 0.0
    %3291 = vmatprep.subr.mxu0 0.0
    %3292 = vmatpush1.msra.mxu0 0.0
    %3293 = vmatprep.subr.mxu0 0.0
    %3294 = vmatpush1.msra.mxu0 0.0
    %3295 = vmatprep.subr.mxu0 0.0
    %3296 = vmatpush1.msra.mxu0 0.0
    %3297 = vmatprep.subr.mxu0 0.0
    %3298 = vmatpush1.msra.mxu0 0.0
    %3299 = vmatprep.subr.mxu0 0.0
    %3300 = vmatpush1.msra.mxu0 0.0
    %3301 = vmatprep.subr.mxu0 0.0
    %3302 = vmatpush1.msra.mxu0 0.0
    %3303 = vmatprep.subr.mxu0 0.0
    %3304 = vmatpush1.msra.mxu0 0.0
    %3305 = vmatprep.subr.mxu0 0.0
    %3306 = vmatpush1.msra.mxu0 0.0
    %3307 = vmatprep.subr.mxu0 0.0
    %3308 = vmatpush1.msra.mxu0 0.0
    %3309 = vmatprep.subr.mxu0 0.0
    %3310 = vmatpush1.msra.mxu0 0.0
    %3311 = vmatprep.subr.mxu0 0.0
    %3312 = vmatpush1.msra.mxu0 0.0
    %3313 = vmatprep.subr.mxu0 0.0
    %3314 = vmatpush1.msra.mxu0 0.0
    %3315 = vmatprep.subr.mxu0 0.0
    %3316 = vmatpush1.msra.mxu0 0.0
    %3317 = vmatprep.subr.mxu0 0.0
    %3318 = vmatpush1.msra.mxu0 0.0
    %3319 = vmatprep.subr.mxu0 0.0
    %3320 = vmatpush1.msra.mxu0 0.0
    %3321 = vmatprep.subr.mxu0 0.0
    %3322 = vmatpush1.msra.mxu0 0.0
    %3323 = vmatprep.subr.mxu0 0.0
    %3324 = vmatpush1.msra.mxu0 0.0
    %3325 = vmatprep.subr.mxu0 0.0
    %3326 = vmatpush1.msra.mxu0 0.0
    %3327 = vmatprep.subr.mxu0 0.0
    %3328 = vmatpush1.msra.mxu0 0.0
    %3329 = vmatprep.subr.mxu0 0.0
    %3330 = vmatpush1.msra.mxu0 0.0
    %3331 = vmatprep.subr.mxu0 0.0
    %3332 = vmatpush1.msra.mxu0 0.0
    %3333 = vmatprep.subr.mxu0 0.0
    %3334 = vmatpush1.msra.mxu0 0.0
    %3335 = vmatprep.subr.mxu0 0.0
    %3336 = vmatpush1.msra.mxu0 0.0
    %3337 = vmatprep.mubr.f32.mxu0 0.0
    %3338 = vmatmul.mubr.f32.gmra.mrb[0].mxu0 %v3268
    %v3339 = vpop.f32.mrb[0].mxu0
    %v3340 = vadd.f32 0.0, %v3339
    %v3341 = vpop.f32.mrb[0].mxu0
    %3342 = vmatprep.mubr.f32.mxu0 0.0
    %3343 = vmatmul.mubr.f32.gmra.mrb[0].mxu0 %v3271
    %v3344 = vpop.f32.mrb[0].mxu0
    %v3345 = vadd.f32 0.0, %v3344
    %v3346 = vpop.f32.mrb[0].mxu0
    %3347 = vdwg.mxu0
    %3348 = vst [vmem:[#allocation6] sm:$0x3] %v3250
    %3349 = vst [vmem:[#allocation8] sm:$0xff] %v3340
    %3350 = vst [vmem:[#allocation8 + $0x8] sm:$0xff] %v3345
    %v3351 = vrot.slane %v3340, 4
    %v3352 = vadd.f32 %v3340, %v3351
    %v3353 = vrot.slane %v3352, 2
    %v3354 = vadd.f32 %v3352, %v3353
    %v3355 = vrot.slane %v3354, 1
    %v3356 = vadd.f32 %v3354, %v3355
    %v3357 = vrot.slane %v3345, 4
    %v3358 = vadd.f32 %v3345, %v3357
    %v3359 = vrot.slane %v3358, 2
    %v3360 = vadd.f32 %v3358, %v3359
    %v3361 = vrot.slane %v3360, 1
    %v3362 = vadd.f32 %v3360, %v3361
    %v3363 = vld [vmem:[%s9] sm:$0xff]
    %v3364 = vld [vmem:[%s9 + $0x8] sm:$0xff]
    %v3365 = vld [vmem:[%s9 + $0x10] sm:$0xff]
    %v3366 = vld [vmem:[%s9 + $0x18] sm:$0xff]
    %v3367 = vld [vmem:[%s9 + $0x20] sm:$0xff]
    %v3368 = vld [vmem:[%s9 + $0x28] sm:$0xff]
    %v3369 = vld [vmem:[%s9 + $0x30] sm:$0xff]
    %v3370 = vld [vmem:[%s9 + $0x38] sm:$0xff]
    %v3371 = vld [vmem:[%s9 + $0x40] sm:$0xff]
    %v3372 = vld [vmem:[%s9 + $0x48] sm:$0xff]
    %v3373 = vld [vmem:[%s9 + $0x50] sm:$0xff]
    %v3374 = vld [vmem:[%s9 + $0x58] sm:$0xff]
    %v3375 = vld [vmem:[%s9 + $0x60] sm:$0xff]
    %v3376 = vld [vmem:[%s9 + $0x68] sm:$0xff]
    %v3377 = vld [vmem:[%s9 + $0x70] sm:$0xff]
    %v3378 = vld [vmem:[%s9 + $0x78] sm:$0xff]
    %vm3381 = vcmask 1041409
    %v3382 = vsel %vm3381, %v3362, %v3356
    %3384 = vmatprep.subr.mxu0 0.0
    %3385 = vmatpush1.msra.mxu0 %v3363
    %3386 = vmatprep.subr.mxu0 0.0
    %3387 = vmatpush1.msra.mxu0 %v3364
    %3388 = vmatprep.subr.mxu0 0.0
    %3389 = vmatpush1.msra.mxu0 %v3365
    %3390 = vmatprep.subr.mxu0 0.0
    %3391 = vmatpush1.msra.mxu0 %v3366
    %3392 = vmatprep.subr.mxu0 0.0
    %3393 = vmatpush1.msra.mxu0 %v3367
    %3394 = vmatprep.subr.mxu0 0.0
    %3395 = vmatpush1.msra.mxu0 %v3368
    %3396 = vmatprep.subr.mxu0 0.0
    %3397 = vmatpush1.msra.mxu0 %v3369
    %3398 = vmatprep.subr.mxu0 0.0
    %3399 = vmatpush1.msra.mxu0 %v3370
    %3400 = vmatprep.subr.mxu0 0.0
    %3401 = vmatpush1.msra.mxu0 %v3371
    %3402 = vmatprep.subr.mxu0 0.0
    %3403 = vmatpush1.msra.mxu0 %v3372
    %3404 = vmatprep.subr.mxu0 0.0
    %3405 = vmatpush1.msra.mxu0 %v3373
    %3406 = vmatprep.subr.mxu0 0.0
    %3407 = vmatpush1.msra.mxu0 %v3374
    %3408 = vmatprep.subr.mxu0 0.0
    %3409 = vmatpush1.msra.mxu0 %v3375
    %3410 = vmatprep.subr.mxu0 0.0
    %3411 = vmatpush1.msra.mxu0 %v3376
    %3412 = vmatprep.subr.mxu0 0.0
    %3413 = vmatpush1.msra.mxu0 %v3377
    %3414 = vmatprep.subr.mxu0 0.0
    %3415 = vmatpush1.msra.mxu0 %v3378
    %3416 = vmatprep.subr.mxu0 0.0
    %3417 = vmatpush1.msra.mxu0 0.0
    %3418 = vmatprep.subr.mxu0 0.0
    %3419 = vmatpush1.msra.mxu0 0.0
    %3420 = vmatprep.subr.mxu0 0.0
    %3421 = vmatpush1.msra.mxu0 0.0
    %3422 = vmatprep.subr.mxu0 0.0
    %3423 = vmatpush1.msra.mxu0 0.0
    %3424 = vmatprep.subr.mxu0 0.0
    %3425 = vmatpush1.msra.mxu0 0.0
    %3426 = vmatprep.subr.mxu0 0.0
    %3427 = vmatpush1.msra.mxu0 0.0
    %3428 = vmatprep.subr.mxu0 0.0
    %3429 = vmatpush1.msra.mxu0 0.0
    %3430 = vmatprep.subr.mxu0 0.0
    %3431 = vmatpush1.msra.mxu0 0.0
    %3432 = vmatprep.subr.mxu0 0.0
    %3433 = vmatpush1.msra.mxu0 0.0
    %3434 = vmatprep.subr.mxu0 0.0
    %3435 = vmatpush1.msra.mxu0 0.0
    %3436 = vmatprep.subr.mxu0 0.0
    %3437 = vmatpush1.msra.mxu0 0.0
    %3438 = vmatprep.subr.mxu0 0.0
    %3439 = vmatpush1.msra.mxu0 0.0
    %3440 = vmatprep.subr.mxu0 0.0
    %3441 = vmatpush1.msra.mxu0 0.0
    %3442 = vmatprep.subr.mxu0 0.0
    %3443 = vmatpush1.msra.mxu0 0.0
    %3444 = vmatprep.subr.mxu0 0.0
    %3445 = vmatpush1.msra.mxu0 0.0
    %3446 = vmatprep.subr.mxu0 0.0
    %3447 = vmatpush1.msra.mxu0 0.0
    %3448 = vmatprep.mubr.f32.mxu0 0.0
    %3449 = vmatmul.mubr.f32.gmra.mrb[0].mxu0 %v3382
    %v3450 = vpop.f32.mrb[0].mxu0
    %v3451 = vadd.f32 0.0, %v3450
    %v3452 = vpop.f32.mrb[0].mxu0
    %3453 = vdwg.mxu0
    %v3454 = vld [vmem:[#allocation2] sm:$0xff]
    %v3455 = vld [vmem:[#allocation2 + $0x8] sm:$0xff]
    %v3456 = vadd.f32 %v3250, %v3451
    %v3459 = vunpack.c.l.s4 1966171168
    %v3460 = vunpack.c.0.s8 %v3459
    %v3461 = vlaneseq
    %v3462 = vshrl.u32 %v3461, 7
    %v3463 = vsub.s32 %v3460, %v3462
    %v3464 = vrot.slane %v3456, %v3463
    %v3465 = vcombine.high %v3464, %v3464
    %v3467 = vunpack.c.l.s4 1966171168
    %v3468 = vunpack.c.0.s8 %v3467
    %v3469 = vlaneseq
    %v3470 = vshrl.u32 %v3469, 7
    %v3471 = vsub.s32 %v3468, %v3470
    %v3472 = vrot.slane %v3464, %v3471
    %v3474 = vunpack.c.l.s4 1966171168
    %v3475 = vunpack.c.0.s8 %v3474
    %v3476 = vlaneseq
    %v3477 = vshrl.u32 %v3476, 7
    %v3478 = vsub.s32 %v3475, %v3477
    %v3479 = vrot.slane %v3465, %v3478
    %v3480 = vlaneseq
    %v3481 = vshrl.u32 %v3480, 7
    %v3482 = vsub.s32 0, %v3481
    %v3483 = vrot.slane %v3472, %v3482
    %v3484 = vlaneseq
    %v3485 = vshrl.u32 %v3484, 7
    %v3486 = vsub.s32 0, %v3485
    %v3487 = vrot.slane %v3479, %v3486
    %v3490 = vmul.f32 %v3483, %v3454
    %v3491 = vmul.f32 %v3487, %v3455
    %3492 = vadd.xlane.f32.xlu0 %v3490
    %v3493 = vpop.xlane.xlu0 %3492
    %3494 = vadd.xlane.f32.xlu0 %v3491
    %v3495 = vpop.xlane.xlu0 %3494
    %v3496 = vld [vmem:[%s8] sm:$0x3]
    %v3498 = vlaneseq
    %v3499 = vshrl.u32 %v3498, 7
    %v3500 = vsub.s32 0, %v3499
    %v3501 = vrot.slane %v3496, %v3500
    %3503 = vbcast.lane.b32.xlu0 %v3501, 256
    %v3504 = vpop.permute.xlu0 %3503
    %v3505 = vlaneseq
    %v3506 = vshrl.u32 %v3505, 7
    %v3507 = vsub.s32 1, %v3506
    %v3508 = vrot.slane %v3496, %v3507
    %3510 = vbcast.lane.b32.xlu0 %v3508, 256
    %v3511 = vpop.permute.xlu0 %3510
    %v3514 = vadd.f32 %v3493, %v3504
    %v3515 = vadd.f32 %v3495, %v3511
    %3518 = vset.pattern.permute.xlu0 0
    %3519 = vperm.xlu0 %3518, %v3514
    %v3520 = vpop.permute.xlu0 %3519
    %3521 = vset.pattern.permute.xlu0 0
    %3522 = vperm.xlu0 %3521, %v3515
    %v3523 = vpop.permute.xlu0 %3522
    %v3524 = vlaneseq
    %v3525 = vshrl.u32 %v3524, 7
    %v3526 = vsub.s32 %v3173, %v3525
    %v3527 = vrot.slane %v3520, %v3526
    %v3528 = vlaneseq
    %v3529 = vshrl.u32 %v3528, 7
    %v3530 = vsub.s32 %v3173, %v3529
    %v3531 = vrot.slane %v3523, %v3530
    %v3532 = vsel %vm3381, %v3531, %v3527
    %vm3534 = vcmask 58368
    %3535 = vst.msk [vmem:[#allocation5] sm:$0x3] %vm3534, %v3532
    // Predicated region
    $region46: #{tpu_custom_call.1} parent=1 // pred_check
      _
    $region47: #{tpu_custom_call.1} parent=1 // pred_check_branch
      %3537 = sbr.rel (0) target = $region49
    $region48: #{tpu_custom_call.1} parent=1 // pred_region
      %s3539 = ssub.s32 32, 32
      %3540 = vsyncadd [#allocation4], %s3539
      %s3542 = sshll.u32 [#allocation5], 4
      %s3543 = int_to_ptr.vmem [resolvable:$true] %s3542
      %3545 = dma.vmem_to_hbm [thread:$0]  %s3543, 32, %s10, [#allocation4]
    $region49: #{tpu_custom_call.1} parent=1 // pred_fallthru
      _
    // Predicated region
    $region50: #{tpu_custom_call.1} parent=1 // pred_check
      _
    $region51: #{tpu_custom_call.1} parent=1 // pred_check_branch
      %3547 = sbr.rel (0) target = $region53
    $region52: #{tpu_custom_call.1} parent=1 // pred_region
      %s3549 = ssub.s32 32, 32
      %3550 = vsyncadd [#allocation7], %s3549
      %s3552 = sshll.u32 [#allocation6], 4
      %s3553 = int_to_ptr.vmem [resolvable:$true] %s3552
      %3555 = dma.vmem_to_hbm [thread:$0]  %s3553, 32, %s11, [#allocation7]
    $region53: #{tpu_custom_call.1} parent=1 // pred_fallthru
      _
    // Predicated region
    $region54: #{tpu_custom_call.1} parent=1 // pred_check
      _
    $region55: #{tpu_custom_call.1} parent=1 // pred_check_branch
      %3557 = sbr.rel (0) target = $region57
    $region56: #{tpu_custom_call.1} parent=1 // pred_region
      %s3559 = ssub.s32 256, 256
      %3560 = vsyncadd [#allocation7], %s3559
      %s3561 = sshll.u32 [#allocation8], 4
      %s3562 = int_to_ptr.vmem [resolvable:$true] %s3561
      %3567 = dma.vmem_to_hbm [thread:$0]  %s3562, 256, %s12, [#allocation7], 128, 128, 8
    $region57: #{tpu_custom_call.1} parent=1 // pred_fallthru
      _
    // Predicated region
    $region58: #{tpu_custom_call.1} parent=1 // pred_check
      _
    $region59: #{tpu_custom_call.1} parent=1 // pred_check_branch
      %3569 = sbr.rel (0) target = $region61
    $region60: #{tpu_custom_call.1} parent=1 // pred_region
      %3570 = dma.done [#allocation4], 32
    $region61: #{tpu_custom_call.1} parent=1 // pred_fallthru
      _
    // Predicated region
    $region62: #{tpu_custom_call.1} parent=1 // pred_check
      _
    $region63: #{tpu_custom_call.1} parent=1 // pred_check_branch
      %3572 = sbr.rel (0) target = $region65
    $region64: #{tpu_custom_call.1} parent=1 // pred_region
      %3573 = dma.done [#allocation7], 32
    $region65: #{tpu_custom_call.1} parent=1 // pred_fallthru
      _
    // Predicated region
    $region66: #{tpu_custom_call.1} parent=1 // pred_check
      _
    $region67: #{tpu_custom_call.1} parent=1 // pred_check_branch
      %3575 = sbr.rel (0) target = $region69
    $region68: #{tpu_custom_call.1} parent=1 // pred_region
      %3576 = dma.done [#allocation7], 256
    $region69: #{tpu_custom_call.1} parent=1 // pred_fallthru
      _
    %3577 = vsyncpa [#allocation3], 1
    %3578 = vsyncpa [#allocation4], 1
    %3579 = vsyncpa [#allocation7], 1

</llo_original>
